<compile_context>
chip_gen: v7x
topology: tpu7x:2x2x1
jax: 0.10.0
libtpu: 0.0.40
codegen_flags: <defaults>
</compile_context>

<pallas_src>
import functools

import jax
import jax.numpy as jnp
from jax.experimental import pallas as pl
from jax.experimental.pallas import tpu as pltpu


def _attention_kernel(xq_ref, xkv_ref, wq_ref, wkv_ref, wpt_ref, bp_ref, o_ref,
                      *, num_heads):
    # xq_ref : (1, TQ, C) bf16   query rows for this grid step
    # xkv_ref: (1, N,  C) bf16   full sequence (K/V source; sr_ratio = 1)
    # wq_ref : (C, C)     bf16   q.weight  (out, in), scale pre-folded
    # wkv_ref: (2C, C)    bf16   kv.weight (out, in); rows [0:C] -> K, [C:2C] -> V
    # wpt_ref: (C, C)     bf16   proj.weight^T (in, out)
    # bp_ref : (1, C)     f32    proj.bias
    # o_ref  : (1, TQ, C) f32
    f32 = jnp.float32
    bf16 = jnp.bfloat16

    xq = xq_ref[0]                                   # (TQ, C)
    xkv = xkv_ref[0]                                 # (N,  C)
    tq, c = xq.shape
    n = xkv.shape[0]
    d = c // num_heads

    # Fused, transposed projections (lane-dense outputs; contraction over C = 128).
    #   qT[o, m]  = sum_c Wq[o, c]  * xq[m, c]
    #   kvT[o, k] = sum_c Wkv[o, c] * xkv[k, c]
    qT = jax.lax.dot_general(wq_ref[...], xq, (((1,), (1,)), ((), ())),
                             preferred_element_type=f32).astype(bf16)      # (C, TQ)
    kvT = jax.lax.dot_general(wkv_ref[...], xkv, (((1,), (1,)), ((), ())),
                              preferred_element_type=f32).astype(bf16)     # (2C, N)

    ones_row = jnp.ones((1, n), dtype=bf16)          # produces lane-major row sums

    ctx_parts = []
    for h in range(num_heads):                       # per-head slices are cheap sublane slices
        qh = qT[h * d:(h + 1) * d, :]                # (d, TQ)
        kh = kvT[h * d:(h + 1) * d, :]               # (d, N)
        vh = kvT[c + h * d:c + (h + 1) * d, :]       # (d, N)

        # scores s[m, k] = sum_d qh[d, m] * kh[d, k]   (scale already folded into q)
        s = jax.lax.dot_general(qh, kh, (((0,), (0,)), ((), ())),
                                preferred_element_type=f32)                 # (TQ, N)
        m = jnp.max(s, axis=-1, keepdims=True)
        p = jnp.exp(s - m).astype(bf16)              # unnormalized softmax numerator

        # lane-major row sums via a ones-row matmul (avoids a sublane->lane transpose)
        denomT = jax.lax.dot_general(ones_row, p, (((1,), (1,)), ((), ())),
                                     preferred_element_type=f32)            # (1, TQ)
        # ctxT[d, m] = sum_k vh[d, k] * p[m, k]
        ctx_h = jax.lax.dot_general(vh, p, (((1,), (1,)), ((), ())),
                                    preferred_element_type=f32)             # (d, TQ)
        ctx_h = ctx_h * pl.reciprocal(denomT, approx=True)                  # deferred softmax norm
        ctx_parts.append(ctx_h.astype(bf16))

    # (C, TQ); row order h*d + j matches torch's reshape(B, N, H, d) -> (B, N, C)
    ctx = jnp.concatenate(ctx_parts, axis=0)

    # Fused output projection: out[m, o] = sum_c ctx[c, m] * WpT[c, o]  (+ bias), one store.
    out = jax.lax.dot_general(ctx, wpt_ref[...], (((0,), (0,)), ((), ())),
                              preferred_element_type=f32)                   # (TQ, C)
    o_ref[0] = (out + bp_ref[...]).astype(o_ref.dtype)


def attention_forward(x, params, num_heads):
    """x: (B, N, C) float32.  params = (wq, wkv, wp, bp) in PyTorch (out, in) layout."""
    B, N, C = x.shape
    assert C % num_heads == 0
    d = C // num_heads
    scale = d ** -0.5
    wq, wkv, wp, bp = params

    # Query tile: split N so there are >=2 grid steps per core when possible (v7x pipelining).
    TQ = 128 if (N % 128 == 0 and N > 128) else N
    nq = N // TQ

    # bf16 MXU inputs; scale folded into the q weight; proj weight passed transposed (in, out).
    x_bf = x.astype(jnp.bfloat16)
    wq_bf = (wq * scale).astype(jnp.bfloat16)        # (C, C)
    wkv_bf = wkv.astype(jnp.bfloat16)                # (2C, C)
    wpt_bf = wp.T.astype(jnp.bfloat16)               # (C, C)
    bp2 = bp.reshape(1, C).astype(jnp.float32)

    kernel = functools.partial(_attention_kernel, num_heads=num_heads)
    const2 = lambda b, q: (0, 0)

    out = pl.pallas_call(
        kernel,
        out_shape=jax.ShapeDtypeStruct((B, N, C), jnp.float32),
        grid_spec=pltpu.PrefetchScalarGridSpec(
            num_scalar_prefetch=0,
            grid=(B, nq),
            in_specs=[
                pl.BlockSpec((1, TQ, C), lambda b, q: (b, q, 0)),   # query rows
                pl.BlockSpec((1, N, C), lambda b, q: (b, 0, 0)),    # full sequence for K/V
                pl.BlockSpec((C, C), const2),                       # q weight (resident)
                pl.BlockSpec((2 * C, C), const2),                   # kv weight (resident)
                pl.BlockSpec((C, C), const2),                       # proj weight^T (resident)
                pl.BlockSpec((1, C), const2),                       # proj bias
            ],
            out_specs=pl.BlockSpec((1, TQ, C), lambda b, q: (b, q, 0)),
        ),
        compiler_params=pltpu.CompilerParams(
            dimension_semantics=("parallel", "parallel")),
    )(x_bf, x_bf, wq_bf, wkv_bf, wpt_bf, bp2)
    return out


def attention_reference(x, params, num_heads):
    """Pure-JAX reference mirroring the PyTorch forward (sr_ratio=1, dropout p=0)."""
    B, N, C = x.shape
    d = C // num_heads
    scale = d ** -0.5
    wq, wkv, wp, bp = params
    hi = jax.lax.Precision.HIGHEST

    q = jnp.einsum('bnc,oc->bno', x, wq, precision=hi)
    q = q.reshape(B, N, num_heads, d).transpose(0, 2, 1, 3)            # (B,H,N,d)
    kv = jnp.einsum('bnc,oc->bno', x, wkv, precision=hi)
    kv = kv.reshape(B, N, 2, num_heads, d).transpose(2, 0, 3, 1, 4)    # (2,B,H,N,d)
    k, v = kv[0], kv[1]

    attn = jnp.einsum('bhnd,bhmd->bhnm', q, k, precision=hi) * scale
    attn = jax.nn.softmax(attn, axis=-1)
    o = jnp.einsum('bhnm,bhmd->bhnd', attn, v, precision=hi)
    o = o.transpose(0, 2, 1, 3).reshape(B, N, C)
    return jnp.einsum('bnc,oc->bno', o, wp, precision=hi) + bp


def init_params(dim, key):
    k1, k2, k3, k4 = jax.random.split(key, 4)
    # trunc_normal(std=0.02)-style synthetic weights; qkv_bias=False, proj has bias
    wq = jax.random.normal(k1, (dim, dim), jnp.float32) * 0.02        # q.weight  (out, in)
    wkv = jax.random.normal(k2, (2 * dim, dim), jnp.float32) * 0.02   # kv.weight (out, in)
    wp = jax.random.normal(k3, (dim, dim), jnp.float32) * 0.02        # proj.weight
    bp = jax.random.normal(k4, (dim,), jnp.float32) * 0.02            # proj.bias
    return wq, wkv, wp, bp


if __name__ == "__main__":
    B, H, W = 2, 16, 16
    dim, num_heads = 128, 8          # head_dim = 16
    N = H * W                        # sr_ratio = 1 -> kv over the full sequence

    key = jax.random.PRNGKey(0)
    kx, kp = jax.random.split(key)
    x = jax.random.normal(kx, (B, N, dim), jnp.float32)
    params = init_params(dim, kp)

    out = attention_forward(x, params, num_heads)
    out = jax.block_until_ready(out)

    ref = attention_reference(x, params, num_heads)
    assert out.shape == (B, N, dim)
    assert jnp.allclose(out, ref, atol=2e-3, rtol=2e-3), "mismatch vs reference"

    print("KERNEL_OK")
</pallas_src>

<mosaic_0001>
module attributes {stable_mosaic.version = 11 : i64} {
  func.func @_attention_kernel(%arg0: i32, %arg1: i32, %arg2: memref<1x128x128xbf16, #tpu.memory_space<vmem>>, %arg3: memref<1x256x128xbf16, #tpu.memory_space<vmem>>, %arg4: memref<128x128xbf16, #tpu.memory_space<vmem>>, %arg5: memref<256x128xbf16, #tpu.memory_space<vmem>>, %arg6: memref<128x128xbf16, #tpu.memory_space<vmem>>, %arg7: memref<1x128xf32, #tpu.memory_space<vmem>>, %arg8: memref<1x128x128xf32, #tpu.memory_space<vmem>>) attributes {dimension_semantics = [#tpu.dimension_semantics<parallel>, #tpu.dimension_semantics<parallel>], iteration_bounds = array<i64: 2, 2>, scalar_prefetch = 0 : i64, scratch_operands = 0 : i64, tpu.core_type = #tpu.core_type<tc>, window_params = [{transform_indices = @transform_0, window_bounds = array<i64: 1, 128, 128>}, {transform_indices = @transform_1, window_bounds = array<i64: 1, 256, 128>}, {pipeline_mode = #tpu.pipeline_mode<synchronous>, transform_indices = @transform_2, window_bounds = array<i64: 128, 128>}, {pipeline_mode = #tpu.pipeline_mode<synchronous>, transform_indices = @transform_3, window_bounds = array<i64: 256, 128>}, {pipeline_mode = #tpu.pipeline_mode<synchronous>, transform_indices = @transform_4, window_bounds = array<i64: 128, 128>}, {pipeline_mode = #tpu.pipeline_mode<synchronous>, transform_indices = @transform_5, window_bounds = array<i64: 1, 128>}, {transform_indices = @transform_6, window_bounds = array<i64: 1, 128, 128>}]} {
    %c0 = arith.constant 0 : index
    %c0_0 = arith.constant 0 : index
    %c0_1 = arith.constant 0 : index
    %0 = vector.load %arg2[%c0, %c0_0, %c0_1] : memref<1x128x128xbf16, #tpu.memory_space<vmem>>, vector<1x128x128xbf16>
    %1 = vector.shape_cast %0 : vector<1x128x128xbf16> to vector<128x128xbf16>
    %c0_2 = arith.constant 0 : index
    %c0_3 = arith.constant 0 : index
    %c0_4 = arith.constant 0 : index
    %2 = vector.load %arg3[%c0_2, %c0_3, %c0_4] : memref<1x256x128xbf16, #tpu.memory_space<vmem>>, vector<1x256x128xbf16>
    %3 = vector.shape_cast %2 : vector<1x256x128xbf16> to vector<256x128xbf16>
    %c0_5 = arith.constant 0 : index
    %c0_6 = arith.constant 0 : index
    %4 = vector.load %arg4[%c0_5, %c0_6] : memref<128x128xbf16, #tpu.memory_space<vmem>>, vector<128x128xbf16>
    %cst = arith.constant dense<0.000000e+00> : vector<128x128xf32>
    %5 = tpu.matmul %4, %1, %cst {dimension_numbers = #tpu.dot_dimension_numbers<[1], [1], [0], [0], [0, 0, 1, 0], [], []>} : vector<128x128xbf16>, vector<128x128xbf16>, vector<128x128xf32> -> vector<128x128xf32>
    %6 = arith.truncf %5 : vector<128x128xf32> to vector<128x128xbf16>
    %c0_7 = arith.constant 0 : index
    %c0_8 = arith.constant 0 : index
    %7 = vector.load %arg5[%c0_7, %c0_8] : memref<256x128xbf16, #tpu.memory_space<vmem>>, vector<256x128xbf16>
    %cst_9 = arith.constant dense<0.000000e+00> : vector<256x256xf32>
    %8 = tpu.matmul %7, %3, %cst_9 {dimension_numbers = #tpu.dot_dimension_numbers<[1], [1], [0], [0], [0, 0, 1, 0], [], []>} : vector<256x128xbf16>, vector<256x128xbf16>, vector<256x256xf32> -> vector<256x256xf32>
    %9 = arith.truncf %8 : vector<256x256xf32> to vector<256x256xbf16>
    %cst_10 = arith.constant 1.000000e+00 : bf16
    %10 = vector.broadcast %cst_10 : bf16 to vector<1x256xbf16>
    %11 = vector.extract_strided_slice %6 {offsets = [0, 0], sizes = [16, 128], strides = [1, 1]} : vector<128x128xbf16> to vector<16x128xbf16>
    %12 = vector.extract_strided_slice %9 {offsets = [0, 0], sizes = [16, 256], strides = [1, 1]} : vector<256x256xbf16> to vector<16x256xbf16>
    %13 = vector.extract_strided_slice %9 {offsets = [128, 0], sizes = [16, 256], strides = [1, 1]} : vector<256x256xbf16> to vector<16x256xbf16>
    %cst_11 = arith.constant dense<0.000000e+00> : vector<128x256xf32>
    %14 = tpu.matmul %11, %12, %cst_11 {dimension_numbers = #tpu.dot_dimension_numbers<[0], [0], [1], [1], [0, 1, 1, 1], [], []>} : vector<16x128xbf16>, vector<16x256xbf16>, vector<128x256xf32> -> vector<128x256xf32>
    %cst_12 = arith.constant dense<0xFF800000> : vector<128xf32>
    %15 = vector.multi_reduction <maximumf>, %14, %cst_12 [1] : vector<128x256xf32> to vector<128xf32>
    %16 = vector.shape_cast %15 : vector<128xf32> to vector<128x1xf32>
    %17 = vector.broadcast %16 : vector<128x1xf32> to vector<128x256xf32>
    %18 = arith.subf %14, %17 : vector<128x256xf32>
    %19 = math.exp %18 : vector<128x256xf32>
    %20 = arith.truncf %19 : vector<128x256xf32> to vector<128x256xbf16>
    %cst_13 = arith.constant dense<0.000000e+00> : vector<1x128xf32>
    %21 = tpu.matmul %10, %20, %cst_13 {dimension_numbers = #tpu.dot_dimension_numbers<[1], [1], [0], [0], [0, 0, 1, 0], [], []>} : vector<1x256xbf16>, vector<128x256xbf16>, vector<1x128xf32> -> vector<1x128xf32>
    %cst_14 = arith.constant dense<0.000000e+00> : vector<16x128xf32>
    %22 = tpu.matmul %13, %20, %cst_14 {dimension_numbers = #tpu.dot_dimension_numbers<[1], [1], [0], [0], [0, 0, 1, 0], [], []>} : vector<16x256xbf16>, vector<128x256xbf16>, vector<16x128xf32> -> vector<16x128xf32>
    %23 = tpu.reciprocal %21 {approx = true} : vector<1x128xf32> -> vector<1x128xf32>
    %24 = vector.broadcast %23 : vector<1x128xf32> to vector<16x128xf32>
    %25 = arith.mulf %22, %24 : vector<16x128xf32>
    %26 = arith.truncf %25 : vector<16x128xf32> to vector<16x128xbf16>
    %27 = vector.extract_strided_slice %6 {offsets = [16, 0], sizes = [16, 128], strides = [1, 1]} : vector<128x128xbf16> to vector<16x128xbf16>
    %28 = vector.extract_strided_slice %9 {offsets = [16, 0], sizes = [16, 256], strides = [1, 1]} : vector<256x256xbf16> to vector<16x256xbf16>
    %29 = vector.extract_strided_slice %9 {offsets = [144, 0], sizes = [16, 256], strides = [1, 1]} : vector<256x256xbf16> to vector<16x256xbf16>
    %cst_15 = arith.constant dense<0.000000e+00> : vector<128x256xf32>
    %30 = tpu.matmul %27, %28, %cst_15 {dimension_numbers = #tpu.dot_dimension_numbers<[0], [0], [1], [1], [0, 1, 1, 1], [], []>} : vector<16x128xbf16>, vector<16x256xbf16>, vector<128x256xf32> -> vector<128x256xf32>
    %cst_16 = arith.constant dense<0xFF800000> : vector<128xf32>
    %31 = vector.multi_reduction <maximumf>, %30, %cst_16 [1] : vector<128x256xf32> to vector<128xf32>
    %32 = vector.shape_cast %31 : vector<128xf32> to vector<128x1xf32>
    %33 = vector.broadcast %32 : vector<128x1xf32> to vector<128x256xf32>
    %34 = arith.subf %30, %33 : vector<128x256xf32>
    %35 = math.exp %34 : vector<128x256xf32>
    %36 = arith.truncf %35 : vector<128x256xf32> to vector<128x256xbf16>
    %cst_17 = arith.constant dense<0.000000e+00> : vector<1x128xf32>
    %37 = tpu.matmul %10, %36, %cst_17 {dimension_numbers = #tpu.dot_dimension_numbers<[1], [1], [0], [0], [0, 0, 1, 0], [], []>} : vector<1x256xbf16>, vector<128x256xbf16>, vector<1x128xf32> -> vector<1x128xf32>
    %cst_18 = arith.constant dense<0.000000e+00> : vector<16x128xf32>
    %38 = tpu.matmul %29, %36, %cst_18 {dimension_numbers = #tpu.dot_dimension_numbers<[1], [1], [0], [0], [0, 0, 1, 0], [], []>} : vector<16x256xbf16>, vector<128x256xbf16>, vector<16x128xf32> -> vector<16x128xf32>
    %39 = tpu.reciprocal %37 {approx = true} : vector<1x128xf32> -> vector<1x128xf32>
    %40 = vector.broadcast %39 : vector<1x128xf32> to vector<16x128xf32>
    %41 = arith.mulf %38, %40 : vector<16x128xf32>
    %42 = arith.truncf %41 : vector<16x128xf32> to vector<16x128xbf16>
    %43 = vector.extract_strided_slice %6 {offsets = [32, 0], sizes = [16, 128], strides = [1, 1]} : vector<128x128xbf16> to vector<16x128xbf16>
    %44 = vector.extract_strided_slice %9 {offsets = [32, 0], sizes = [16, 256], strides = [1, 1]} : vector<256x256xbf16> to vector<16x256xbf16>
    %45 = vector.extract_strided_slice %9 {offsets = [160, 0], sizes = [16, 256], strides = [1, 1]} : vector<256x256xbf16> to vector<16x256xbf16>
    %cst_19 = arith.constant dense<0.000000e+00> : vector<128x256xf32>
    %46 = tpu.matmul %43, %44, %cst_19 {dimension_numbers = #tpu.dot_dimension_numbers<[0], [0], [1], [1], [0, 1, 1, 1], [], []>} : vector<16x128xbf16>, vector<16x256xbf16>, vector<128x256xf32> -> vector<128x256xf32>
    %cst_20 = arith.constant dense<0xFF800000> : vector<128xf32>
    %47 = vector.multi_reduction <maximumf>, %46, %cst_20 [1] : vector<128x256xf32> to vector<128xf32>
    %48 = vector.shape_cast %47 : vector<128xf32> to vector<128x1xf32>
    %49 = vector.broadcast %48 : vector<128x1xf32> to vector<128x256xf32>
    %50 = arith.subf %46, %49 : vector<128x256xf32>
    %51 = math.exp %50 : vector<128x256xf32>
    %52 = arith.truncf %51 : vector<128x256xf32> to vector<128x256xbf16>
    %cst_21 = arith.constant dense<0.000000e+00> : vector<1x128xf32>
    %53 = tpu.matmul %10, %52, %cst_21 {dimension_numbers = #tpu.dot_dimension_numbers<[1], [1], [0], [0], [0, 0, 1, 0], [], []>} : vector<1x256xbf16>, vector<128x256xbf16>, vector<1x128xf32> -> vector<1x128xf32>
    %cst_22 = arith.constant dense<0.000000e+00> : vector<16x128xf32>
    %54 = tpu.matmul %45, %52, %cst_22 {dimension_numbers = #tpu.dot_dimension_numbers<[1], [1], [0], [0], [0, 0, 1, 0], [], []>} : vector<16x256xbf16>, vector<128x256xbf16>, vector<16x128xf32> -> vector<16x128xf32>
    %55 = tpu.reciprocal %53 {approx = true} : vector<1x128xf32> -> vector<1x128xf32>
    %56 = vector.broadcast %55 : vector<1x128xf32> to vector<16x128xf32>
    %57 = arith.mulf %54, %56 : vector<16x128xf32>
    %58 = arith.truncf %57 : vector<16x128xf32> to vector<16x128xbf16>
    %59 = vector.extract_strided_slice %6 {offsets = [48, 0], sizes = [16, 128], strides = [1, 1]} : vector<128x128xbf16> to vector<16x128xbf16>
    %60 = vector.extract_strided_slice %9 {offsets = [48, 0], sizes = [16, 256], strides = [1, 1]} : vector<256x256xbf16> to vector<16x256xbf16>
    %61 = vector.extract_strided_slice %9 {offsets = [176, 0], sizes = [16, 256], strides = [1, 1]} : vector<256x256xbf16> to vector<16x256xbf16>
    %cst_23 = arith.constant dense<0.000000e+00> : vector<128x256xf32>
    %62 = tpu.matmul %59, %60, %cst_23 {dimension_numbers = #tpu.dot_dimension_numbers<[0], [0], [1], [1], [0, 1, 1, 1], [], []>} : vector<16x128xbf16>, vector<16x256xbf16>, vector<128x256xf32> -> vector<128x256xf32>
    %cst_24 = arith.constant dense<0xFF800000> : vector<128xf32>
    %63 = vector.multi_reduction <maximumf>, %62, %cst_24 [1] : vector<128x256xf32> to vector<128xf32>
    %64 = vector.shape_cast %63 : vector<128xf32> to vector<128x1xf32>
    %65 = vector.broadcast %64 : vector<128x1xf32> to vector<128x256xf32>
    %66 = arith.subf %62, %65 : vector<128x256xf32>
    %67 = math.exp %66 : vector<128x256xf32>
    %68 = arith.truncf %67 : vector<128x256xf32> to vector<128x256xbf16>
    %cst_25 = arith.constant dense<0.000000e+00> : vector<1x128xf32>
    %69 = tpu.matmul %10, %68, %cst_25 {dimension_numbers = #tpu.dot_dimension_numbers<[1], [1], [0], [0], [0, 0, 1, 0], [], []>} : vector<1x256xbf16>, vector<128x256xbf16>, vector<1x128xf32> -> vector<1x128xf32>
    %cst_26 = arith.constant dense<0.000000e+00> : vector<16x128xf32>
    %70 = tpu.matmul %61, %68, %cst_26 {dimension_numbers = #tpu.dot_dimension_numbers<[1], [1], [0], [0], [0, 0, 1, 0], [], []>} : vector<16x256xbf16>, vector<128x256xbf16>, vector<16x128xf32> -> vector<16x128xf32>
    %71 = tpu.reciprocal %69 {approx = true} : vector<1x128xf32> -> vector<1x128xf32>
    %72 = vector.broadcast %71 : vector<1x128xf32> to vector<16x128xf32>
    %73 = arith.mulf %70, %72 : vector<16x128xf32>
    %74 = arith.truncf %73 : vector<16x128xf32> to vector<16x128xbf16>
    %75 = vector.extract_strided_slice %6 {offsets = [64, 0], sizes = [16, 128], strides = [1, 1]} : vector<128x128xbf16> to vector<16x128xbf16>
    %76 = vector.extract_strided_slice %9 {offsets = [64, 0], sizes = [16, 256], strides = [1, 1]} : vector<256x256xbf16> to vector<16x256xbf16>
    %77 = vector.extract_strided_slice %9 {offsets = [192, 0], sizes = [16, 256], strides = [1, 1]} : vector<256x256xbf16> to vector<16x256xbf16>
    %cst_27 = arith.constant dense<0.000000e+00> : vector<128x256xf32>
    %78 = tpu.matmul %75, %76, %cst_27 {dimension_numbers = #tpu.dot_dimension_numbers<[0], [0], [1], [1], [0, 1, 1, 1], [], []>} : vector<16x128xbf16>, vector<16x256xbf16>, vector<128x256xf32> -> vector<128x256xf32>
    %cst_28 = arith.constant dense<0xFF800000> : vector<128xf32>
    %79 = vector.multi_reduction <maximumf>, %78, %cst_28 [1] : vector<128x256xf32> to vector<128xf32>
    %80 = vector.shape_cast %79 : vector<128xf32> to vector<128x1xf32>
    %81 = vector.broadcast %80 : vector<128x1xf32> to vector<128x256xf32>
    %82 = arith.subf %78, %81 : vector<128x256xf32>
    %83 = math.exp %82 : vector<128x256xf32>
    %84 = arith.truncf %83 : vector<128x256xf32> to vector<128x256xbf16>
    %cst_29 = arith.constant dense<0.000000e+00> : vector<1x128xf32>
    %85 = tpu.matmul %10, %84, %cst_29 {dimension_numbers = #tpu.dot_dimension_numbers<[1], [1], [0], [0], [0, 0, 1, 0], [], []>} : vector<1x256xbf16>, vector<128x256xbf16>, vector<1x128xf32> -> vector<1x128xf32>
    %cst_30 = arith.constant dense<0.000000e+00> : vector<16x128xf32>
    %86 = tpu.matmul %77, %84, %cst_30 {dimension_numbers = #tpu.dot_dimension_numbers<[1], [1], [0], [0], [0, 0, 1, 0], [], []>} : vector<16x256xbf16>, vector<128x256xbf16>, vector<16x128xf32> -> vector<16x128xf32>
    %87 = tpu.reciprocal %85 {approx = true} : vector<1x128xf32> -> vector<1x128xf32>
    %88 = vector.broadcast %87 : vector<1x128xf32> to vector<16x128xf32>
    %89 = arith.mulf %86, %88 : vector<16x128xf32>
    %90 = arith.truncf %89 : vector<16x128xf32> to vector<16x128xbf16>
    %91 = vector.extract_strided_slice %6 {offsets = [80, 0], sizes = [16, 128], strides = [1, 1]} : vector<128x128xbf16> to vector<16x128xbf16>
    %92 = vector.extract_strided_slice %9 {offsets = [80, 0], sizes = [16, 256], strides = [1, 1]} : vector<256x256xbf16> to vector<16x256xbf16>
    %93 = vector.extract_strided_slice %9 {offsets = [208, 0], sizes = [16, 256], strides = [1, 1]} : vector<256x256xbf16> to vector<16x256xbf16>
    %cst_31 = arith.constant dense<0.000000e+00> : vector<128x256xf32>
    %94 = tpu.matmul %91, %92, %cst_31 {dimension_numbers = #tpu.dot_dimension_numbers<[0], [0], [1], [1], [0, 1, 1, 1], [], []>} : vector<16x128xbf16>, vector<16x256xbf16>, vector<128x256xf32> -> vector<128x256xf32>
    %cst_32 = arith.constant dense<0xFF800000> : vector<128xf32>
    %95 = vector.multi_reduction <maximumf>, %94, %cst_32 [1] : vector<128x256xf32> to vector<128xf32>
    %96 = vector.shape_cast %95 : vector<128xf32> to vector<128x1xf32>
    %97 = vector.broadcast %96 : vector<128x1xf32> to vector<128x256xf32>
    %98 = arith.subf %94, %97 : vector<128x256xf32>
    %99 = math.exp %98 : vector<128x256xf32>
    %100 = arith.truncf %99 : vector<128x256xf32> to vector<128x256xbf16>
    %cst_33 = arith.constant dense<0.000000e+00> : vector<1x128xf32>
    %101 = tpu.matmul %10, %100, %cst_33 {dimension_numbers = #tpu.dot_dimension_numbers<[1], [1], [0], [0], [0, 0, 1, 0], [], []>} : vector<1x256xbf16>, vector<128x256xbf16>, vector<1x128xf32> -> vector<1x128xf32>
    %cst_34 = arith.constant dense<0.000000e+00> : vector<16x128xf32>
    %102 = tpu.matmul %93, %100, %cst_34 {dimension_numbers = #tpu.dot_dimension_numbers<[1], [1], [0], [0], [0, 0, 1, 0], [], []>} : vector<16x256xbf16>, vector<128x256xbf16>, vector<16x128xf32> -> vector<16x128xf32>
    %103 = tpu.reciprocal %101 {approx = true} : vector<1x128xf32> -> vector<1x128xf32>
    %104 = vector.broadcast %103 : vector<1x128xf32> to vector<16x128xf32>
    %105 = arith.mulf %102, %104 : vector<16x128xf32>
    %106 = arith.truncf %105 : vector<16x128xf32> to vector<16x128xbf16>
    %107 = vector.extract_strided_slice %6 {offsets = [96, 0], sizes = [16, 128], strides = [1, 1]} : vector<128x128xbf16> to vector<16x128xbf16>
    %108 = vector.extract_strided_slice %9 {offsets = [96, 0], sizes = [16, 256], strides = [1, 1]} : vector<256x256xbf16> to vector<16x256xbf16>
    %109 = vector.extract_strided_slice %9 {offsets = [224, 0], sizes = [16, 256], strides = [1, 1]} : vector<256x256xbf16> to vector<16x256xbf16>
    %cst_35 = arith.constant dense<0.000000e+00> : vector<128x256xf32>
    %110 = tpu.matmul %107, %108, %cst_35 {dimension_numbers = #tpu.dot_dimension_numbers<[0], [0], [1], [1], [0, 1, 1, 1], [], []>} : vector<16x128xbf16>, vector<16x256xbf16>, vector<128x256xf32> -> vector<128x256xf32>
    %cst_36 = arith.constant dense<0xFF800000> : vector<128xf32>
    %111 = vector.multi_reduction <maximumf>, %110, %cst_36 [1] : vector<128x256xf32> to vector<128xf32>
    %112 = vector.shape_cast %111 : vector<128xf32> to vector<128x1xf32>
    %113 = vector.broadcast %112 : vector<128x1xf32> to vector<128x256xf32>
    %114 = arith.subf %110, %113 : vector<128x256xf32>
    %115 = math.exp %114 : vector<128x256xf32>
    %116 = arith.truncf %115 : vector<128x256xf32> to vector<128x256xbf16>
    %cst_37 = arith.constant dense<0.000000e+00> : vector<1x128xf32>
    %117 = tpu.matmul %10, %116, %cst_37 {dimension_numbers = #tpu.dot_dimension_numbers<[1], [1], [0], [0], [0, 0, 1, 0], [], []>} : vector<1x256xbf16>, vector<128x256xbf16>, vector<1x128xf32> -> vector<1x128xf32>
    %cst_38 = arith.constant dense<0.000000e+00> : vector<16x128xf32>
    %118 = tpu.matmul %109, %116, %cst_38 {dimension_numbers = #tpu.dot_dimension_numbers<[1], [1], [0], [0], [0, 0, 1, 0], [], []>} : vector<16x256xbf16>, vector<128x256xbf16>, vector<16x128xf32> -> vector<16x128xf32>
    %119 = tpu.reciprocal %117 {approx = true} : vector<1x128xf32> -> vector<1x128xf32>
    %120 = vector.broadcast %119 : vector<1x128xf32> to vector<16x128xf32>
    %121 = arith.mulf %118, %120 : vector<16x128xf32>
    %122 = arith.truncf %121 : vector<16x128xf32> to vector<16x128xbf16>
    %123 = vector.extract_strided_slice %6 {offsets = [112, 0], sizes = [16, 128], strides = [1, 1]} : vector<128x128xbf16> to vector<16x128xbf16>
    %124 = vector.extract_strided_slice %9 {offsets = [112, 0], sizes = [16, 256], strides = [1, 1]} : vector<256x256xbf16> to vector<16x256xbf16>
    %125 = vector.extract_strided_slice %9 {offsets = [240, 0], sizes = [16, 256], strides = [1, 1]} : vector<256x256xbf16> to vector<16x256xbf16>
    %cst_39 = arith.constant dense<0.000000e+00> : vector<128x256xf32>
    %126 = tpu.matmul %123, %124, %cst_39 {dimension_numbers = #tpu.dot_dimension_numbers<[0], [0], [1], [1], [0, 1, 1, 1], [], []>} : vector<16x128xbf16>, vector<16x256xbf16>, vector<128x256xf32> -> vector<128x256xf32>
    %cst_40 = arith.constant dense<0xFF800000> : vector<128xf32>
    %127 = vector.multi_reduction <maximumf>, %126, %cst_40 [1] : vector<128x256xf32> to vector<128xf32>
    %128 = vector.shape_cast %127 : vector<128xf32> to vector<128x1xf32>
    %129 = vector.broadcast %128 : vector<128x1xf32> to vector<128x256xf32>
    %130 = arith.subf %126, %129 : vector<128x256xf32>
    %131 = math.exp %130 : vector<128x256xf32>
    %132 = arith.truncf %131 : vector<128x256xf32> to vector<128x256xbf16>
    %cst_41 = arith.constant dense<0.000000e+00> : vector<1x128xf32>
    %133 = tpu.matmul %10, %132, %cst_41 {dimension_numbers = #tpu.dot_dimension_numbers<[1], [1], [0], [0], [0, 0, 1, 0], [], []>} : vector<1x256xbf16>, vector<128x256xbf16>, vector<1x128xf32> -> vector<1x128xf32>
    %cst_42 = arith.constant dense<0.000000e+00> : vector<16x128xf32>
    %134 = tpu.matmul %125, %132, %cst_42 {dimension_numbers = #tpu.dot_dimension_numbers<[1], [1], [0], [0], [0, 0, 1, 0], [], []>} : vector<16x256xbf16>, vector<128x256xbf16>, vector<16x128xf32> -> vector<16x128xf32>
    %135 = tpu.reciprocal %133 {approx = true} : vector<1x128xf32> -> vector<1x128xf32>
    %136 = vector.broadcast %135 : vector<1x128xf32> to vector<16x128xf32>
    %137 = arith.mulf %134, %136 : vector<16x128xf32>
    %138 = arith.truncf %137 : vector<16x128xf32> to vector<16x128xbf16>
    %139 = tpu.concatenate %26, %42, %58, %74, %90, %106, %122, %138 in 0 : vector<16x128xbf16>, vector<16x128xbf16>, vector<16x128xbf16>, vector<16x128xbf16>, vector<16x128xbf16>, vector<16x128xbf16>, vector<16x128xbf16>, vector<16x128xbf16> -> vector<128x128xbf16>
    %c0_43 = arith.constant 0 : index
    %c0_44 = arith.constant 0 : index
    %140 = vector.load %arg6[%c0_43, %c0_44] : memref<128x128xbf16, #tpu.memory_space<vmem>>, vector<128x128xbf16>
    %cst_45 = arith.constant dense<0.000000e+00> : vector<128x128xf32>
    %141 = tpu.matmul %139, %140, %cst_45 {dimension_numbers = #tpu.dot_dimension_numbers<[0], [0], [1], [1], [0, 1, 1, 1], [], []>} : vector<128x128xbf16>, vector<128x128xbf16>, vector<128x128xf32> -> vector<128x128xf32>
    %c0_46 = arith.constant 0 : index
    %c0_47 = arith.constant 0 : index
    %142 = vector.load %arg7[%c0_46, %c0_47] : memref<1x128xf32, #tpu.memory_space<vmem>>, vector<1x128xf32>
    %143 = vector.broadcast %142 : vector<1x128xf32> to vector<128x128xf32>
    %144 = arith.addf %141, %143 : vector<128x128xf32>
    %c0_48 = arith.constant 0 : index
    %c0_49 = arith.constant 0 : index
    %c0_50 = arith.constant 0 : index
    %145 = vector.load %arg8[%c0_48, %c0_49, %c0_50] : memref<1x128x128xf32, #tpu.memory_space<vmem>>, vector<1x128x128xf32>
    %146 = vector.shape_cast %145 : vector<1x128x128xf32> to vector<128x128xf32>
    %147 = vector.shape_cast %144 : vector<128x128xf32> to vector<1x128x128xf32>
    tpu.vector_store %arg8[%c0_48, %c0_49, %c0_50], %147 {strides = array<i32>} : memref<1x128x128xf32, #tpu.memory_space<vmem>>, vector<1x128x128xf32>,
    return
  }
  func.func @transform_0(%arg0: i32, %arg1: i32) -> (i32, i32, i32) {
    %c0_i32 = arith.constant 0 : i32
    %c0_i32_0 = arith.constant 0 : i32
    return %arg0, %arg1, %c0_i32 : i32, i32, i32
  }
  func.func @transform_1(%arg0: i32, %arg1: i32) -> (i32, i32, i32) {
    %c0_i32 = arith.constant 0 : i32
    %c0_i32_0 = arith.constant 0 : i32
    %c0_i32_1 = arith.constant 0 : i32
    return %arg0, %c0_i32, %c0_i32_0 : i32, i32, i32
  }
  func.func @transform_2(%arg0: i32, %arg1: i32) -> (i32, i32) {
    %c0_i32 = arith.constant 0 : i32
    %c0_i32_0 = arith.constant 0 : i32
    %c0_i32_1 = arith.constant 0 : i32
    return %c0_i32, %c0_i32_0 : i32, i32
  }
  func.func @transform_3(%arg0: i32, %arg1: i32) -> (i32, i32) {
    %c0_i32 = arith.constant 0 : i32
    %c0_i32_0 = arith.constant 0 : i32
    %c0_i32_1 = arith.constant 0 : i32
    return %c0_i32, %c0_i32_0 : i32, i32
  }
  func.func @transform_4(%arg0: i32, %arg1: i32) -> (i32, i32) {
    %c0_i32 = arith.constant 0 : i32
    %c0_i32_0 = arith.constant 0 : i32
    %c0_i32_1 = arith.constant 0 : i32
    return %c0_i32, %c0_i32_0 : i32, i32
  }
  func.func @transform_5(%arg0: i32, %arg1: i32) -> (i32, i32) {
    %c0_i32 = arith.constant 0 : i32
    %c0_i32_0 = arith.constant 0 : i32
    %c0_i32_1 = arith.constant 0 : i32
    return %c0_i32, %c0_i32_0 : i32, i32
  }
  func.func @transform_6(%arg0: i32, %arg1: i32) -> (i32, i32, i32) {
    %c0_i32 = arith.constant 0 : i32
    %c0_i32_0 = arith.constant 0 : i32
    return %arg0, %arg1, %c0_i32 : i32, i32, i32
  }
}

</mosaic_0001>

<llo_original>
// kernel: tpu_custom_call.1
$region0: #{tpu_custom_call.1}
  #allocation0 [shape = 'u32[]', space=smem, size = 0x4, offset = 0x4, fixed_abs, tag = 'smem constant byte address 0x4 - core index']
  #allocation1 [shape = 'u32[144,128]{1,0:T(1,128)}', space=vmem, size = 0x12000, scoped, tag = 'internal scratch']
  %s0 = inlined_call_operand.hbm [shape: bf16[2,256,128], index: 0, kind: input, shape index: {}]
  %s1 = inlined_call_operand.hbm [shape: bf16[2,256,128], index: 1, kind: input, shape index: {}]
  %s2 = inlined_call_operand.hbm [shape: bf16[128,128], index: 2, kind: input, shape index: {}]
  %s3 = inlined_call_operand.hbm [shape: bf16[256,128], index: 3, kind: input, shape index: {}]
  %s4 = inlined_call_operand.hbm [shape: bf16[128,128], index: 4, kind: input, shape index: {}]
  %s5 = inlined_call_operand.vmem [shape: f32[1,128], index: 5, kind: input, shape index: {}]
  %s6 = inlined_call_operand.hbm [shape: f32[2,256,128], index: 6, kind: output, shape index: {}]
  %s7 = sld [smem:[#allocation0]]
  $region77: #{tpu_custom_call.1} parent=0
    _
  %s9 = ssub.s32 1, %s7
  %s10 = scalar_select 0, %s9, %s7
  $region1: #{tpu_custom_call.1} parent=0
    #allocation2 [shape = 'u8[65536]{0}', space=vmem, size = 0x10000, scoped, tag = 'input window, operand 0']
    #allocation3 [shape = 's32[2]{0}', space=sflag, size = 0x8, scoped, tag = 'scoped memory for tpu_custom_call.1']
    #allocation4 [shape = 's32[2]{0}', space=sflag, size = 0x8, scoped, tag = 'scoped memory for tpu_custom_call.1']
    #allocation5 [shape = 'u8[131072]{0}', space=vmem, size = 0x20000, scoped, tag = 'input window, operand 1']
    #allocation6 [shape = 's32[2]{0}', space=sflag, size = 0x8, scoped, tag = 'scoped memory for tpu_custom_call.1']
    #allocation7 [shape = 'u8[32768]{0}', space=vmem, size = 0x8000, scoped, tag = 'input window, operand 2, single buffered']
    #allocation8 [shape = 'u8[65536]{0}', space=vmem, size = 0x10000, scoped, tag = 'input window, operand 3, single buffered']
    #allocation9 [shape = 's32[1]{0}', space=sflag, size = 0x4, scoped, tag = 'scoped memory for tpu_custom_call.1']
    #allocation10 [shape = 'u8[32768]{0}', space=vmem, size = 0x8000, scoped, tag = 'input window, operand 4, single buffered']
    #allocation11 [shape = 'u8[131072]{0}', space=vmem, size = 0x20000, scoped, tag = 'output window, operand 0']
    %11 = vsyncpa [#allocation3], 0
    %s12 = scalar_lea.sflag [#allocation3], 1
    %13 = vsyncpa %s12, 0
    %14 = vsyncpa [#allocation6], 0
    %s15 = scalar_lea.sflag [#allocation6], 1
    %16 = vsyncpa %s15, 0
    %17 = vsyncpa [#allocation9], 0
    %18 = vsyncpa [#allocation4], 0
    %s19 = scalar_lea.sflag [#allocation4], 1
    %20 = vsyncpa %s19, 0
    loop: start=0, step=1, limit=6
    $region2: #{tpu_custom_call.1} parent=1 // loop_pre_header
      _
    $region3: #{tpu_custom_call.1} parent=1 // loop_header
      %s22 = sphi 0, %s26
      %p23 = scmp.ge.s32.totalorder %s22, 6
      %s29 = sphi 0, %s41
      %s30 = sphi 0, %s37
      %s31 = sphi 0, %s29
      %s32 = sphi 0, %s30
      %s33 = sphi 0, %s31
      %s34 = sphi 0, %s32
      %s46 = sphi 0, %s48
      %s49 = sphi 0, %s46
      %s50 = sphi 0, %s49
      %s66 = sphi 0, %s50
      %s72 = sphi 0, %s74
      %s75 = sphi 0, %s72
      %s76 = sphi 0, %s75
      %s92 = sphi 0, %s76
      %s96 = sphi 0, %s96
      %s98 = sphi 0, %s96
      %s99 = sphi 0, %s98
      %s113 = sphi 0, %s99
      %s117 = sphi 0, %s117
      %s119 = sphi 0, %s117
      %s120 = sphi 0, %s119
      %s134 = sphi 0, %s120
      %s138 = sphi 0, %s138
      %s140 = sphi 0, %s138
      %s141 = sphi 0, %s140
      %s155 = sphi 0, %s141
      %s159 = sphi 0, %s159
      %s161 = sphi 0, %s159
      %s162 = sphi 0, %s161
      %s176 = sphi 0, %s162
      %s184 = sphi 0, %s186
      %s187 = sphi 0, %s184
      %s188 = sphi 0, %s187
      %s204 = sphi 0, %s188
    $region4: #{tpu_custom_call.1} parent=1 // loop_header_branch
      %25 = sbr.rel (%p23) target = $region8
    $region5: #{tpu_custom_call.1} parent=1 // loop_body
      %s27 = ssub.s32 %s22, 1
      %s28 = ssub.s32 %s22, 2
      %s35 = sadd.s32 1, %s30
      %p36 = scmp.ge.s32.totalorder %s35, 2
      %s37 = scalar_select %p36, 0, %s35
      %s38 = sadd.s32 1, %s29
      %s39 = scalar_select %p36, %s38, %s29
      %p40 = scmp.ge.s32.totalorder %s39, 2
      %s41 = scalar_select %p40, 0, %s39
      %s42 = ssub.s32 %s29, %s41
      %s43 = ssub.s32 %s30, %s37
      %s44 = sor.u32 %s42, %s43
      %p45 = scmp.eq.s32.totalorder %s44, 0
      %s47 = sadd.s32 %s46, 1
      %s48 = scalar_select %p45, %s46, %s47
      %p51 = pneg %p45
      %p52 = scmp.eq.s32.totalorder %s22, 3
      %p53 = por %p51, %p52
      %p54 = scmp.ne.s32.totalorder %s46, %s49
      %p55 = scmp.eq.s32.totalorder %s22, 0
      %p56 = por %p54, %p55
      %p57 = scmp.ne.s32.totalorder %s46, %s49
      %p58 = scmp.eq.s32.totalorder %s27, 3
      %p59 = por %p57, %p58
      %p60 = scmp.ne.s32.totalorder %s49, %s50
      %p61 = scmp.eq.s32.totalorder %s27, 0
      %p62 = por %p60, %p61
      %p63 = scmp.ne.s32.totalorder %s49, %s50
      %p64 = scmp.eq.s32.totalorder %s28, 3
      %p65 = por %p63, %p64
      %p67 = scmp.ne.s32.totalorder %s50, %s66
      %p68 = scmp.eq.s32.totalorder %s28, 0
      %p69 = por %p67, %p68
      %s70 = ssub.s32 %s29, %s41
      %p71 = scmp.eq.s32.totalorder %s70, 0
      %s73 = sadd.s32 %s72, 1
      %s74 = scalar_select %p71, %s72, %s73
      %p77 = pneg %p71
      %p78 = scmp.eq.s32.totalorder %s22, 3
      %p79 = por %p77, %p78
      %p80 = scmp.ne.s32.totalorder %s72, %s75
      %p81 = scmp.eq.s32.totalorder %s22, 0
      %p82 = por %p80, %p81
      %p83 = scmp.ne.s32.totalorder %s72, %s75
      %p84 = scmp.eq.s32.totalorder %s27, 3
      %p85 = por %p83, %p84
      %p86 = scmp.ne.s32.totalorder %s75, %s76
      %p87 = scmp.eq.s32.totalorder %s27, 0
      %p88 = por %p86, %p87
      %p89 = scmp.ne.s32.totalorder %s75, %s76
      %p90 = scmp.eq.s32.totalorder %s28, 3
      %p91 = por %p89, %p90
      %p93 = scmp.ne.s32.totalorder %s76, %s92
      %p94 = scmp.eq.s32.totalorder %s28, 0
      %p95 = por %p93, %p94
      %s97 = sadd.s32 %s96, 1
      %p100 = scmp.eq.s32.totalorder %s22, 3
      %p101 = scmp.ne.s32.totalorder %s96, %s98
      %p102 = scmp.eq.s32.totalorder %s22, 0
      %p103 = por %p101, %p102
      %p104 = scmp.ne.s32.totalorder %s96, %s98
      %p105 = scmp.eq.s32.totalorder %s27, 3
      %p106 = por %p104, %p105
      %p107 = scmp.ne.s32.totalorder %s98, %s99
      %p108 = scmp.eq.s32.totalorder %s27, 0
      %p109 = por %p107, %p108
      %p110 = scmp.ne.s32.totalorder %s98, %s99
      %p111 = scmp.eq.s32.totalorder %s28, 3
      %p112 = por %p110, %p111
      %p114 = scmp.ne.s32.totalorder %s99, %s113
      %p115 = scmp.eq.s32.totalorder %s28, 0
      %p116 = por %p114, %p115
      %s118 = sadd.s32 %s117, 1
      %p121 = scmp.eq.s32.totalorder %s22, 3
      %p122 = scmp.ne.s32.totalorder %s117, %s119
      %p123 = scmp.eq.s32.totalorder %s22, 0
      %p124 = por %p122, %p123
      %p125 = scmp.ne.s32.totalorder %s117, %s119
      %p126 = scmp.eq.s32.totalorder %s27, 3
      %p127 = por %p125, %p126
      %p128 = scmp.ne.s32.totalorder %s119, %s120
      %p129 = scmp.eq.s32.totalorder %s27, 0
      %p130 = por %p128, %p129
      %p131 = scmp.ne.s32.totalorder %s119, %s120
      %p132 = scmp.eq.s32.totalorder %s28, 3
      %p133 = por %p131, %p132
      %p135 = scmp.ne.s32.totalorder %s120, %s134
      %p136 = scmp.eq.s32.totalorder %s28, 0
      %p137 = por %p135, %p136
      %s139 = sadd.s32 %s138, 1
      %p142 = scmp.eq.s32.totalorder %s22, 3
      %p143 = scmp.ne.s32.totalorder %s138, %s140
      %p144 = scmp.eq.s32.totalorder %s22, 0
      %p145 = por %p143, %p144
      %p146 = scmp.ne.s32.totalorder %s138, %s140
      %p147 = scmp.eq.s32.totalorder %s27, 3
      %p148 = por %p146, %p147
      %p149 = scmp.ne.s32.totalorder %s140, %s141
      %p150 = scmp.eq.s32.totalorder %s27, 0
      %p151 = por %p149, %p150
      %p152 = scmp.ne.s32.totalorder %s140, %s141
      %p153 = scmp.eq.s32.totalorder %s28, 3
      %p154 = por %p152, %p153
      %p156 = scmp.ne.s32.totalorder %s141, %s155
      %p157 = scmp.eq.s32.totalorder %s28, 0
      %p158 = por %p156, %p157
      %s160 = sadd.s32 %s159, 1
      %p163 = scmp.eq.s32.totalorder %s22, 3
      %p164 = scmp.ne.s32.totalorder %s159, %s161
      %p165 = scmp.eq.s32.totalorder %s22, 0
      %p166 = por %p164, %p165
      %p167 = scmp.ne.s32.totalorder %s159, %s161
      %p168 = scmp.eq.s32.totalorder %s27, 3
      %p169 = por %p167, %p168
      %p170 = scmp.ne.s32.totalorder %s161, %s162
      %p171 = scmp.eq.s32.totalorder %s27, 0
      %p172 = por %p170, %p171
      %p173 = scmp.ne.s32.totalorder %s161, %s162
      %p174 = scmp.eq.s32.totalorder %s28, 3
      %p175 = por %p173, %p174
      %p177 = scmp.ne.s32.totalorder %s162, %s176
      %p178 = scmp.eq.s32.totalorder %s28, 0
      %p179 = por %p177, %p178
      %s180 = ssub.s32 %s29, %s41
      %s181 = ssub.s32 %s30, %s37
      %s182 = sor.u32 %s180, %s181
      %p183 = scmp.eq.s32.totalorder %s182, 0
      %s185 = sadd.s32 %s184, 1
      %s186 = scalar_select %p183, %s184, %s185
      %p189 = pneg %p183
      %p190 = scmp.eq.s32.totalorder %s22, 3
      %p191 = por %p189, %p190
      %p192 = scmp.ne.s32.totalorder %s184, %s187
      %p193 = scmp.eq.s32.totalorder %s22, 0
      %p194 = por %p192, %p193
      %p195 = scmp.ne.s32.totalorder %s184, %s187
      %p196 = scmp.eq.s32.totalorder %s27, 3
      %p197 = por %p195, %p196
      %p198 = scmp.ne.s32.totalorder %s187, %s188
      %p199 = scmp.eq.s32.totalorder %s27, 0
      %p200 = por %p198, %p199
      %p201 = scmp.ne.s32.totalorder %s187, %s188
      %p202 = scmp.eq.s32.totalorder %s28, 3
      %p203 = por %p201, %p202
      %p205 = scmp.ne.s32.totalorder %s188, %s204
      %p206 = scmp.eq.s32.totalorder %s28, 0
      %p207 = por %p205, %p206
      %p208 = scmp.le.s32.totalorder 1, %s22
      %p209 = scmp.lt.s32.totalorder %s22, 5
      %p210 = pnand %p208, %p209
      %p211 = pneg %p210
      // Predicated region
      $region9: #{tpu_custom_call.1} parent=5 // pred_check
        _
      $region10: #{tpu_custom_call.1} parent=5 // pred_check_branch
        %213 = sbr.rel (%p210) target = $region12
      $region11: #{tpu_custom_call.1} parent=5 // pred_region
        %s214 = ssub.s32 %s22, 1
        // Predicated region
        $region13: #{tpu_custom_call.1} parent=11 // pred_check
          %p215 = pneg %p109
        $region14: #{tpu_custom_call.1} parent=11 // pred_check_branch
          %217 = sbr.rel (%p215) target = $region16
        $region15: #{tpu_custom_call.1} parent=11 // pred_region
          %s219 = ssub.s32 1024, 1024
          %220 = vsyncadd [#allocation6], %s219
          %s221 = sshll.u32 [#allocation7], 4
          %s222 = int_to_ptr.vmem [resolvable:$true] %s221
          %227 = dma.hbm_to_vmem [thread:$0]  %s2, 1024, %s222, [#allocation6], 64, 64, 4
        $region16: #{tpu_custom_call.1} parent=11 // pred_fallthru
          _
        // Predicated region
        $region17: #{tpu_custom_call.1} parent=11 // pred_check
          %p228 = pneg %p130
        $region18: #{tpu_custom_call.1} parent=11 // pred_check_branch
          %230 = sbr.rel (%p228) target = $region20
        $region19: #{tpu_custom_call.1} parent=11 // pred_region
          %s232 = ssub.s32 2048, 2048
          %233 = vsyncadd [#allocation9], %s232
          %s234 = sshll.u32 [#allocation8], 4
          %s235 = int_to_ptr.vmem [resolvable:$true] %s234
          %240 = dma.hbm_to_vmem [thread:$0]  %s3, 2048, %s235, [#allocation9], 64, 64, 4
        $region20: #{tpu_custom_call.1} parent=11 // pred_fallthru
          _
        // Predicated region
        $region21: #{tpu_custom_call.1} parent=11 // pred_check
          %p241 = pneg %p151
        $region22: #{tpu_custom_call.1} parent=11 // pred_check_branch
          %243 = sbr.rel (%p241) target = $region24
        $region23: #{tpu_custom_call.1} parent=11 // pred_region
          %s245 = ssub.s32 1024, 1024
          %246 = vsyncadd [#allocation9], %s245
          %s247 = sshll.u32 [#allocation10], 4
          %s248 = int_to_ptr.vmem [resolvable:$true] %s247
          %253 = dma.hbm_to_vmem [thread:$0]  %s4, 1024, %s248, [#allocation9], 64, 64, 4
        $region24: #{tpu_custom_call.1} parent=11 // pred_fallthru
          _
        // Predicated region
        $region25: #{tpu_custom_call.1} parent=11 // pred_check
          %p254 = pneg %p172
        $region26: #{tpu_custom_call.1} parent=11 // pred_check_branch
          %256 = sbr.rel (%p254) target = $region28
        $region27: #{tpu_custom_call.1} parent=11 // pred_region
          _
        $region28: #{tpu_custom_call.1} parent=11 // pred_fallthru
          _
      $region12: #{tpu_custom_call.1} parent=5 // pred_fallthru
        _
      %p257 = scmp.lt.s32.totalorder %s22, 4
      // Predicated region
      $region29: #{tpu_custom_call.1} parent=5 // pred_check
        %p258 = pneg %p257
      $region30: #{tpu_custom_call.1} parent=5 // pred_check_branch
        %260 = sbr.rel (%p258) target = $region32
      $region31: #{tpu_custom_call.1} parent=5 // pred_region
        // Predicated region
        $region33: #{tpu_custom_call.1} parent=31 // pred_check
          %p261 = pneg %p56
        $region34: #{tpu_custom_call.1} parent=31 // pred_check_branch
          %263 = sbr.rel (%p261) target = $region36
        $region35: #{tpu_custom_call.1} parent=31 // pred_region
          %s264 = sand.u32 %s46, 1
          %s265 = scalar_lea.sflag [#allocation3], %s264
          %s266 = sand.u32 %s46, 1
          %s267 = smul.addr %s266, 64
          %s268 = scalar_lea.vmem [#allocation2], %s267
          %s269 = smul.u32 16, %s30
          %s271 = ssub.s32 1024, 1024
          %272 = vsyncadd %s265, %s271
          %s273 = smul.addr %s29, 32
          %s274 = sadd.s32 %s269, %s273
          %s275 = smul.addr %s274, 64
          %s276 = scalar_lea.hbm %s0, %s275
          %s277 = sshll.u32 %s268, 4
          %s278 = int_to_ptr.vmem [resolvable:$true] %s277
          %283 = dma.hbm_to_vmem [thread:$0]  %s276, 1024, %s278, %s265, 64, 64, 4
        $region36: #{tpu_custom_call.1} parent=31 // pred_fallthru
          _
        // Predicated region
        $region37: #{tpu_custom_call.1} parent=31 // pred_check
          %p284 = pneg %p82
        $region38: #{tpu_custom_call.1} parent=31 // pred_check_branch
          %286 = sbr.rel (%p284) target = $region40
        $region39: #{tpu_custom_call.1} parent=31 // pred_region
          %s287 = sand.u32 %s22, 1
          %s288 = scalar_lea.sflag [#allocation6], %s287
          %s289 = sand.u32 %s72, 1
          %s290 = smul.addr %s289, 128
          %s291 = scalar_lea.vmem [#allocation5], %s290
          %s293 = ssub.s32 2048, 2048
          %294 = vsyncadd %s288, %s293
          %s295 = smul.addr %s29, 32
          %s296 = smul.addr %s295, 64
          %s297 = scalar_lea.hbm %s1, %s296
          %s298 = sshll.u32 %s291, 4
          %s299 = int_to_ptr.vmem [resolvable:$true] %s298
          %304 = dma.hbm_to_vmem [thread:$0]  %s297, 2048, %s299, %s288, 64, 64, 4
        $region40: #{tpu_custom_call.1} parent=31 // pred_fallthru
          _
      $region32: #{tpu_custom_call.1} parent=5 // pred_fallthru
        _
      %p305 = scmp.le.s32.totalorder 1, %s22
      %p306 = scmp.lt.s32.totalorder %s22, 5
      %p307 = pnand %p305, %p306
      %p308 = pneg %p307
      // Predicated region
      $region41: #{tpu_custom_call.1} parent=5 // pred_check
        _
      $region42: #{tpu_custom_call.1} parent=5 // pred_check_branch
        %310 = sbr.rel (%p307) target = $region44
      $region43: #{tpu_custom_call.1} parent=5 // pred_region
        %s311 = ssub.s32 %s22, 1
        %s312 = sand.u32 %s49, 1
        %s313 = scalar_lea.sflag [#allocation3], %s312
        %s314 = sand.u32 %s49, 1
        %s315 = smul.addr %s314, 64
        %s316 = scalar_lea.vmem [#allocation2], %s315
        // Predicated region
        $region45: #{tpu_custom_call.1} parent=43 // pred_check
          %p317 = pneg %p62
        $region46: #{tpu_custom_call.1} parent=43 // pred_check_branch
          %319 = sbr.rel (%p317) target = $region48
        $region47: #{tpu_custom_call.1} parent=43 // pred_region
          %320 = dma.done %s313, 1024
        $region48: #{tpu_custom_call.1} parent=43 // pred_fallthru
          _
        %s321 = sand.u32 %s27, 1
        %s322 = scalar_lea.sflag [#allocation6], %s321
        %s323 = sand.u32 %s75, 1
        %s324 = smul.addr %s323, 128
        %s325 = scalar_lea.vmem [#allocation5], %s324
        // Predicated region
        $region49: #{tpu_custom_call.1} parent=43 // pred_check
          %p326 = pneg %p88
        $region50: #{tpu_custom_call.1} parent=43 // pred_check_branch
          %328 = sbr.rel (%p326) target = $region52
        $region51: #{tpu_custom_call.1} parent=43 // pred_region
          %329 = dma.done %s322, 2048
        $region52: #{tpu_custom_call.1} parent=43 // pred_fallthru
          _
        // Predicated region
        $region53: #{tpu_custom_call.1} parent=43 // pred_check
          %p330 = pneg %p109
        $region54: #{tpu_custom_call.1} parent=43 // pred_check_branch
          %332 = sbr.rel (%p330) target = $region56
        $region55: #{tpu_custom_call.1} parent=43 // pred_region
          %333 = dma.done [#allocation6], 1024
        $region56: #{tpu_custom_call.1} parent=43 // pred_fallthru
          _
        // Predicated region
        $region57: #{tpu_custom_call.1} parent=43 // pred_check
          %p334 = pneg %p130
        $region58: #{tpu_custom_call.1} parent=43 // pred_check_branch
          %336 = sbr.rel (%p334) target = $region60
        $region59: #{tpu_custom_call.1} parent=43 // pred_region
          %337 = dma.done [#allocation9], 2048
        $region60: #{tpu_custom_call.1} parent=43 // pred_fallthru
          _
        // Predicated region
        $region61: #{tpu_custom_call.1} parent=43 // pred_check
          %p338 = pneg %p151
        $region62: #{tpu_custom_call.1} parent=43 // pred_check_branch
          %340 = sbr.rel (%p338) target = $region64
        $region63: #{tpu_custom_call.1} parent=43 // pred_region
          %341 = dma.done [#allocation9], 1024
        $region64: #{tpu_custom_call.1} parent=43 // pred_fallthru
          _
        %s342 = sand.u32 %s49, 1
        %s343 = scalar_lea.sflag [#allocation3], %s342
        %s344 = sand.u32 %s49, 1
        %s345 = smul.addr %s344, 64
        %s346 = scalar_lea.vmem [#allocation2], %s345
        %p347 = pneg %p62
        %p348 = pneg %p59
        %s349 = sand.u32 %s27, 1
        %s350 = scalar_lea.sflag [#allocation6], %s349
        %s351 = sand.u32 %s75, 1
        %s352 = smul.addr %s351, 128
        %s353 = scalar_lea.vmem [#allocation5], %s352
        %p354 = pneg %p88
        %p355 = pneg %p85
        %p356 = pneg %p109
        %p357 = pneg %p106
        %p358 = pneg %p130
        %p359 = pneg %p127
        %p360 = pneg %p151
        %p361 = pneg %p148
        %p362 = pneg %p172
        %p363 = pneg %p169
        %p364 = pneg %p200
        %p365 = pneg %p197
        %s366 = sand.u32 %s187, 1
        %s367 = scalar_lea.sflag [#allocation4], %s366
        %s368 = sand.u32 %s187, 1
        %s369 = smul.addr %s368, 128
        %s370 = scalar_lea.vmem [#allocation11], %s369
        %s371 = smul.u32 16, %s32
        %s372 = smul.u32 16, %s32
        %v375 = vld [vmem:[%s316] sm:$0xf]
        %v376 = vld [vmem:[%s316 + $0x4] sm:$0xf]
        %v377 = vld [vmem:[%s316 + $0x8] sm:$0xf]
        %v378 = vld [vmem:[%s316 + $0xc] sm:$0xf]
        %v379 = vld [vmem:[%s316 + $0x10] sm:$0xf]
        %v380 = vld [vmem:[%s316 + $0x14] sm:$0xf]
        %v381 = vld [vmem:[%s316 + $0x18] sm:$0xf]
        %v382 = vld [vmem:[%s316 + $0x1c] sm:$0xf]
        %v383 = vld [vmem:[%s316 + $0x20] sm:$0xf]
        %v384 = vld [vmem:[%s316 + $0x24] sm:$0xf]
        %v385 = vld [vmem:[%s316 + $0x28] sm:$0xf]
        %v386 = vld [vmem:[%s316 + $0x2c] sm:$0xf]
        %v387 = vld [vmem:[%s316 + $0x30] sm:$0xf]
        %v388 = vld [vmem:[%s316 + $0x34] sm:$0xf]
        %v389 = vld [vmem:[%s316 + $0x38] sm:$0xf]
        %v390 = vld [vmem:[%s316 + $0x3c] sm:$0xf]
        %v391 = vld [vmem:[%s325] sm:$0xf]
        %v392 = vld [vmem:[%s325 + $0x4] sm:$0xf]
        %v393 = vld [vmem:[%s325 + $0x8] sm:$0xf]
        %v394 = vld [vmem:[%s325 + $0xc] sm:$0xf]
        %v395 = vld [vmem:[%s325 + $0x10] sm:$0xf]
        %v396 = vld [vmem:[%s325 + $0x14] sm:$0xf]
        %v397 = vld [vmem:[%s325 + $0x18] sm:$0xf]
        %v398 = vld [vmem:[%s325 + $0x1c] sm:$0xf]
        %v399 = vld [vmem:[%s325 + $0x20] sm:$0xf]
        %v400 = vld [vmem:[%s325 + $0x24] sm:$0xf]
        %v401 = vld [vmem:[%s325 + $0x28] sm:$0xf]
        %v402 = vld [vmem:[%s325 + $0x2c] sm:$0xf]
        %v403 = vld [vmem:[%s325 + $0x30] sm:$0xf]
        %v404 = vld [vmem:[%s325 + $0x34] sm:$0xf]
        %v405 = vld [vmem:[%s325 + $0x38] sm:$0xf]
        %v406 = vld [vmem:[%s325 + $0x3c] sm:$0xf]
        %v407 = vld [vmem:[%s325 + $0x40] sm:$0xf]
        %v408 = vld [vmem:[%s325 + $0x44] sm:$0xf]
        %v409 = vld [vmem:[%s325 + $0x48] sm:$0xf]
        %v410 = vld [vmem:[%s325 + $0x4c] sm:$0xf]
        %v411 = vld [vmem:[%s325 + $0x50] sm:$0xf]
        %v412 = vld [vmem:[%s325 + $0x54] sm:$0xf]
        %v413 = vld [vmem:[%s325 + $0x58] sm:$0xf]
        %v414 = vld [vmem:[%s325 + $0x5c] sm:$0xf]
        %v415 = vld [vmem:[%s325 + $0x60] sm:$0xf]
        %v416 = vld [vmem:[%s325 + $0x64] sm:$0xf]
        %v417 = vld [vmem:[%s325 + $0x68] sm:$0xf]
        %v418 = vld [vmem:[%s325 + $0x6c] sm:$0xf]
        %v419 = vld [vmem:[%s325 + $0x70] sm:$0xf]
        %v420 = vld [vmem:[%s325 + $0x74] sm:$0xf]
        %v421 = vld [vmem:[%s325 + $0x78] sm:$0xf]
        %v422 = vld [vmem:[%s325 + $0x7c] sm:$0xf]
        %v423 = vld [vmem:[#allocation7] sm:$0xf]
        %v424 = vld [vmem:[#allocation7 + $0x4] sm:$0xf]
        %v425 = vld [vmem:[#allocation7 + $0x8] sm:$0xf]
        %v426 = vld [vmem:[#allocation7 + $0xc] sm:$0xf]
        %v427 = vld [vmem:[#allocation7 + $0x10] sm:$0xf]
        %v428 = vld [vmem:[#allocation7 + $0x14] sm:$0xf]
        %v429 = vld [vmem:[#allocation7 + $0x18] sm:$0xf]
        %v430 = vld [vmem:[#allocation7 + $0x1c] sm:$0xf]
        %v431 = vld [vmem:[#allocation7 + $0x20] sm:$0xf]
        %v432 = vld [vmem:[#allocation7 + $0x24] sm:$0xf]
        %v433 = vld [vmem:[#allocation7 + $0x28] sm:$0xf]
        %v434 = vld [vmem:[#allocation7 + $0x2c] sm:$0xf]
        %v435 = vld [vmem:[#allocation7 + $0x30] sm:$0xf]
        %v436 = vld [vmem:[#allocation7 + $0x34] sm:$0xf]
        %v437 = vld [vmem:[#allocation7 + $0x38] sm:$0xf]
        %v438 = vld [vmem:[#allocation7 + $0x3c] sm:$0xf]
        %v455 = vunpack.c.l.b16 %v423
        %v456 = vunpack.c.l.b16 %v424
        %v457 = vunpack.c.l.b16 %v425
        %v458 = vunpack.c.l.b16 %v426
        %v459 = vunpack.c.l.b16 %v427
        %v460 = vunpack.c.l.b16 %v428
        %v461 = vunpack.c.l.b16 %v429
        %v462 = vunpack.c.l.b16 %v430
        %v463 = vunpack.c.l.b16 %v431
        %v464 = vunpack.c.l.b16 %v432
        %v465 = vunpack.c.l.b16 %v433
        %v466 = vunpack.c.l.b16 %v434
        %v467 = vunpack.c.l.b16 %v435
        %v468 = vunpack.c.l.b16 %v436
        %v469 = vunpack.c.l.b16 %v437
        %v470 = vunpack.c.l.b16 %v438
        %v471 = vpack.c.b16 %v456, %v455
        %v472 = vpack.c.b16 %v458, %v457
        %v473 = vpack.c.b16 %v460, %v459
        %v474 = vpack.c.b16 %v462, %v461
        %v475 = vpack.c.b16 %v464, %v463
        %v476 = vpack.c.b16 %v466, %v465
        %v477 = vpack.c.b16 %v468, %v467
        %v478 = vpack.c.b16 %v470, %v469
        %v503 = vunpack.c.l.b16 %v375
        %v504 = vunpack.c.l.b16 %v376
        %v505 = vunpack.c.l.b16 %v377
        %v506 = vunpack.c.l.b16 %v378
        %v507 = vunpack.c.l.b16 %v379
        %v508 = vunpack.c.l.b16 %v380
        %v509 = vunpack.c.l.b16 %v381
        %v510 = vunpack.c.l.b16 %v382
        %v511 = vunpack.c.l.b16 %v383
        %v512 = vunpack.c.l.b16 %v384
        %v513 = vunpack.c.l.b16 %v385
        %v514 = vunpack.c.l.b16 %v386
        %v515 = vunpack.c.l.b16 %v387
        %v516 = vunpack.c.l.b16 %v388
        %v517 = vunpack.c.l.b16 %v389
        %v518 = vunpack.c.l.b16 %v390
        %v519 = vpack.c.b16 %v504, %v503
        %v520 = vpack.c.b16 %v506, %v505
        %v521 = vpack.c.b16 %v508, %v507
        %v522 = vpack.c.b16 %v510, %v509
        %v523 = vpack.c.b16 %v512, %v511
        %v524 = vpack.c.b16 %v514, %v513
        %v525 = vpack.c.b16 %v516, %v515
        %v526 = vpack.c.b16 %v518, %v517
        %535 = vmatprep.subr.bf16.mxu0 0
        %536 = vmatpush1.bf16.xpose.msra.mxu0 %v519
        %537 = vmatprep.subr.bf16.mxu0 0
        %538 = vmatpush1.bf16.xpose.msra.mxu0 %v520
        %539 = vmatprep.subr.bf16.mxu0 0
        %540 = vmatpush1.bf16.xpose.msra.mxu0 %v521
        %541 = vmatprep.subr.bf16.mxu0 0
        %542 = vmatpush1.bf16.xpose.msra.mxu0 %v522
        %543 = vmatprep.subr.bf16.mxu0 0
        %544 = vmatpush1.bf16.xpose.msra.mxu0 %v523
        %545 = vmatprep.subr.bf16.mxu0 0
        %546 = vmatpush1.bf16.xpose.msra.mxu0 %v524
        %547 = vmatprep.subr.bf16.mxu0 0
        %548 = vmatpush1.bf16.xpose.msra.mxu0 %v525
        %549 = vmatprep.subr.bf16.mxu0 0
        %550 = vmatpush1.bf16.xpose.msra.mxu0 %v526
        %551 = vmatprep.subr.bf16.mxu0 0
        %552 = vmatpush1.bf16.xpose.msra.mxu0 0
        %553 = vmatprep.subr.bf16.mxu0 0
        %554 = vmatpush1.bf16.xpose.msra.mxu0 0
        %555 = vmatprep.subr.bf16.mxu0 0
        %556 = vmatpush1.bf16.xpose.msra.mxu0 0
        %557 = vmatprep.subr.bf16.mxu0 0
        %558 = vmatpush1.bf16.xpose.msra.mxu0 0
        %559 = vmatprep.subr.bf16.mxu0 0
        %560 = vmatpush1.bf16.xpose.msra.mxu0 0
        %561 = vmatprep.subr.bf16.mxu0 0
        %562 = vmatpush1.bf16.xpose.msra.mxu0 0
        %563 = vmatprep.subr.bf16.mxu0 0
        %564 = vmatpush1.bf16.xpose.msra.mxu0 0
        %565 = vmatprep.subr.bf16.mxu0 0
        %566 = vmatpush1.bf16.xpose.msra.mxu0 0
        %567 = vmatprep.mubr.bf16.mxu0 0
        %568 = vmatmul.mubr.bf16.gmra.mrb[0].mxu0 %v471
        %v569 = vpop.f32.mrb[0].mxu0
        %v570 = vadd.f32 0.0, %v569
        %v571 = vpop.f32.mrb[0].mxu0
        %v572 = vpop.f32.mrb[0].mxu0
        %v573 = vadd.f32 0.0, %v572
        %v574 = vpop.f32.mrb[0].mxu0
        %575 = vmatprep.mubr.bf16.mxu0 0
        %576 = vmatmul.mubr.bf16.gmra.mrb[0].mxu0 %v472
        %v577 = vpop.f32.mrb[0].mxu0
        %v578 = vadd.f32 0.0, %v577
        %v579 = vpop.f32.mrb[0].mxu0
        %v580 = vpop.f32.mrb[0].mxu0
        %v581 = vadd.f32 0.0, %v580
        %v582 = vpop.f32.mrb[0].mxu0
        %583 = vmatprep.mubr.bf16.mxu0 0
        %584 = vmatmul.mubr.bf16.gmra.mrb[0].mxu0 %v473
        %v585 = vpop.f32.mrb[0].mxu0
        %v586 = vadd.f32 0.0, %v585
        %v587 = vpop.f32.mrb[0].mxu0
        %v588 = vpop.f32.mrb[0].mxu0
        %v589 = vadd.f32 0.0, %v588
        %v590 = vpop.f32.mrb[0].mxu0
        %591 = vmatprep.mubr.bf16.mxu0 0
        %592 = vmatmul.mubr.bf16.gmra.mrb[0].mxu0 %v474
        %v593 = vpop.f32.mrb[0].mxu0
        %v594 = vadd.f32 0.0, %v593
        %v595 = vpop.f32.mrb[0].mxu0
        %v596 = vpop.f32.mrb[0].mxu0
        %v597 = vadd.f32 0.0, %v596
        %v598 = vpop.f32.mrb[0].mxu0
        %599 = vmatprep.mubr.bf16.mxu0 0
        %600 = vmatmul.mubr.bf16.gmra.mrb[0].mxu0 %v475
        %v601 = vpop.f32.mrb[0].mxu0
        %v602 = vadd.f32 0.0, %v601
        %v603 = vpop.f32.mrb[0].mxu0
        %v604 = vpop.f32.mrb[0].mxu0
        %v605 = vadd.f32 0.0, %v604
        %v606 = vpop.f32.mrb[0].mxu0
        %607 = vmatprep.mubr.bf16.mxu0 0
        %608 = vmatmul.mubr.bf16.gmra.mrb[0].mxu0 %v476
        %v609 = vpop.f32.mrb[0].mxu0
        %v610 = vadd.f32 0.0, %v609
        %v611 = vpop.f32.mrb[0].mxu0
        %v612 = vpop.f32.mrb[0].mxu0
        %v613 = vadd.f32 0.0, %v612
        %v614 = vpop.f32.mrb[0].mxu0
        %615 = vmatprep.mubr.bf16.mxu0 0
        %616 = vmatmul.mubr.bf16.gmra.mrb[0].mxu0 %v477
        %v617 = vpop.f32.mrb[0].mxu0
        %v618 = vadd.f32 0.0, %v617
        %v619 = vpop.f32.mrb[0].mxu0
        %v620 = vpop.f32.mrb[0].mxu0
        %v621 = vadd.f32 0.0, %v620
        %v622 = vpop.f32.mrb[0].mxu0
        %623 = vmatprep.mubr.bf16.mxu0 0
        %624 = vmatmul.mubr.bf16.gmra.mrb[0].mxu0 %v478
        %v625 = vpop.f32.mrb[0].mxu0
        %v626 = vadd.f32 0.0, %v625
        %v627 = vpop.f32.mrb[0].mxu0
        %v628 = vpop.f32.mrb[0].mxu0
        %v629 = vadd.f32 0.0, %v628
        %v630 = vpop.f32.mrb[0].mxu0
        %631 = vdwg.mxu0
        %v632 = vpack.c.bf16 %v573, %v570
        %v633 = vpack.c.bf16 %v581, %v578
        %v634 = vpack.c.bf16 %v589, %v586
        %v635 = vpack.c.bf16 %v597, %v594
        %v636 = vpack.c.bf16 %v605, %v602
        %v637 = vpack.c.bf16 %v613, %v610
        %v638 = vpack.c.bf16 %v621, %v618
        %v639 = vpack.c.bf16 %v629, %v626
        %v640 = vld [vmem:[#allocation8] sm:$0xf]
        %v641 = vld [vmem:[#allocation8 + $0x4] sm:$0xf]
        %v642 = vld [vmem:[#allocation8 + $0x8] sm:$0xf]
        %v643 = vld [vmem:[#allocation8 + $0xc] sm:$0xf]
        %v644 = vld [vmem:[#allocation8 + $0x10] sm:$0xf]
        %v645 = vld [vmem:[#allocation8 + $0x14] sm:$0xf]
        %v646 = vld [vmem:[#allocation8 + $0x18] sm:$0xf]
        %v647 = vld [vmem:[#allocation8 + $0x1c] sm:$0xf]
        %v648 = vld [vmem:[#allocation8 + $0x20] sm:$0xf]
        %v649 = vld [vmem:[#allocation8 + $0x24] sm:$0xf]
        %v650 = vld [vmem:[#allocation8 + $0x28] sm:$0xf]
        %v651 = vld [vmem:[#allocation8 + $0x2c] sm:$0xf]
        %v652 = vld [vmem:[#allocation8 + $0x30] sm:$0xf]
        %v653 = vld [vmem:[#allocation8 + $0x34] sm:$0xf]
        %v654 = vld [vmem:[#allocation8 + $0x38] sm:$0xf]
        %v655 = vld [vmem:[#allocation8 + $0x3c] sm:$0xf]
        %v656 = vld [vmem:[#allocation8 + $0x40] sm:$0xf]
        %v657 = vld [vmem:[#allocation8 + $0x44] sm:$0xf]
        %v658 = vld [vmem:[#allocation8 + $0x48] sm:$0xf]
        %v659 = vld [vmem:[#allocation8 + $0x4c] sm:$0xf]
        %v660 = vld [vmem:[#allocation8 + $0x50] sm:$0xf]
        %v661 = vld [vmem:[#allocation8 + $0x54] sm:$0xf]
        %v662 = vld [vmem:[#allocation8 + $0x58] sm:$0xf]
        %v663 = vld [vmem:[#allocation8 + $0x5c] sm:$0xf]
        %v664 = vld [vmem:[#allocation8 + $0x60] sm:$0xf]
        %v665 = vld [vmem:[#allocation8 + $0x64] sm:$0xf]
        %v666 = vld [vmem:[#allocation8 + $0x68] sm:$0xf]
        %v667 = vld [vmem:[#allocation8 + $0x6c] sm:$0xf]
        %v668 = vld [vmem:[#allocation8 + $0x70] sm:$0xf]
        %v669 = vld [vmem:[#allocation8 + $0x74] sm:$0xf]
        %v670 = vld [vmem:[#allocation8 + $0x78] sm:$0xf]
        %v671 = vld [vmem:[#allocation8 + $0x7c] sm:$0xf]
        %v704 = vunpack.c.l.b16 %v640
        %v705 = vunpack.c.l.b16 %v641
        %v706 = vunpack.c.l.b16 %v642
        %v707 = vunpack.c.l.b16 %v643
        %v708 = vunpack.c.l.b16 %v644
        %v709 = vunpack.c.l.b16 %v645
        %v710 = vunpack.c.l.b16 %v646
        %v711 = vunpack.c.l.b16 %v647
        %v712 = vunpack.c.l.b16 %v648
        %v713 = vunpack.c.l.b16 %v649
        %v714 = vunpack.c.l.b16 %v650
        %v715 = vunpack.c.l.b16 %v651
        %v716 = vunpack.c.l.b16 %v652
        %v717 = vunpack.c.l.b16 %v653
        %v718 = vunpack.c.l.b16 %v654
        %v719 = vunpack.c.l.b16 %v655
        %v720 = vunpack.c.l.b16 %v656
        %v721 = vunpack.c.l.b16 %v657
        %v722 = vunpack.c.l.b16 %v658
        %v723 = vunpack.c.l.b16 %v659
        %v724 = vunpack.c.l.b16 %v660
        %v725 = vunpack.c.l.b16 %v661
        %v726 = vunpack.c.l.b16 %v662
        %v727 = vunpack.c.l.b16 %v663
        %v728 = vunpack.c.l.b16 %v664
        %v729 = vunpack.c.l.b16 %v665
        %v730 = vunpack.c.l.b16 %v666
        %v731 = vunpack.c.l.b16 %v667
        %v732 = vunpack.c.l.b16 %v668
        %v733 = vunpack.c.l.b16 %v669
        %v734 = vunpack.c.l.b16 %v670
        %v735 = vunpack.c.l.b16 %v671
        %v736 = vpack.c.b16 %v705, %v704
        %v737 = vpack.c.b16 %v707, %v706
        %v738 = vpack.c.b16 %v709, %v708
        %v739 = vpack.c.b16 %v711, %v710
        %v740 = vpack.c.b16 %v713, %v712
        %v741 = vpack.c.b16 %v715, %v714
        %v742 = vpack.c.b16 %v717, %v716
        %v743 = vpack.c.b16 %v719, %v718
        %v744 = vpack.c.b16 %v721, %v720
        %v745 = vpack.c.b16 %v723, %v722
        %v746 = vpack.c.b16 %v725, %v724
        %v747 = vpack.c.b16 %v727, %v726
        %v748 = vpack.c.b16 %v729, %v728
        %v749 = vpack.c.b16 %v731, %v730
        %v750 = vpack.c.b16 %v733, %v732
        %v751 = vpack.c.b16 %v735, %v734
        %v800 = vunpack.c.l.b16 %v391
        %v801 = vunpack.c.l.b16 %v392
        %v802 = vunpack.c.l.b16 %v393
        %v803 = vunpack.c.l.b16 %v394
        %v804 = vunpack.c.l.b16 %v395
        %v805 = vunpack.c.l.b16 %v396
        %v806 = vunpack.c.l.b16 %v397
        %v807 = vunpack.c.l.b16 %v398
        %v808 = vunpack.c.l.b16 %v399
        %v809 = vunpack.c.l.b16 %v400
        %v810 = vunpack.c.l.b16 %v401
        %v811 = vunpack.c.l.b16 %v402
        %v812 = vunpack.c.l.b16 %v403
        %v813 = vunpack.c.l.b16 %v404
        %v814 = vunpack.c.l.b16 %v405
        %v815 = vunpack.c.l.b16 %v406
        %v816 = vunpack.c.l.b16 %v407
        %v817 = vunpack.c.l.b16 %v408
        %v818 = vunpack.c.l.b16 %v409
        %v819 = vunpack.c.l.b16 %v410
        %v820 = vunpack.c.l.b16 %v411
        %v821 = vunpack.c.l.b16 %v412
        %v822 = vunpack.c.l.b16 %v413
        %v823 = vunpack.c.l.b16 %v414
        %v824 = vunpack.c.l.b16 %v415
        %v825 = vunpack.c.l.b16 %v416
        %v826 = vunpack.c.l.b16 %v417
        %v827 = vunpack.c.l.b16 %v418
        %v828 = vunpack.c.l.b16 %v419
        %v829 = vunpack.c.l.b16 %v420
        %v830 = vunpack.c.l.b16 %v421
        %v831 = vunpack.c.l.b16 %v422
        %v832 = vpack.c.b16 %v801, %v800
        %v833 = vpack.c.b16 %v803, %v802
        %v834 = vpack.c.b16 %v805, %v804
        %v835 = vpack.c.b16 %v807, %v806
        %v836 = vpack.c.b16 %v809, %v808
        %v837 = vpack.c.b16 %v811, %v810
        %v838 = vpack.c.b16 %v813, %v812
        %v839 = vpack.c.b16 %v815, %v814
        %v840 = vpack.c.b16 %v817, %v816
        %v841 = vpack.c.b16 %v819, %v818
        %v842 = vpack.c.b16 %v821, %v820
        %v843 = vpack.c.b16 %v823, %v822
        %v844 = vpack.c.b16 %v825, %v824
        %v845 = vpack.c.b16 %v827, %v826
        %v846 = vpack.c.b16 %v829, %v828
        %v847 = vpack.c.b16 %v831, %v830
        %864 = vmatprep.subr.bf16.mxu0 0
        %865 = vmatpush1.bf16.xpose.msra.mxu0 %v832
        %866 = vmatprep.subr.bf16.mxu0 0
        %867 = vmatpush1.bf16.xpose.msra.mxu0 %v833
        %868 = vmatprep.subr.bf16.mxu0 0
        %869 = vmatpush1.bf16.xpose.msra.mxu0 %v834
        %870 = vmatprep.subr.bf16.mxu0 0
        %871 = vmatpush1.bf16.xpose.msra.mxu0 %v835
        %872 = vmatprep.subr.bf16.mxu0 0
        %873 = vmatpush1.bf16.xpose.msra.mxu0 %v836
        %874 = vmatprep.subr.bf16.mxu0 0
        %875 = vmatpush1.bf16.xpose.msra.mxu0 %v837
        %876 = vmatprep.subr.bf16.mxu0 0
        %877 = vmatpush1.bf16.xpose.msra.mxu0 %v838
        %878 = vmatprep.subr.bf16.mxu0 0
        %879 = vmatpush1.bf16.xpose.msra.mxu0 %v839
        %880 = vmatprep.subr.bf16.mxu0 0
        %881 = vmatpush1.bf16.xpose.msra.mxu0 %v840
        %882 = vmatprep.subr.bf16.mxu0 0
        %883 = vmatpush1.bf16.xpose.msra.mxu0 %v841
        %884 = vmatprep.subr.bf16.mxu0 0
        %885 = vmatpush1.bf16.xpose.msra.mxu0 %v842
        %886 = vmatprep.subr.bf16.mxu0 0
        %887 = vmatpush1.bf16.xpose.msra.mxu0 %v843
        %888 = vmatprep.subr.bf16.mxu0 0
        %889 = vmatpush1.bf16.xpose.msra.mxu0 %v844
        %890 = vmatprep.subr.bf16.mxu0 0
        %891 = vmatpush1.bf16.xpose.msra.mxu0 %v845
        %892 = vmatprep.subr.bf16.mxu0 0
        %893 = vmatpush1.bf16.xpose.msra.mxu0 %v846
        %894 = vmatprep.subr.bf16.mxu0 0
        %895 = vmatpush1.bf16.xpose.msra.mxu0 %v847
        %896 = vmatprep.mubr.bf16.mxu0 0
        %897 = vmatmul.mubr.bf16.gmra.mrb[0].mxu0 %v736
        %v898 = vpop.f32.mrb[0].mxu0
        %v899 = vadd.f32 0.0, %v898
        %v900 = vpop.f32.mrb[0].mxu0
        %v901 = vadd.f32 0.0, %v900
        %v902 = vpop.f32.mrb[0].mxu0
        %v903 = vadd.f32 0.0, %v902
        %v904 = vpop.f32.mrb[0].mxu0
        %v905 = vadd.f32 0.0, %v904
        %906 = vmatprep.mubr.bf16.mxu0 0
        %907 = vmatmul.mubr.bf16.gmra.mrb[0].mxu0 %v737
        %v908 = vpop.f32.mrb[0].mxu0
        %v909 = vadd.f32 0.0, %v908
        %v910 = vpop.f32.mrb[0].mxu0
        %v911 = vadd.f32 0.0, %v910
        %v912 = vpop.f32.mrb[0].mxu0
        %v913 = vadd.f32 0.0, %v912
        %v914 = vpop.f32.mrb[0].mxu0
        %v915 = vadd.f32 0.0, %v914
        %916 = vmatprep.mubr.bf16.mxu0 0
        %917 = vmatmul.mubr.bf16.gmra.mrb[0].mxu0 %v738
        %v918 = vpop.f32.mrb[0].mxu0
        %v919 = vadd.f32 0.0, %v918
        %v920 = vpop.f32.mrb[0].mxu0
        %v921 = vadd.f32 0.0, %v920
        %v922 = vpop.f32.mrb[0].mxu0
        %v923 = vadd.f32 0.0, %v922
        %v924 = vpop.f32.mrb[0].mxu0
        %v925 = vadd.f32 0.0, %v924
        %926 = vmatprep.mubr.bf16.mxu0 0
        %927 = vmatmul.mubr.bf16.gmra.mrb[0].mxu0 %v739
        %v928 = vpop.f32.mrb[0].mxu0
        %v929 = vadd.f32 0.0, %v928
        %v930 = vpop.f32.mrb[0].mxu0
        %v931 = vadd.f32 0.0, %v930
        %v932 = vpop.f32.mrb[0].mxu0
        %v933 = vadd.f32 0.0, %v932
        %v934 = vpop.f32.mrb[0].mxu0
        %v935 = vadd.f32 0.0, %v934
        %936 = vmatprep.mubr.bf16.mxu0 0
        %937 = vmatmul.mubr.bf16.gmra.mrb[0].mxu0 %v740
        %v938 = vpop.f32.mrb[0].mxu0
        %v939 = vadd.f32 0.0, %v938
        %v940 = vpop.f32.mrb[0].mxu0
        %v941 = vadd.f32 0.0, %v940
        %v942 = vpop.f32.mrb[0].mxu0
        %v943 = vadd.f32 0.0, %v942
        %v944 = vpop.f32.mrb[0].mxu0
        %v945 = vadd.f32 0.0, %v944
        %946 = vmatprep.mubr.bf16.mxu0 0
        %947 = vmatmul.mubr.bf16.gmra.mrb[0].mxu0 %v741
        %v948 = vpop.f32.mrb[0].mxu0
        %v949 = vadd.f32 0.0, %v948
        %v950 = vpop.f32.mrb[0].mxu0
        %v951 = vadd.f32 0.0, %v950
        %v952 = vpop.f32.mrb[0].mxu0
        %v953 = vadd.f32 0.0, %v952
        %v954 = vpop.f32.mrb[0].mxu0
        %v955 = vadd.f32 0.0, %v954
        %956 = vmatprep.mubr.bf16.mxu0 0
        %957 = vmatmul.mubr.bf16.gmra.mrb[0].mxu0 %v742
        %v958 = vpop.f32.mrb[0].mxu0
        %v959 = vadd.f32 0.0, %v958
        %v960 = vpop.f32.mrb[0].mxu0
        %v961 = vadd.f32 0.0, %v960
        %v962 = vpop.f32.mrb[0].mxu0
        %v963 = vadd.f32 0.0, %v962
        %v964 = vpop.f32.mrb[0].mxu0
        %v965 = vadd.f32 0.0, %v964
        %966 = vmatprep.mubr.bf16.mxu0 0
        %967 = vmatmul.mubr.bf16.gmra.mrb[0].mxu0 %v743
        %v968 = vpop.f32.mrb[0].mxu0
        %v969 = vadd.f32 0.0, %v968
        %v970 = vpop.f32.mrb[0].mxu0
        %v971 = vadd.f32 0.0, %v970
        %v972 = vpop.f32.mrb[0].mxu0
        %v973 = vadd.f32 0.0, %v972
        %v974 = vpop.f32.mrb[0].mxu0
        %v975 = vadd.f32 0.0, %v974
        %976 = vmatprep.mubr.bf16.mxu0 0
        %977 = vmatmul.mubr.bf16.gmra.mrb[0].mxu0 %v744
        %v978 = vpop.f32.mrb[0].mxu0
        %v979 = vadd.f32 0.0, %v978
        %v980 = vpop.f32.mrb[0].mxu0
        %v981 = vadd.f32 0.0, %v980
        %v982 = vpop.f32.mrb[0].mxu0
        %v983 = vadd.f32 0.0, %v982
        %v984 = vpop.f32.mrb[0].mxu0
        %v985 = vadd.f32 0.0, %v984
        %986 = vmatprep.mubr.bf16.mxu0 0
        %987 = vmatmul.mubr.bf16.gmra.mrb[0].mxu0 %v745
        %v988 = vpop.f32.mrb[0].mxu0
        %v989 = vadd.f32 0.0, %v988
        %v990 = vpop.f32.mrb[0].mxu0
        %v991 = vadd.f32 0.0, %v990
        %v992 = vpop.f32.mrb[0].mxu0
        %v993 = vadd.f32 0.0, %v992
        %v994 = vpop.f32.mrb[0].mxu0
        %v995 = vadd.f32 0.0, %v994
        %996 = vmatprep.mubr.bf16.mxu0 0
        %997 = vmatmul.mubr.bf16.gmra.mrb[0].mxu0 %v746
        %v998 = vpop.f32.mrb[0].mxu0
        %v999 = vadd.f32 0.0, %v998
        %v1000 = vpop.f32.mrb[0].mxu0
        %v1001 = vadd.f32 0.0, %v1000
        %v1002 = vpop.f32.mrb[0].mxu0
        %v1003 = vadd.f32 0.0, %v1002
        %v1004 = vpop.f32.mrb[0].mxu0
        %v1005 = vadd.f32 0.0, %v1004
        %1006 = vmatprep.mubr.bf16.mxu0 0
        %1007 = vmatmul.mubr.bf16.gmra.mrb[0].mxu0 %v747
        %v1008 = vpop.f32.mrb[0].mxu0
        %v1009 = vadd.f32 0.0, %v1008
        %v1010 = vpop.f32.mrb[0].mxu0
        %v1011 = vadd.f32 0.0, %v1010
        %v1012 = vpop.f32.mrb[0].mxu0
        %v1013 = vadd.f32 0.0, %v1012
        %v1014 = vpop.f32.mrb[0].mxu0
        %v1015 = vadd.f32 0.0, %v1014
        %1016 = vmatprep.mubr.bf16.mxu0 0
        %1017 = vmatmul.mubr.bf16.gmra.mrb[0].mxu0 %v748
        %v1018 = vpop.f32.mrb[0].mxu0
        %v1019 = vadd.f32 0.0, %v1018
        %v1020 = vpop.f32.mrb[0].mxu0
        %v1021 = vadd.f32 0.0, %v1020
        %v1022 = vpop.f32.mrb[0].mxu0
        %v1023 = vadd.f32 0.0, %v1022
        %v1024 = vpop.f32.mrb[0].mxu0
        %v1025 = vadd.f32 0.0, %v1024
        %1026 = vmatprep.mubr.bf16.mxu0 0
        %1027 = vmatmul.mubr.bf16.gmra.mrb[0].mxu0 %v749
        %v1028 = vpop.f32.mrb[0].mxu0
        %v1029 = vadd.f32 0.0, %v1028
        %v1030 = vpop.f32.mrb[0].mxu0
        %v1031 = vadd.f32 0.0, %v1030
        %v1032 = vpop.f32.mrb[0].mxu0
        %v1033 = vadd.f32 0.0, %v1032
        %v1034 = vpop.f32.mrb[0].mxu0
        %v1035 = vadd.f32 0.0, %v1034
        %1036 = vmatprep.mubr.bf16.mxu0 0
        %1037 = vmatmul.mubr.bf16.gmra.mrb[0].mxu0 %v750
        %v1038 = vpop.f32.mrb[0].mxu0
        %v1039 = vadd.f32 0.0, %v1038
        %v1040 = vpop.f32.mrb[0].mxu0
        %v1041 = vadd.f32 0.0, %v1040
        %v1042 = vpop.f32.mrb[0].mxu0
        %v1043 = vadd.f32 0.0, %v1042
        %v1044 = vpop.f32.mrb[0].mxu0
        %v1045 = vadd.f32 0.0, %v1044
        %1046 = vmatprep.mubr.bf16.mxu0 0
        %1047 = vmatmul.mubr.bf16.gmra.mrb[0].mxu0 %v751
        %v1048 = vpop.f32.mrb[0].mxu0
        %v1049 = vadd.f32 0.0, %v1048
        %v1050 = vpop.f32.mrb[0].mxu0
        %v1051 = vadd.f32 0.0, %v1050
        %v1052 = vpop.f32.mrb[0].mxu0
        %v1053 = vadd.f32 0.0, %v1052
        %v1054 = vpop.f32.mrb[0].mxu0
        %v1055 = vadd.f32 0.0, %v1054
        %1056 = vdwg.mxu0
        %v1057 = vpack.c.bf16 %v903, %v899
        %v1058 = vpack.c.bf16 %v905, %v901
        %v1059 = vpack.c.bf16 %v913, %v909
        %v1060 = vpack.c.bf16 %v915, %v911
        %v1061 = vpack.c.bf16 %v923, %v919
        %v1062 = vpack.c.bf16 %v925, %v921
        %v1063 = vpack.c.bf16 %v933, %v929
        %v1064 = vpack.c.bf16 %v935, %v931
        %v1065 = vpack.c.bf16 %v943, %v939
        %v1066 = vpack.c.bf16 %v945, %v941
        %v1067 = vpack.c.bf16 %v953, %v949
        %v1068 = vpack.c.bf16 %v955, %v951
        %v1069 = vpack.c.bf16 %v963, %v959
        %v1070 = vpack.c.bf16 %v965, %v961
        %v1071 = vpack.c.bf16 %v973, %v969
        %v1072 = vpack.c.bf16 %v975, %v971
        %v1073 = vpack.c.bf16 %v983, %v979
        %v1074 = vpack.c.bf16 %v985, %v981
        %v1075 = vpack.c.bf16 %v993, %v989
        %v1076 = vpack.c.bf16 %v995, %v991
        %v1077 = vpack.c.bf16 %v1003, %v999
        %v1078 = vpack.c.bf16 %v1005, %v1001
        %v1079 = vpack.c.bf16 %v1013, %v1009
        %v1080 = vpack.c.bf16 %v1015, %v1011
        %v1081 = vpack.c.bf16 %v1023, %v1019
        %v1082 = vpack.c.bf16 %v1025, %v1021
        %v1083 = vpack.c.bf16 %v1033, %v1029
        %v1084 = vpack.c.bf16 %v1035, %v1031
        %v1085 = vpack.c.bf16 %v1043, %v1039
        %v1086 = vpack.c.bf16 %v1045, %v1041
        %v1087 = vpack.c.bf16 %v1053, %v1049
        %v1088 = vpack.c.bf16 %v1055, %v1051
        %1089 = vxpose.xlu0.c.b16.start [1/8] %v632, 128
        %1090 = vxpose.xlu0.c.b16.cont [2/8] 0, 128
        %1091 = vxpose.xlu0.c.b16.cont [3/8] 0, 128
        %1092 = vxpose.xlu0.c.b16.cont [4/8] 0, 128
        %1093 = vxpose.xlu0.c.b16.cont [5/8] 0, 128
        %1094 = vxpose.xlu0.c.b16.cont [6/8] 0, 128
        %1095 = vxpose.xlu0.c.b16.cont [7/8] 0, 128
        %1096 = vxpose.xlu0.c.b16.end [8/8] 0, 128
        %v1097 = vpop.trf.xlu0
        %v1098 = vpop.trf.xlu0
        %v1099 = vpop.trf.xlu0
        %v1100 = vpop.trf.xlu0
        %v1101 = vpop.trf.xlu0
        %v1102 = vpop.trf.xlu0
        %v1103 = vpop.trf.xlu0
        %v1104 = vpop.trf.xlu0
        %vm1105 = vcmask 130048
        %v1107 = vsel %vm1105, %v1097, 0
        %v1110 = vsel %vm1105, %v1098, 0
        %v1113 = vsel %vm1105, %v1099, 0
        %v1116 = vsel %vm1105, %v1100, 0
        %v1119 = vsel %vm1105, %v1101, 0
        %v1122 = vsel %vm1105, %v1102, 0
        %v1125 = vsel %vm1105, %v1103, 0
        %v1128 = vsel %vm1105, %v1104, 0
        %1130 = vmatprep.subr.bf16.mxu0 %v1058
        %1131 = vmatpush1.bf16.msra.mxu0 %v1057
        %1132 = vmatprep.subr.bf16.mxu0 0
        %1133 = vmatpush1.bf16.msra.mxu0 0
        %1134 = vmatprep.subr.bf16.mxu0 0
        %1135 = vmatpush1.bf16.msra.mxu0 0
        %1136 = vmatprep.subr.bf16.mxu0 0
        %1137 = vmatpush1.bf16.msra.mxu0 0
        %1138 = vmatprep.subr.bf16.mxu0 0
        %1139 = vmatpush1.bf16.msra.mxu0 0
        %1140 = vmatprep.subr.bf16.mxu0 0
        %1141 = vmatpush1.bf16.msra.mxu0 0
        %1142 = vmatprep.subr.bf16.mxu0 0
        %1143 = vmatpush1.bf16.msra.mxu0 0
        %1144 = vmatprep.subr.bf16.mxu0 0
        %1145 = vmatpush1.bf16.msra.mxu0 0
        %1146 = vmatprep.subr.bf16.mxu0 0
        %1147 = vmatpush1.bf16.msra.mxu0 0
        %1148 = vmatprep.subr.bf16.mxu0 0
        %1149 = vmatpush1.bf16.msra.mxu0 0
        %1150 = vmatprep.subr.bf16.mxu0 0
        %1151 = vmatpush1.bf16.msra.mxu0 0
        %1152 = vmatprep.subr.bf16.mxu0 0
        %1153 = vmatpush1.bf16.msra.mxu0 0
        %1154 = vmatprep.subr.bf16.mxu0 0
        %1155 = vmatpush1.bf16.msra.mxu0 0
        %1156 = vmatprep.subr.bf16.mxu0 0
        %1157 = vmatpush1.bf16.msra.mxu0 0
        %1158 = vmatprep.subr.bf16.mxu0 0
        %1159 = vmatpush1.bf16.msra.mxu0 0
        %1160 = vmatprep.subr.bf16.mxu0 0
        %1161 = vmatpush1.bf16.msra.mxu0 0
        %1162 = vmatprep.mubr.bf16.mxu0 0
        %1163 = vmatmul.mubr.bf16.gmra.mrb[0].mxu0 %v1107
        %v1164 = vpop.f32.mrb[0].mxu0
        %v1165 = vadd.f32 0.0, %v1164
        %v1166 = vpop.f32.mrb[0].mxu0
        %v1167 = vadd.f32 0.0, %v1166
        %v1168 = vpop.f32.mrb[0].mxu0
        %v1169 = vadd.f32 0.0, %v1168
        %v1170 = vpop.f32.mrb[0].mxu0
        %v1171 = vadd.f32 0.0, %v1170
        %1172 = vmatprep.mubr.bf16.mxu0 0
        %1173 = vmatmul.mubr.bf16.gmra.mrb[0].mxu0 %v1110
        %v1174 = vpop.f32.mrb[0].mxu0
        %v1175 = vadd.f32 0.0, %v1174
        %v1176 = vpop.f32.mrb[0].mxu0
        %v1177 = vadd.f32 0.0, %v1176
        %v1178 = vpop.f32.mrb[0].mxu0
        %v1179 = vadd.f32 0.0, %v1178
        %v1180 = vpop.f32.mrb[0].mxu0
        %v1181 = vadd.f32 0.0, %v1180
        %1182 = vmatprep.mubr.bf16.mxu0 0
        %1183 = vmatmul.mubr.bf16.gmra.mrb[0].mxu0 %v1113
        %v1184 = vpop.f32.mrb[0].mxu0
        %v1185 = vadd.f32 0.0, %v1184
        %v1186 = vpop.f32.mrb[0].mxu0
        %v1187 = vadd.f32 0.0, %v1186
        %v1188 = vpop.f32.mrb[0].mxu0
        %v1189 = vadd.f32 0.0, %v1188
        %v1190 = vpop.f32.mrb[0].mxu0
        %v1191 = vadd.f32 0.0, %v1190
        %1192 = vmatprep.mubr.bf16.mxu0 0
        %1193 = vmatmul.mubr.bf16.gmra.mrb[0].mxu0 %v1116
        %v1194 = vpop.f32.mrb[0].mxu0
        %v1195 = vadd.f32 0.0, %v1194
        %v1196 = vpop.f32.mrb[0].mxu0
        %v1197 = vadd.f32 0.0, %v1196
        %v1198 = vpop.f32.mrb[0].mxu0
        %v1199 = vadd.f32 0.0, %v1198
        %v1200 = vpop.f32.mrb[0].mxu0
        %v1201 = vadd.f32 0.0, %v1200
        %1202 = vmatprep.mubr.bf16.mxu0 0
        %1203 = vmatmul.mubr.bf16.gmra.mrb[0].mxu0 %v1119
        %v1204 = vpop.f32.mrb[0].mxu0
        %v1205 = vadd.f32 0.0, %v1204
        %v1206 = vpop.f32.mrb[0].mxu0
        %v1207 = vadd.f32 0.0, %v1206
        %v1208 = vpop.f32.mrb[0].mxu0
        %v1209 = vadd.f32 0.0, %v1208
        %v1210 = vpop.f32.mrb[0].mxu0
        %v1211 = vadd.f32 0.0, %v1210
        %1212 = vmatprep.mubr.bf16.mxu0 0
        %1213 = vmatmul.mubr.bf16.gmra.mrb[0].mxu0 %v1122
        %v1214 = vpop.f32.mrb[0].mxu0
        %v1215 = vadd.f32 0.0, %v1214
        %v1216 = vpop.f32.mrb[0].mxu0
        %v1217 = vadd.f32 0.0, %v1216
        %v1218 = vpop.f32.mrb[0].mxu0
        %v1219 = vadd.f32 0.0, %v1218
        %v1220 = vpop.f32.mrb[0].mxu0
        %v1221 = vadd.f32 0.0, %v1220
        %1222 = vmatprep.mubr.bf16.mxu0 0
        %1223 = vmatmul.mubr.bf16.gmra.mrb[0].mxu0 %v1125
        %v1224 = vpop.f32.mrb[0].mxu0
        %v1225 = vadd.f32 0.0, %v1224
        %v1226 = vpop.f32.mrb[0].mxu0
        %v1227 = vadd.f32 0.0, %v1226
        %v1228 = vpop.f32.mrb[0].mxu0
        %v1229 = vadd.f32 0.0, %v1228
        %v1230 = vpop.f32.mrb[0].mxu0
        %v1231 = vadd.f32 0.0, %v1230
        %1232 = vmatprep.mubr.bf16.mxu0 0
        %1233 = vmatmul.mubr.bf16.gmra.mrb[0].mxu0 %v1128
        %v1234 = vpop.f32.mrb[0].mxu0
        %v1235 = vadd.f32 0.0, %v1234
        %v1236 = vpop.f32.mrb[0].mxu0
        %v1237 = vadd.f32 0.0, %v1236
        %v1238 = vpop.f32.mrb[0].mxu0
        %v1239 = vadd.f32 0.0, %v1238
        %v1240 = vpop.f32.mrb[0].mxu0
        %v1241 = vadd.f32 0.0, %v1240
        %1242 = vdwg.mxu0
        %v1243 = vmax.f32 %v1165, %v1167
        %1244 = vmax.xlane.f32.xlu0 %v1243
        %v1245 = vpop.xlane.xlu0 %1244
        %v1246 = vmax.f32 %v1169, %v1171
        %1247 = vmax.xlane.f32.xlu0 %v1246
        %v1248 = vpop.xlane.xlu0 %1247
        %v1249 = vmax.f32 %v1175, %v1177
        %1250 = vmax.xlane.f32.xlu0 %v1249
        %v1251 = vpop.xlane.xlu0 %1250
        %v1252 = vmax.f32 %v1179, %v1181
        %1253 = vmax.xlane.f32.xlu0 %v1252
        %v1254 = vpop.xlane.xlu0 %1253
        %v1255 = vmax.f32 %v1185, %v1187
        %1256 = vmax.xlane.f32.xlu0 %v1255
        %v1257 = vpop.xlane.xlu0 %1256
        %v1258 = vmax.f32 %v1189, %v1191
        %1259 = vmax.xlane.f32.xlu0 %v1258
        %v1260 = vpop.xlane.xlu0 %1259
        %v1261 = vmax.f32 %v1195, %v1197
        %1262 = vmax.xlane.f32.xlu0 %v1261
        %v1263 = vpop.xlane.xlu0 %1262
        %v1264 = vmax.f32 %v1199, %v1201
        %1265 = vmax.xlane.f32.xlu0 %v1264
        %v1266 = vpop.xlane.xlu0 %1265
        %v1267 = vmax.f32 %v1205, %v1207
        %1268 = vmax.xlane.f32.xlu0 %v1267
        %v1269 = vpop.xlane.xlu0 %1268
        %v1270 = vmax.f32 %v1209, %v1211
        %1271 = vmax.xlane.f32.xlu0 %v1270
        %v1272 = vpop.xlane.xlu0 %1271
        %v1273 = vmax.f32 %v1215, %v1217
        %1274 = vmax.xlane.f32.xlu0 %v1273
        %v1275 = vpop.xlane.xlu0 %1274
        %v1276 = vmax.f32 %v1219, %v1221
        %1277 = vmax.xlane.f32.xlu0 %v1276
        %v1278 = vpop.xlane.xlu0 %1277
        %v1279 = vmax.f32 %v1225, %v1227
        %1280 = vmax.xlane.f32.xlu0 %v1279
        %v1281 = vpop.xlane.xlu0 %1280
        %v1282 = vmax.f32 %v1229, %v1231
        %1283 = vmax.xlane.f32.xlu0 %v1282
        %v1284 = vpop.xlane.xlu0 %1283
        %v1285 = vmax.f32 %v1235, %v1237
        %1286 = vmax.xlane.f32.xlu0 %v1285
        %v1287 = vpop.xlane.xlu0 %1286
        %v1288 = vmax.f32 %v1239, %v1241
        %1289 = vmax.xlane.f32.xlu0 %v1288
        %v1290 = vpop.xlane.xlu0 %1289
        %v1291 = vsub.f32 %v1165, %v1245
        %v1292 = vsub.f32 %v1167, %v1245
        %v1293 = vsub.f32 %v1169, %v1248
        %v1294 = vsub.f32 %v1171, %v1248
        %v1295 = vsub.f32 %v1175, %v1251
        %v1296 = vsub.f32 %v1177, %v1251
        %v1297 = vsub.f32 %v1179, %v1254
        %v1298 = vsub.f32 %v1181, %v1254
        %v1299 = vsub.f32 %v1185, %v1257
        %v1300 = vsub.f32 %v1187, %v1257
        %v1301 = vsub.f32 %v1189, %v1260
        %v1302 = vsub.f32 %v1191, %v1260
        %v1303 = vsub.f32 %v1195, %v1263
        %v1304 = vsub.f32 %v1197, %v1263
        %v1305 = vsub.f32 %v1199, %v1266
        %v1306 = vsub.f32 %v1201, %v1266
        %v1307 = vsub.f32 %v1205, %v1269
        %v1308 = vsub.f32 %v1207, %v1269
        %v1309 = vsub.f32 %v1209, %v1272
        %v1310 = vsub.f32 %v1211, %v1272
        %v1311 = vsub.f32 %v1215, %v1275
        %v1312 = vsub.f32 %v1217, %v1275
        %v1313 = vsub.f32 %v1219, %v1278
        %v1314 = vsub.f32 %v1221, %v1278
        %v1315 = vsub.f32 %v1225, %v1281
        %v1316 = vsub.f32 %v1227, %v1281
        %v1317 = vsub.f32 %v1229, %v1284
        %v1318 = vsub.f32 %v1231, %v1284
        %v1319 = vsub.f32 %v1235, %v1287
        %v1320 = vsub.f32 %v1237, %v1287
        %v1321 = vsub.f32 %v1239, %v1290
        %v1322 = vsub.f32 %v1241, %v1290
        %v1323 = vmul.f32 %v1291, 1.442695
        %v1324 = vpow.pop %v1323
        %v1325 = vmul.f32 %v1292, 1.442695
        %v1326 = vpow.pop %v1325
        %v1327 = vmul.f32 %v1293, 1.442695
        %v1328 = vpow.pop %v1327
        %v1329 = vmul.f32 %v1294, 1.442695
        %v1330 = vpow.pop %v1329
        %v1331 = vmul.f32 %v1295, 1.442695
        %v1332 = vpow.pop %v1331
        %v1333 = vmul.f32 %v1296, 1.442695
        %v1334 = vpow.pop %v1333
        %v1335 = vmul.f32 %v1297, 1.442695
        %v1336 = vpow.pop %v1335
        %v1337 = vmul.f32 %v1298, 1.442695
        %v1338 = vpow.pop %v1337
        %v1339 = vmul.f32 %v1299, 1.442695
        %v1340 = vpow.pop %v1339
        %v1341 = vmul.f32 %v1300, 1.442695
        %v1342 = vpow.pop %v1341
        %v1343 = vmul.f32 %v1301, 1.442695
        %v1344 = vpow.pop %v1343
        %v1345 = vmul.f32 %v1302, 1.442695
        %v1346 = vpow.pop %v1345
        %v1347 = vmul.f32 %v1303, 1.442695
        %v1348 = vpow.pop %v1347
        %v1349 = vmul.f32 %v1304, 1.442695
        %v1350 = vpow.pop %v1349
        %v1351 = vmul.f32 %v1305, 1.442695
        %v1352 = vpow.pop %v1351
        %v1353 = vmul.f32 %v1306, 1.442695
        %v1354 = vpow.pop %v1353
        %v1355 = vmul.f32 %v1307, 1.442695
        %v1356 = vpow.pop %v1355
        %v1357 = vmul.f32 %v1308, 1.442695
        %v1358 = vpow.pop %v1357
        %v1359 = vmul.f32 %v1309, 1.442695
        %v1360 = vpow.pop %v1359
        %v1361 = vmul.f32 %v1310, 1.442695
        %v1362 = vpow.pop %v1361
        %v1363 = vmul.f32 %v1311, 1.442695
        %v1364 = vpow.pop %v1363
        %v1365 = vmul.f32 %v1312, 1.442695
        %v1366 = vpow.pop %v1365
        %v1367 = vmul.f32 %v1313, 1.442695
        %v1368 = vpow.pop %v1367
        %v1369 = vmul.f32 %v1314, 1.442695
        %v1370 = vpow.pop %v1369
        %v1371 = vmul.f32 %v1315, 1.442695
        %v1372 = vpow.pop %v1371
        %v1373 = vmul.f32 %v1316, 1.442695
        %v1374 = vpow.pop %v1373
        %v1375 = vmul.f32 %v1317, 1.442695
        %v1376 = vpow.pop %v1375
        %v1377 = vmul.f32 %v1318, 1.442695
        %v1378 = vpow.pop %v1377
        %v1379 = vmul.f32 %v1319, 1.442695
        %v1380 = vpow.pop %v1379
        %v1381 = vmul.f32 %v1320, 1.442695
        %v1382 = vpow.pop %v1381
        %v1383 = vmul.f32 %v1321, 1.442695
        %v1384 = vpow.pop %v1383
        %v1385 = vmul.f32 %v1322, 1.442695
        %v1386 = vpow.pop %v1385
        %v1387 = vpack.c.bf16 %v1328, %v1324
        %v1388 = vpack.c.bf16 %v1330, %v1326
        %v1389 = vpack.c.bf16 %v1336, %v1332
        %v1390 = vpack.c.bf16 %v1338, %v1334
        %v1391 = vpack.c.bf16 %v1344, %v1340
        %v1392 = vpack.c.bf16 %v1346, %v1342
        %v1393 = vpack.c.bf16 %v1352, %v1348
        %v1394 = vpack.c.bf16 %v1354, %v1350
        %v1395 = vpack.c.bf16 %v1360, %v1356
        %v1396 = vpack.c.bf16 %v1362, %v1358
        %v1397 = vpack.c.bf16 %v1368, %v1364
        %v1398 = vpack.c.bf16 %v1370, %v1366
        %v1399 = vpack.c.bf16 %v1376, %v1372
        %v1400 = vpack.c.bf16 %v1378, %v1374
        %v1401 = vpack.c.bf16 %v1384, %v1380
        %v1402 = vpack.c.bf16 %v1386, %v1382
        %1403 = vmatprep.subr.bf16.mxu0 %v1388
        %1404 = vmatpush1.bf16.xpose.msra.mxu0 %v1387
        %1405 = vmatprep.subr.bf16.mxu0 %v1390
        %1406 = vmatpush1.bf16.xpose.msra.mxu0 %v1389
        %1407 = vmatprep.subr.bf16.mxu0 %v1392
        %1408 = vmatpush1.bf16.xpose.msra.mxu0 %v1391
        %1409 = vmatprep.subr.bf16.mxu0 %v1394
        %1410 = vmatpush1.bf16.xpose.msra.mxu0 %v1393
        %1411 = vmatprep.subr.bf16.mxu0 %v1396
        %1412 = vmatpush1.bf16.xpose.msra.mxu0 %v1395
        %1413 = vmatprep.subr.bf16.mxu0 %v1398
        %1414 = vmatpush1.bf16.xpose.msra.mxu0 %v1397
        %1415 = vmatprep.subr.bf16.mxu0 %v1400
        %1416 = vmatpush1.bf16.xpose.msra.mxu0 %v1399
        %1417 = vmatprep.subr.bf16.mxu0 %v1402
        %1418 = vmatpush1.bf16.xpose.msra.mxu0 %v1401
        %1419 = vmatprep.subr.bf16.mxu0 0
        %1420 = vmatpush1.bf16.xpose.msra.mxu0 0
        %1421 = vmatprep.subr.bf16.mxu0 0
        %1422 = vmatpush1.bf16.xpose.msra.mxu0 0
        %1423 = vmatprep.subr.bf16.mxu0 0
        %1424 = vmatpush1.bf16.xpose.msra.mxu0 0
        %1425 = vmatprep.subr.bf16.mxu0 0
        %1426 = vmatpush1.bf16.xpose.msra.mxu0 0
        %1427 = vmatprep.subr.bf16.mxu0 0
        %1428 = vmatpush1.bf16.xpose.msra.mxu0 0
        %1429 = vmatprep.subr.bf16.mxu0 0
        %1430 = vmatpush1.bf16.xpose.msra.mxu0 0
        %1431 = vmatprep.subr.bf16.mxu0 0
        %1432 = vmatpush1.bf16.xpose.msra.mxu0 0
        %1433 = vmatprep.subr.bf16.mxu0 0
        %1434 = vmatpush1.bf16.xpose.msra.mxu0 0
        %1435 = vmatprep.mubr.bf16.mxu0 1065369472
        %1436 = vmatmul.mubr.bf16.gmra.mrb[0].mxu0 1065369472
        %v1437 = vpop.f32.mrb[0].mxu0
        %v1438 = vadd.f32 0.0, %v1437
        %v1439 = vpop.f32.mrb[0].mxu0
        %v1440 = vpop.f32.mrb[0].mxu0
        %v1441 = vpop.f32.mrb[0].mxu0
        %1442 = vdwg.mxu0
        %1443 = vmatprep.subr.bf16.mxu0 %v1388
        %1444 = vmatpush1.bf16.xpose.msra.mxu0 %v1387
        %1445 = vmatprep.subr.bf16.mxu0 %v1390
        %1446 = vmatpush1.bf16.xpose.msra.mxu0 %v1389
        %1447 = vmatprep.subr.bf16.mxu0 %v1392
        %1448 = vmatpush1.bf16.xpose.msra.mxu0 %v1391
        %1449 = vmatprep.subr.bf16.mxu0 %v1394
        %1450 = vmatpush1.bf16.xpose.msra.mxu0 %v1393
        %1451 = vmatprep.subr.bf16.mxu0 %v1396
        %1452 = vmatpush1.bf16.xpose.msra.mxu0 %v1395
        %1453 = vmatprep.subr.bf16.mxu0 %v1398
        %1454 = vmatpush1.bf16.xpose.msra.mxu0 %v1397
        %1455 = vmatprep.subr.bf16.mxu0 %v1400
        %1456 = vmatpush1.bf16.xpose.msra.mxu0 %v1399
        %1457 = vmatprep.subr.bf16.mxu0 %v1402
        %1458 = vmatpush1.bf16.xpose.msra.mxu0 %v1401
        %1459 = vmatprep.subr.bf16.mxu0 0
        %1460 = vmatpush1.bf16.xpose.msra.mxu0 0
        %1461 = vmatprep.subr.bf16.mxu0 0
        %1462 = vmatpush1.bf16.xpose.msra.mxu0 0
        %1463 = vmatprep.subr.bf16.mxu0 0
        %1464 = vmatpush1.bf16.xpose.msra.mxu0 0
        %1465 = vmatprep.subr.bf16.mxu0 0
        %1466 = vmatpush1.bf16.xpose.msra.mxu0 0
        %1467 = vmatprep.subr.bf16.mxu0 0
        %1468 = vmatpush1.bf16.xpose.msra.mxu0 0
        %1469 = vmatprep.subr.bf16.mxu0 0
        %1470 = vmatpush1.bf16.xpose.msra.mxu0 0
        %1471 = vmatprep.subr.bf16.mxu0 0
        %1472 = vmatpush1.bf16.xpose.msra.mxu0 0
        %1473 = vmatprep.subr.bf16.mxu0 0
        %1474 = vmatpush1.bf16.xpose.msra.mxu0 0
        %1475 = vmatprep.mubr.bf16.mxu0 %v1074
        %1476 = vmatmul.mubr.bf16.gmra.mrb[0].mxu0 %v1073
        %v1477 = vpop.f32.mrb[0].mxu0
        %v1478 = vadd.f32 0.0, %v1477
        %v1479 = vpop.f32.mrb[0].mxu0
        %v1480 = vpop.f32.mrb[0].mxu0
        %v1481 = vadd.f32 0.0, %v1480
        %v1482 = vpop.f32.mrb[0].mxu0
        %1483 = vdwg.mxu0
        %v1484 = vrcp.pop %v1438
        %v1485 = vlaneseq
        %v1486 = vshrl.u32 %v1485, 7
        %v1487 = vsub.s32 0, %v1486
        %v1488 = vrot.slane %v1484, %v1487
        %v1489 = vmul.f32 %v1478, %v1488
        %v1490 = vmul.f32 %v1481, %v1488
        %v1491 = vpack.c.bf16 %v1490, %v1489
        %1492 = vxpose.xlu0.c.b16.start [1/8] %v633, 128
        %1493 = vxpose.xlu0.c.b16.cont [2/8] 0, 128
        %1494 = vxpose.xlu0.c.b16.cont [3/8] 0, 128
        %1495 = vxpose.xlu0.c.b16.cont [4/8] 0, 128
        %1496 = vxpose.xlu0.c.b16.cont [5/8] 0, 128
        %1497 = vxpose.xlu0.c.b16.cont [6/8] 0, 128
        %1498 = vxpose.xlu0.c.b16.cont [7/8] 0, 128
        %1499 = vxpose.xlu0.c.b16.end [8/8] 0, 128
        %v1500 = vpop.trf.xlu0
        %v1501 = vpop.trf.xlu0
        %v1502 = vpop.trf.xlu0
        %v1503 = vpop.trf.xlu0
        %v1504 = vpop.trf.xlu0
        %v1505 = vpop.trf.xlu0
        %v1506 = vpop.trf.xlu0
        %v1507 = vpop.trf.xlu0
        %v1509 = vsel %vm1105, %v1500, 0
        %v1512 = vsel %vm1105, %v1501, 0
        %v1515 = vsel %vm1105, %v1502, 0
        %v1518 = vsel %vm1105, %v1503, 0
        %v1521 = vsel %vm1105, %v1504, 0
        %v1524 = vsel %vm1105, %v1505, 0
        %v1527 = vsel %vm1105, %v1506, 0
        %v1530 = vsel %vm1105, %v1507, 0
        %1532 = vmatprep.subr.bf16.mxu0 %v1060
        %1533 = vmatpush1.bf16.msra.mxu0 %v1059
        %1534 = vmatprep.subr.bf16.mxu0 0
        %1535 = vmatpush1.bf16.msra.mxu0 0
        %1536 = vmatprep.subr.bf16.mxu0 0
        %1537 = vmatpush1.bf16.msra.mxu0 0
        %1538 = vmatprep.subr.bf16.mxu0 0
        %1539 = vmatpush1.bf16.msra.mxu0 0
        %1540 = vmatprep.subr.bf16.mxu0 0
        %1541 = vmatpush1.bf16.msra.mxu0 0
        %1542 = vmatprep.subr.bf16.mxu0 0
        %1543 = vmatpush1.bf16.msra.mxu0 0
        %1544 = vmatprep.subr.bf16.mxu0 0
        %1545 = vmatpush1.bf16.msra.mxu0 0
        %1546 = vmatprep.subr.bf16.mxu0 0
        %1547 = vmatpush1.bf16.msra.mxu0 0
        %1548 = vmatprep.subr.bf16.mxu0 0
        %1549 = vmatpush1.bf16.msra.mxu0 0
        %1550 = vmatprep.subr.bf16.mxu0 0
        %1551 = vmatpush1.bf16.msra.mxu0 0
        %1552 = vmatprep.subr.bf16.mxu0 0
        %1553 = vmatpush1.bf16.msra.mxu0 0
        %1554 = vmatprep.subr.bf16.mxu0 0
        %1555 = vmatpush1.bf16.msra.mxu0 0
        %1556 = vmatprep.subr.bf16.mxu0 0
        %1557 = vmatpush1.bf16.msra.mxu0 0
        %1558 = vmatprep.subr.bf16.mxu0 0
        %1559 = vmatpush1.bf16.msra.mxu0 0
        %1560 = vmatprep.subr.bf16.mxu0 0
        %1561 = vmatpush1.bf16.msra.mxu0 0
        %1562 = vmatprep.subr.bf16.mxu0 0
        %1563 = vmatpush1.bf16.msra.mxu0 0
        %1564 = vmatprep.mubr.bf16.mxu0 0
        %1565 = vmatmul.mubr.bf16.gmra.mrb[0].mxu0 %v1509
        %v1566 = vpop.f32.mrb[0].mxu0
        %v1567 = vadd.f32 0.0, %v1566
        %v1568 = vpop.f32.mrb[0].mxu0
        %v1569 = vadd.f32 0.0, %v1568
        %v1570 = vpop.f32.mrb[0].mxu0
        %v1571 = vadd.f32 0.0, %v1570
        %v1572 = vpop.f32.mrb[0].mxu0
        %v1573 = vadd.f32 0.0, %v1572
        %1574 = vmatprep.mubr.bf16.mxu0 0
        %1575 = vmatmul.mubr.bf16.gmra.mrb[0].mxu0 %v1512
        %v1576 = vpop.f32.mrb[0].mxu0
        %v1577 = vadd.f32 0.0, %v1576
        %v1578 = vpop.f32.mrb[0].mxu0
        %v1579 = vadd.f32 0.0, %v1578
        %v1580 = vpop.f32.mrb[0].mxu0
        %v1581 = vadd.f32 0.0, %v1580
        %v1582 = vpop.f32.mrb[0].mxu0
        %v1583 = vadd.f32 0.0, %v1582
        %1584 = vmatprep.mubr.bf16.mxu0 0
        %1585 = vmatmul.mubr.bf16.gmra.mrb[0].mxu0 %v1515
        %v1586 = vpop.f32.mrb[0].mxu0
        %v1587 = vadd.f32 0.0, %v1586
        %v1588 = vpop.f32.mrb[0].mxu0
        %v1589 = vadd.f32 0.0, %v1588
        %v1590 = vpop.f32.mrb[0].mxu0
        %v1591 = vadd.f32 0.0, %v1590
        %v1592 = vpop.f32.mrb[0].mxu0
        %v1593 = vadd.f32 0.0, %v1592
        %1594 = vmatprep.mubr.bf16.mxu0 0
        %1595 = vmatmul.mubr.bf16.gmra.mrb[0].mxu0 %v1518
        %v1596 = vpop.f32.mrb[0].mxu0
        %v1597 = vadd.f32 0.0, %v1596
        %v1598 = vpop.f32.mrb[0].mxu0
        %v1599 = vadd.f32 0.0, %v1598
        %v1600 = vpop.f32.mrb[0].mxu0
        %v1601 = vadd.f32 0.0, %v1600
        %v1602 = vpop.f32.mrb[0].mxu0
        %v1603 = vadd.f32 0.0, %v1602
        %1604 = vmatprep.mubr.bf16.mxu0 0
        %1605 = vmatmul.mubr.bf16.gmra.mrb[0].mxu0 %v1521
        %v1606 = vpop.f32.mrb[0].mxu0
        %v1607 = vadd.f32 0.0, %v1606
        %v1608 = vpop.f32.mrb[0].mxu0
        %v1609 = vadd.f32 0.0, %v1608
        %v1610 = vpop.f32.mrb[0].mxu0
        %v1611 = vadd.f32 0.0, %v1610
        %v1612 = vpop.f32.mrb[0].mxu0
        %v1613 = vadd.f32 0.0, %v1612
        %1614 = vmatprep.mubr.bf16.mxu0 0
        %1615 = vmatmul.mubr.bf16.gmra.mrb[0].mxu0 %v1524
        %v1616 = vpop.f32.mrb[0].mxu0
        %v1617 = vadd.f32 0.0, %v1616
        %v1618 = vpop.f32.mrb[0].mxu0
        %v1619 = vadd.f32 0.0, %v1618
        %v1620 = vpop.f32.mrb[0].mxu0
        %v1621 = vadd.f32 0.0, %v1620
        %v1622 = vpop.f32.mrb[0].mxu0
        %v1623 = vadd.f32 0.0, %v1622
        %1624 = vmatprep.mubr.bf16.mxu0 0
        %1625 = vmatmul.mubr.bf16.gmra.mrb[0].mxu0 %v1527
        %v1626 = vpop.f32.mrb[0].mxu0
        %v1627 = vadd.f32 0.0, %v1626
        %v1628 = vpop.f32.mrb[0].mxu0
        %v1629 = vadd.f32 0.0, %v1628
        %v1630 = vpop.f32.mrb[0].mxu0
        %v1631 = vadd.f32 0.0, %v1630
        %v1632 = vpop.f32.mrb[0].mxu0
        %v1633 = vadd.f32 0.0, %v1632
        %1634 = vmatprep.mubr.bf16.mxu0 0
        %1635 = vmatmul.mubr.bf16.gmra.mrb[0].mxu0 %v1530
        %v1636 = vpop.f32.mrb[0].mxu0
        %v1637 = vadd.f32 0.0, %v1636
        %v1638 = vpop.f32.mrb[0].mxu0
        %v1639 = vadd.f32 0.0, %v1638
        %v1640 = vpop.f32.mrb[0].mxu0
        %v1641 = vadd.f32 0.0, %v1640
        %v1642 = vpop.f32.mrb[0].mxu0
        %v1643 = vadd.f32 0.0, %v1642
        %1644 = vdwg.mxu0
        %v1645 = vmax.f32 %v1567, %v1569
        %1646 = vmax.xlane.f32.xlu0 %v1645
        %v1647 = vpop.xlane.xlu0 %1646
        %v1648 = vmax.f32 %v1571, %v1573
        %1649 = vmax.xlane.f32.xlu0 %v1648
        %v1650 = vpop.xlane.xlu0 %1649
        %v1651 = vmax.f32 %v1577, %v1579
        %1652 = vmax.xlane.f32.xlu0 %v1651
        %v1653 = vpop.xlane.xlu0 %1652
        %v1654 = vmax.f32 %v1581, %v1583
        %1655 = vmax.xlane.f32.xlu0 %v1654
        %v1656 = vpop.xlane.xlu0 %1655
        %v1657 = vmax.f32 %v1587, %v1589
        %1658 = vmax.xlane.f32.xlu0 %v1657
        %v1659 = vpop.xlane.xlu0 %1658
        %v1660 = vmax.f32 %v1591, %v1593
        %1661 = vmax.xlane.f32.xlu0 %v1660
        %v1662 = vpop.xlane.xlu0 %1661
        %v1663 = vmax.f32 %v1597, %v1599
        %1664 = vmax.xlane.f32.xlu0 %v1663
        %v1665 = vpop.xlane.xlu0 %1664
        %v1666 = vmax.f32 %v1601, %v1603
        %1667 = vmax.xlane.f32.xlu0 %v1666
        %v1668 = vpop.xlane.xlu0 %1667
        %v1669 = vmax.f32 %v1607, %v1609
        %1670 = vmax.xlane.f32.xlu0 %v1669
        %v1671 = vpop.xlane.xlu0 %1670
        %v1672 = vmax.f32 %v1611, %v1613
        %1673 = vmax.xlane.f32.xlu0 %v1672
        %v1674 = vpop.xlane.xlu0 %1673
        %v1675 = vmax.f32 %v1617, %v1619
        %1676 = vmax.xlane.f32.xlu0 %v1675
        %v1677 = vpop.xlane.xlu0 %1676
        %v1678 = vmax.f32 %v1621, %v1623
        %1679 = vmax.xlane.f32.xlu0 %v1678
        %v1680 = vpop.xlane.xlu0 %1679
        %v1681 = vmax.f32 %v1627, %v1629
        %1682 = vmax.xlane.f32.xlu0 %v1681
        %v1683 = vpop.xlane.xlu0 %1682
        %v1684 = vmax.f32 %v1631, %v1633
        %1685 = vmax.xlane.f32.xlu0 %v1684
        %v1686 = vpop.xlane.xlu0 %1685
        %v1687 = vmax.f32 %v1637, %v1639
        %1688 = vmax.xlane.f32.xlu0 %v1687
        %v1689 = vpop.xlane.xlu0 %1688
        %v1690 = vmax.f32 %v1641, %v1643
        %1691 = vmax.xlane.f32.xlu0 %v1690
        %v1692 = vpop.xlane.xlu0 %1691
        %v1693 = vsub.f32 %v1567, %v1647
        %v1694 = vsub.f32 %v1569, %v1647
        %v1695 = vsub.f32 %v1571, %v1650
        %v1696 = vsub.f32 %v1573, %v1650
        %v1697 = vsub.f32 %v1577, %v1653
        %v1698 = vsub.f32 %v1579, %v1653
        %v1699 = vsub.f32 %v1581, %v1656
        %v1700 = vsub.f32 %v1583, %v1656
        %v1701 = vsub.f32 %v1587, %v1659
        %v1702 = vsub.f32 %v1589, %v1659
        %v1703 = vsub.f32 %v1591, %v1662
        %v1704 = vsub.f32 %v1593, %v1662
        %v1705 = vsub.f32 %v1597, %v1665
        %v1706 = vsub.f32 %v1599, %v1665
        %v1707 = vsub.f32 %v1601, %v1668
        %v1708 = vsub.f32 %v1603, %v1668
        %v1709 = vsub.f32 %v1607, %v1671
        %v1710 = vsub.f32 %v1609, %v1671
        %v1711 = vsub.f32 %v1611, %v1674
        %v1712 = vsub.f32 %v1613, %v1674
        %v1713 = vsub.f32 %v1617, %v1677
        %v1714 = vsub.f32 %v1619, %v1677
        %v1715 = vsub.f32 %v1621, %v1680
        %v1716 = vsub.f32 %v1623, %v1680
        %v1717 = vsub.f32 %v1627, %v1683
        %v1718 = vsub.f32 %v1629, %v1683
        %v1719 = vsub.f32 %v1631, %v1686
        %v1720 = vsub.f32 %v1633, %v1686
        %v1721 = vsub.f32 %v1637, %v1689
        %v1722 = vsub.f32 %v1639, %v1689
        %v1723 = vsub.f32 %v1641, %v1692
        %v1724 = vsub.f32 %v1643, %v1692
        %v1725 = vmul.f32 %v1693, 1.442695
        %v1726 = vpow.pop %v1725
        %v1727 = vmul.f32 %v1694, 1.442695
        %v1728 = vpow.pop %v1727
        %v1729 = vmul.f32 %v1695, 1.442695
        %v1730 = vpow.pop %v1729
        %v1731 = vmul.f32 %v1696, 1.442695
        %v1732 = vpow.pop %v1731
        %v1733 = vmul.f32 %v1697, 1.442695
        %v1734 = vpow.pop %v1733
        %v1735 = vmul.f32 %v1698, 1.442695
        %v1736 = vpow.pop %v1735
        %v1737 = vmul.f32 %v1699, 1.442695
        %v1738 = vpow.pop %v1737
        %v1739 = vmul.f32 %v1700, 1.442695
        %v1740 = vpow.pop %v1739
        %v1741 = vmul.f32 %v1701, 1.442695
        %v1742 = vpow.pop %v1741
        %v1743 = vmul.f32 %v1702, 1.442695
        %v1744 = vpow.pop %v1743
        %v1745 = vmul.f32 %v1703, 1.442695
        %v1746 = vpow.pop %v1745
        %v1747 = vmul.f32 %v1704, 1.442695
        %v1748 = vpow.pop %v1747
        %v1749 = vmul.f32 %v1705, 1.442695
        %v1750 = vpow.pop %v1749
        %v1751 = vmul.f32 %v1706, 1.442695
        %v1752 = vpow.pop %v1751
        %v1753 = vmul.f32 %v1707, 1.442695
        %v1754 = vpow.pop %v1753
        %v1755 = vmul.f32 %v1708, 1.442695
        %v1756 = vpow.pop %v1755
        %v1757 = vmul.f32 %v1709, 1.442695
        %v1758 = vpow.pop %v1757
        %v1759 = vmul.f32 %v1710, 1.442695
        %v1760 = vpow.pop %v1759
        %v1761 = vmul.f32 %v1711, 1.442695
        %v1762 = vpow.pop %v1761
        %v1763 = vmul.f32 %v1712, 1.442695
        %v1764 = vpow.pop %v1763
        %v1765 = vmul.f32 %v1713, 1.442695
        %v1766 = vpow.pop %v1765
        %v1767 = vmul.f32 %v1714, 1.442695
        %v1768 = vpow.pop %v1767
        %v1769 = vmul.f32 %v1715, 1.442695
        %v1770 = vpow.pop %v1769
        %v1771 = vmul.f32 %v1716, 1.442695
        %v1772 = vpow.pop %v1771
        %v1773 = vmul.f32 %v1717, 1.442695
        %v1774 = vpow.pop %v1773
        %v1775 = vmul.f32 %v1718, 1.442695
        %v1776 = vpow.pop %v1775
        %v1777 = vmul.f32 %v1719, 1.442695
        %v1778 = vpow.pop %v1777
        %v1779 = vmul.f32 %v1720, 1.442695
        %v1780 = vpow.pop %v1779
        %v1781 = vmul.f32 %v1721, 1.442695
        %v1782 = vpow.pop %v1781
        %v1783 = vmul.f32 %v1722, 1.442695
        %v1784 = vpow.pop %v1783
        %v1785 = vmul.f32 %v1723, 1.442695
        %v1786 = vpow.pop %v1785
        %v1787 = vmul.f32 %v1724, 1.442695
        %v1788 = vpow.pop %v1787
        %v1789 = vpack.c.bf16 %v1730, %v1726
        %v1790 = vpack.c.bf16 %v1732, %v1728
        %v1791 = vpack.c.bf16 %v1738, %v1734
        %v1792 = vpack.c.bf16 %v1740, %v1736
        %v1793 = vpack.c.bf16 %v1746, %v1742
        %v1794 = vpack.c.bf16 %v1748, %v1744
        %v1795 = vpack.c.bf16 %v1754, %v1750
        %v1796 = vpack.c.bf16 %v1756, %v1752
        %v1797 = vpack.c.bf16 %v1762, %v1758
        %v1798 = vpack.c.bf16 %v1764, %v1760
        %v1799 = vpack.c.bf16 %v1770, %v1766
        %v1800 = vpack.c.bf16 %v1772, %v1768
        %v1801 = vpack.c.bf16 %v1778, %v1774
        %v1802 = vpack.c.bf16 %v1780, %v1776
        %v1803 = vpack.c.bf16 %v1786, %v1782
        %v1804 = vpack.c.bf16 %v1788, %v1784
        %1805 = vmatprep.subr.bf16.mxu0 %v1790
        %1806 = vmatpush1.bf16.xpose.msra.mxu0 %v1789
        %1807 = vmatprep.subr.bf16.mxu0 %v1792
        %1808 = vmatpush1.bf16.xpose.msra.mxu0 %v1791
        %1809 = vmatprep.subr.bf16.mxu0 %v1794
        %1810 = vmatpush1.bf16.xpose.msra.mxu0 %v1793
        %1811 = vmatprep.subr.bf16.mxu0 %v1796
        %1812 = vmatpush1.bf16.xpose.msra.mxu0 %v1795
        %1813 = vmatprep.subr.bf16.mxu0 %v1798
        %1814 = vmatpush1.bf16.xpose.msra.mxu0 %v1797
        %1815 = vmatprep.subr.bf16.mxu0 %v1800
        %1816 = vmatpush1.bf16.xpose.msra.mxu0 %v1799
        %1817 = vmatprep.subr.bf16.mxu0 %v1802
        %1818 = vmatpush1.bf16.xpose.msra.mxu0 %v1801
        %1819 = vmatprep.subr.bf16.mxu0 %v1804
        %1820 = vmatpush1.bf16.xpose.msra.mxu0 %v1803
        %1821 = vmatprep.subr.bf16.mxu0 0
        %1822 = vmatpush1.bf16.xpose.msra.mxu0 0
        %1823 = vmatprep.subr.bf16.mxu0 0
        %1824 = vmatpush1.bf16.xpose.msra.mxu0 0
        %1825 = vmatprep.subr.bf16.mxu0 0
        %1826 = vmatpush1.bf16.xpose.msra.mxu0 0
        %1827 = vmatprep.subr.bf16.mxu0 0
        %1828 = vmatpush1.bf16.xpose.msra.mxu0 0
        %1829 = vmatprep.subr.bf16.mxu0 0
        %1830 = vmatpush1.bf16.xpose.msra.mxu0 0
        %1831 = vmatprep.subr.bf16.mxu0 0
        %1832 = vmatpush1.bf16.xpose.msra.mxu0 0
        %1833 = vmatprep.subr.bf16.mxu0 0
        %1834 = vmatpush1.bf16.xpose.msra.mxu0 0
        %1835 = vmatprep.subr.bf16.mxu0 0
        %1836 = vmatpush1.bf16.xpose.msra.mxu0 0
        %1837 = vmatprep.mubr.bf16.mxu0 1065369472
        %1838 = vmatmul.mubr.bf16.gmra.mrb[0].mxu0 1065369472
        %v1839 = vpop.f32.mrb[0].mxu0
        %v1840 = vadd.f32 0.0, %v1839
        %v1841 = vpop.f32.mrb[0].mxu0
        %v1842 = vpop.f32.mrb[0].mxu0
        %v1843 = vpop.f32.mrb[0].mxu0
        %1844 = vdwg.mxu0
        %1845 = vmatprep.subr.bf16.mxu0 %v1790
        %1846 = vmatpush1.bf16.xpose.msra.mxu0 %v1789
        %1847 = vmatprep.subr.bf16.mxu0 %v1792
        %1848 = vmatpush1.bf16.xpose.msra.mxu0 %v1791
        %1849 = vmatprep.subr.bf16.mxu0 %v1794
        %1850 = vmatpush1.bf16.xpose.msra.mxu0 %v1793
        %1851 = vmatprep.subr.bf16.mxu0 %v1796
        %1852 = vmatpush1.bf16.xpose.msra.mxu0 %v1795
        %1853 = vmatprep.subr.bf16.mxu0 %v1798
        %1854 = vmatpush1.bf16.xpose.msra.mxu0 %v1797
        %1855 = vmatprep.subr.bf16.mxu0 %v1800
        %1856 = vmatpush1.bf16.xpose.msra.mxu0 %v1799
        %1857 = vmatprep.subr.bf16.mxu0 %v1802
        %1858 = vmatpush1.bf16.xpose.msra.mxu0 %v1801
        %1859 = vmatprep.subr.bf16.mxu0 %v1804
        %1860 = vmatpush1.bf16.xpose.msra.mxu0 %v1803
        %1861 = vmatprep.subr.bf16.mxu0 0
        %1862 = vmatpush1.bf16.xpose.msra.mxu0 0
        %1863 = vmatprep.subr.bf16.mxu0 0
        %1864 = vmatpush1.bf16.xpose.msra.mxu0 0
        %1865 = vmatprep.subr.bf16.mxu0 0
        %1866 = vmatpush1.bf16.xpose.msra.mxu0 0
        %1867 = vmatprep.subr.bf16.mxu0 0
        %1868 = vmatpush1.bf16.xpose.msra.mxu0 0
        %1869 = vmatprep.subr.bf16.mxu0 0
        %1870 = vmatpush1.bf16.xpose.msra.mxu0 0
        %1871 = vmatprep.subr.bf16.mxu0 0
        %1872 = vmatpush1.bf16.xpose.msra.mxu0 0
        %1873 = vmatprep.subr.bf16.mxu0 0
        %1874 = vmatpush1.bf16.xpose.msra.mxu0 0
        %1875 = vmatprep.subr.bf16.mxu0 0
        %1876 = vmatpush1.bf16.xpose.msra.mxu0 0
        %1877 = vmatprep.mubr.bf16.mxu0 %v1076
        %1878 = vmatmul.mubr.bf16.gmra.mrb[0].mxu0 %v1075
        %v1879 = vpop.f32.mrb[0].mxu0
        %v1880 = vadd.f32 0.0, %v1879
        %v1881 = vpop.f32.mrb[0].mxu0
        %v1882 = vpop.f32.mrb[0].mxu0
        %v1883 = vadd.f32 0.0, %v1882
        %v1884 = vpop.f32.mrb[0].mxu0
        %1885 = vdwg.mxu0
        %v1886 = vrcp.pop %v1840
        %v1887 = vlaneseq
        %v1888 = vshrl.u32 %v1887, 7
        %v1889 = vsub.s32 0, %v1888
        %v1890 = vrot.slane %v1886, %v1889
        %v1891 = vmul.f32 %v1880, %v1890
        %v1892 = vmul.f32 %v1883, %v1890
        %v1893 = vpack.c.bf16 %v1892, %v1891
        %1894 = vxpose.xlu0.c.b16.start [1/8] %v634, 128
        %1895 = vxpose.xlu0.c.b16.cont [2/8] 0, 128
        %1896 = vxpose.xlu0.c.b16.cont [3/8] 0, 128
        %1897 = vxpose.xlu0.c.b16.cont [4/8] 0, 128
        %1898 = vxpose.xlu0.c.b16.cont [5/8] 0, 128
        %1899 = vxpose.xlu0.c.b16.cont [6/8] 0, 128
        %1900 = vxpose.xlu0.c.b16.cont [7/8] 0, 128
        %1901 = vxpose.xlu0.c.b16.end [8/8] 0, 128
        %v1902 = vpop.trf.xlu0
        %v1903 = vpop.trf.xlu0
        %v1904 = vpop.trf.xlu0
        %v1905 = vpop.trf.xlu0
        %v1906 = vpop.trf.xlu0
        %v1907 = vpop.trf.xlu0
        %v1908 = vpop.trf.xlu0
        %v1909 = vpop.trf.xlu0
        %v1911 = vsel %vm1105, %v1902, 0
        %v1914 = vsel %vm1105, %v1903, 0
        %v1917 = vsel %vm1105, %v1904, 0
        %v1920 = vsel %vm1105, %v1905, 0
        %v1923 = vsel %vm1105, %v1906, 0
        %v1926 = vsel %vm1105, %v1907, 0
        %v1929 = vsel %vm1105, %v1908, 0
        %v1932 = vsel %vm1105, %v1909, 0
        %1934 = vmatprep.subr.bf16.mxu0 %v1062
        %1935 = vmatpush1.bf16.msra.mxu0 %v1061
        %1936 = vmatprep.subr.bf16.mxu0 0
        %1937 = vmatpush1.bf16.msra.mxu0 0
        %1938 = vmatprep.subr.bf16.mxu0 0
        %1939 = vmatpush1.bf16.msra.mxu0 0
        %1940 = vmatprep.subr.bf16.mxu0 0
        %1941 = vmatpush1.bf16.msra.mxu0 0
        %1942 = vmatprep.subr.bf16.mxu0 0
        %1943 = vmatpush1.bf16.msra.mxu0 0
        %1944 = vmatprep.subr.bf16.mxu0 0
        %1945 = vmatpush1.bf16.msra.mxu0 0
        %1946 = vmatprep.subr.bf16.mxu0 0
        %1947 = vmatpush1.bf16.msra.mxu0 0
        %1948 = vmatprep.subr.bf16.mxu0 0
        %1949 = vmatpush1.bf16.msra.mxu0 0
        %1950 = vmatprep.subr.bf16.mxu0 0
        %1951 = vmatpush1.bf16.msra.mxu0 0
        %1952 = vmatprep.subr.bf16.mxu0 0
        %1953 = vmatpush1.bf16.msra.mxu0 0
        %1954 = vmatprep.subr.bf16.mxu0 0
        %1955 = vmatpush1.bf16.msra.mxu0 0
        %1956 = vmatprep.subr.bf16.mxu0 0
        %1957 = vmatpush1.bf16.msra.mxu0 0
        %1958 = vmatprep.subr.bf16.mxu0 0
        %1959 = vmatpush1.bf16.msra.mxu0 0
        %1960 = vmatprep.subr.bf16.mxu0 0
        %1961 = vmatpush1.bf16.msra.mxu0 0
        %1962 = vmatprep.subr.bf16.mxu0 0
        %1963 = vmatpush1.bf16.msra.mxu0 0
        %1964 = vmatprep.subr.bf16.mxu0 0
        %1965 = vmatpush1.bf16.msra.mxu0 0
        %1966 = vmatprep.mubr.bf16.mxu0 0
        %1967 = vmatmul.mubr.bf16.gmra.mrb[0].mxu0 %v1911
        %v1968 = vpop.f32.mrb[0].mxu0
        %v1969 = vadd.f32 0.0, %v1968
        %v1970 = vpop.f32.mrb[0].mxu0
        %v1971 = vadd.f32 0.0, %v1970
        %v1972 = vpop.f32.mrb[0].mxu0
        %v1973 = vadd.f32 0.0, %v1972
        %v1974 = vpop.f32.mrb[0].mxu0
        %v1975 = vadd.f32 0.0, %v1974
        %1976 = vmatprep.mubr.bf16.mxu0 0
        %1977 = vmatmul.mubr.bf16.gmra.mrb[0].mxu0 %v1914
        %v1978 = vpop.f32.mrb[0].mxu0
        %v1979 = vadd.f32 0.0, %v1978
        %v1980 = vpop.f32.mrb[0].mxu0
        %v1981 = vadd.f32 0.0, %v1980
        %v1982 = vpop.f32.mrb[0].mxu0
        %v1983 = vadd.f32 0.0, %v1982
        %v1984 = vpop.f32.mrb[0].mxu0
        %v1985 = vadd.f32 0.0, %v1984
        %1986 = vmatprep.mubr.bf16.mxu0 0
        %1987 = vmatmul.mubr.bf16.gmra.mrb[0].mxu0 %v1917
        %v1988 = vpop.f32.mrb[0].mxu0
        %v1989 = vadd.f32 0.0, %v1988
        %v1990 = vpop.f32.mrb[0].mxu0
        %v1991 = vadd.f32 0.0, %v1990
        %v1992 = vpop.f32.mrb[0].mxu0
        %v1993 = vadd.f32 0.0, %v1992
        %v1994 = vpop.f32.mrb[0].mxu0
        %v1995 = vadd.f32 0.0, %v1994
        %1996 = vmatprep.mubr.bf16.mxu0 0
        %1997 = vmatmul.mubr.bf16.gmra.mrb[0].mxu0 %v1920
        %v1998 = vpop.f32.mrb[0].mxu0
        %v1999 = vadd.f32 0.0, %v1998
        %v2000 = vpop.f32.mrb[0].mxu0
        %v2001 = vadd.f32 0.0, %v2000
        %v2002 = vpop.f32.mrb[0].mxu0
        %v2003 = vadd.f32 0.0, %v2002
        %v2004 = vpop.f32.mrb[0].mxu0
        %v2005 = vadd.f32 0.0, %v2004
        %2006 = vmatprep.mubr.bf16.mxu0 0
        %2007 = vmatmul.mubr.bf16.gmra.mrb[0].mxu0 %v1923
        %v2008 = vpop.f32.mrb[0].mxu0
        %v2009 = vadd.f32 0.0, %v2008
        %v2010 = vpop.f32.mrb[0].mxu0
        %v2011 = vadd.f32 0.0, %v2010
        %v2012 = vpop.f32.mrb[0].mxu0
        %v2013 = vadd.f32 0.0, %v2012
        %v2014 = vpop.f32.mrb[0].mxu0
        %v2015 = vadd.f32 0.0, %v2014
        %2016 = vmatprep.mubr.bf16.mxu0 0
        %2017 = vmatmul.mubr.bf16.gmra.mrb[0].mxu0 %v1926
        %v2018 = vpop.f32.mrb[0].mxu0
        %v2019 = vadd.f32 0.0, %v2018
        %v2020 = vpop.f32.mrb[0].mxu0
        %v2021 = vadd.f32 0.0, %v2020
        %v2022 = vpop.f32.mrb[0].mxu0
        %v2023 = vadd.f32 0.0, %v2022
        %v2024 = vpop.f32.mrb[0].mxu0
        %v2025 = vadd.f32 0.0, %v2024
        %2026 = vmatprep.mubr.bf16.mxu0 0
        %2027 = vmatmul.mubr.bf16.gmra.mrb[0].mxu0 %v1929
        %v2028 = vpop.f32.mrb[0].mxu0
        %v2029 = vadd.f32 0.0, %v2028
        %v2030 = vpop.f32.mrb[0].mxu0
        %v2031 = vadd.f32 0.0, %v2030
        %v2032 = vpop.f32.mrb[0].mxu0
        %v2033 = vadd.f32 0.0, %v2032
        %v2034 = vpop.f32.mrb[0].mxu0
        %v2035 = vadd.f32 0.0, %v2034
        %2036 = vmatprep.mubr.bf16.mxu0 0
        %2037 = vmatmul.mubr.bf16.gmra.mrb[0].mxu0 %v1932
        %v2038 = vpop.f32.mrb[0].mxu0
        %v2039 = vadd.f32 0.0, %v2038
        %v2040 = vpop.f32.mrb[0].mxu0
        %v2041 = vadd.f32 0.0, %v2040
        %v2042 = vpop.f32.mrb[0].mxu0
        %v2043 = vadd.f32 0.0, %v2042
        %v2044 = vpop.f32.mrb[0].mxu0
        %v2045 = vadd.f32 0.0, %v2044
        %2046 = vdwg.mxu0
        %v2047 = vmax.f32 %v1969, %v1971
        %2048 = vmax.xlane.f32.xlu0 %v2047
        %v2049 = vpop.xlane.xlu0 %2048
        %v2050 = vmax.f32 %v1973, %v1975
        %2051 = vmax.xlane.f32.xlu0 %v2050
        %v2052 = vpop.xlane.xlu0 %2051
        %v2053 = vmax.f32 %v1979, %v1981
        %2054 = vmax.xlane.f32.xlu0 %v2053
        %v2055 = vpop.xlane.xlu0 %2054
        %v2056 = vmax.f32 %v1983, %v1985
        %2057 = vmax.xlane.f32.xlu0 %v2056
        %v2058 = vpop.xlane.xlu0 %2057
        %v2059 = vmax.f32 %v1989, %v1991
        %2060 = vmax.xlane.f32.xlu0 %v2059
        %v2061 = vpop.xlane.xlu0 %2060
        %v2062 = vmax.f32 %v1993, %v1995
        %2063 = vmax.xlane.f32.xlu0 %v2062
        %v2064 = vpop.xlane.xlu0 %2063
        %v2065 = vmax.f32 %v1999, %v2001
        %2066 = vmax.xlane.f32.xlu0 %v2065
        %v2067 = vpop.xlane.xlu0 %2066
        %v2068 = vmax.f32 %v2003, %v2005
        %2069 = vmax.xlane.f32.xlu0 %v2068
        %v2070 = vpop.xlane.xlu0 %2069
        %v2071 = vmax.f32 %v2009, %v2011
        %2072 = vmax.xlane.f32.xlu0 %v2071
        %v2073 = vpop.xlane.xlu0 %2072
        %v2074 = vmax.f32 %v2013, %v2015
        %2075 = vmax.xlane.f32.xlu0 %v2074
        %v2076 = vpop.xlane.xlu0 %2075
        %v2077 = vmax.f32 %v2019, %v2021
        %2078 = vmax.xlane.f32.xlu0 %v2077
        %v2079 = vpop.xlane.xlu0 %2078
        %v2080 = vmax.f32 %v2023, %v2025
        %2081 = vmax.xlane.f32.xlu0 %v2080
        %v2082 = vpop.xlane.xlu0 %2081
        %v2083 = vmax.f32 %v2029, %v2031
        %2084 = vmax.xlane.f32.xlu0 %v2083
        %v2085 = vpop.xlane.xlu0 %2084
        %v2086 = vmax.f32 %v2033, %v2035
        %2087 = vmax.xlane.f32.xlu0 %v2086
        %v2088 = vpop.xlane.xlu0 %2087
        %v2089 = vmax.f32 %v2039, %v2041
        %2090 = vmax.xlane.f32.xlu0 %v2089
        %v2091 = vpop.xlane.xlu0 %2090
        %v2092 = vmax.f32 %v2043, %v2045
        %2093 = vmax.xlane.f32.xlu0 %v2092
        %v2094 = vpop.xlane.xlu0 %2093
        %v2095 = vsub.f32 %v1969, %v2049
        %v2096 = vsub.f32 %v1971, %v2049
        %v2097 = vsub.f32 %v1973, %v2052
        %v2098 = vsub.f32 %v1975, %v2052
        %v2099 = vsub.f32 %v1979, %v2055
        %v2100 = vsub.f32 %v1981, %v2055
        %v2101 = vsub.f32 %v1983, %v2058
        %v2102 = vsub.f32 %v1985, %v2058
        %v2103 = vsub.f32 %v1989, %v2061
        %v2104 = vsub.f32 %v1991, %v2061
        %v2105 = vsub.f32 %v1993, %v2064
        %v2106 = vsub.f32 %v1995, %v2064
        %v2107 = vsub.f32 %v1999, %v2067
        %v2108 = vsub.f32 %v2001, %v2067
        %v2109 = vsub.f32 %v2003, %v2070
        %v2110 = vsub.f32 %v2005, %v2070
        %v2111 = vsub.f32 %v2009, %v2073
        %v2112 = vsub.f32 %v2011, %v2073
        %v2113 = vsub.f32 %v2013, %v2076
        %v2114 = vsub.f32 %v2015, %v2076
        %v2115 = vsub.f32 %v2019, %v2079
        %v2116 = vsub.f32 %v2021, %v2079
        %v2117 = vsub.f32 %v2023, %v2082
        %v2118 = vsub.f32 %v2025, %v2082
        %v2119 = vsub.f32 %v2029, %v2085
        %v2120 = vsub.f32 %v2031, %v2085
        %v2121 = vsub.f32 %v2033, %v2088
        %v2122 = vsub.f32 %v2035, %v2088
        %v2123 = vsub.f32 %v2039, %v2091
        %v2124 = vsub.f32 %v2041, %v2091
        %v2125 = vsub.f32 %v2043, %v2094
        %v2126 = vsub.f32 %v2045, %v2094
        %v2127 = vmul.f32 %v2095, 1.442695
        %v2128 = vpow.pop %v2127
        %v2129 = vmul.f32 %v2096, 1.442695
        %v2130 = vpow.pop %v2129
        %v2131 = vmul.f32 %v2097, 1.442695
        %v2132 = vpow.pop %v2131
        %v2133 = vmul.f32 %v2098, 1.442695
        %v2134 = vpow.pop %v2133
        %v2135 = vmul.f32 %v2099, 1.442695
        %v2136 = vpow.pop %v2135
        %v2137 = vmul.f32 %v2100, 1.442695
        %v2138 = vpow.pop %v2137
        %v2139 = vmul.f32 %v2101, 1.442695
        %v2140 = vpow.pop %v2139
        %v2141 = vmul.f32 %v2102, 1.442695
        %v2142 = vpow.pop %v2141
        %v2143 = vmul.f32 %v2103, 1.442695
        %v2144 = vpow.pop %v2143
        %v2145 = vmul.f32 %v2104, 1.442695
        %v2146 = vpow.pop %v2145
        %v2147 = vmul.f32 %v2105, 1.442695
        %v2148 = vpow.pop %v2147
        %v2149 = vmul.f32 %v2106, 1.442695
        %v2150 = vpow.pop %v2149
        %v2151 = vmul.f32 %v2107, 1.442695
        %v2152 = vpow.pop %v2151
        %v2153 = vmul.f32 %v2108, 1.442695
        %v2154 = vpow.pop %v2153
        %v2155 = vmul.f32 %v2109, 1.442695
        %v2156 = vpow.pop %v2155
        %v2157 = vmul.f32 %v2110, 1.442695
        %v2158 = vpow.pop %v2157
        %v2159 = vmul.f32 %v2111, 1.442695
        %v2160 = vpow.pop %v2159
        %v2161 = vmul.f32 %v2112, 1.442695
        %v2162 = vpow.pop %v2161
        %v2163 = vmul.f32 %v2113, 1.442695
        %v2164 = vpow.pop %v2163
        %v2165 = vmul.f32 %v2114, 1.442695
        %v2166 = vpow.pop %v2165
        %v2167 = vmul.f32 %v2115, 1.442695
        %v2168 = vpow.pop %v2167
        %v2169 = vmul.f32 %v2116, 1.442695
        %v2170 = vpow.pop %v2169
        %v2171 = vmul.f32 %v2117, 1.442695
        %v2172 = vpow.pop %v2171
        %v2173 = vmul.f32 %v2118, 1.442695
        %v2174 = vpow.pop %v2173
        %v2175 = vmul.f32 %v2119, 1.442695
        %v2176 = vpow.pop %v2175
        %v2177 = vmul.f32 %v2120, 1.442695
        %v2178 = vpow.pop %v2177
        %v2179 = vmul.f32 %v2121, 1.442695
        %v2180 = vpow.pop %v2179
        %v2181 = vmul.f32 %v2122, 1.442695
        %v2182 = vpow.pop %v2181
        %v2183 = vmul.f32 %v2123, 1.442695
        %v2184 = vpow.pop %v2183
        %v2185 = vmul.f32 %v2124, 1.442695
        %v2186 = vpow.pop %v2185
        %v2187 = vmul.f32 %v2125, 1.442695
        %v2188 = vpow.pop %v2187
        %v2189 = vmul.f32 %v2126, 1.442695
        %v2190 = vpow.pop %v2189
        %v2191 = vpack.c.bf16 %v2132, %v2128
        %v2192 = vpack.c.bf16 %v2134, %v2130
        %v2193 = vpack.c.bf16 %v2140, %v2136
        %v2194 = vpack.c.bf16 %v2142, %v2138
        %v2195 = vpack.c.bf16 %v2148, %v2144
        %v2196 = vpack.c.bf16 %v2150, %v2146
        %v2197 = vpack.c.bf16 %v2156, %v2152
        %v2198 = vpack.c.bf16 %v2158, %v2154
        %v2199 = vpack.c.bf16 %v2164, %v2160
        %v2200 = vpack.c.bf16 %v2166, %v2162
        %v2201 = vpack.c.bf16 %v2172, %v2168
        %v2202 = vpack.c.bf16 %v2174, %v2170
        %v2203 = vpack.c.bf16 %v2180, %v2176
        %v2204 = vpack.c.bf16 %v2182, %v2178
        %v2205 = vpack.c.bf16 %v2188, %v2184
        %v2206 = vpack.c.bf16 %v2190, %v2186
        %2207 = vmatprep.subr.bf16.mxu0 %v2192
        %2208 = vmatpush1.bf16.xpose.msra.mxu0 %v2191
        %2209 = vmatprep.subr.bf16.mxu0 %v2194
        %2210 = vmatpush1.bf16.xpose.msra.mxu0 %v2193
        %2211 = vmatprep.subr.bf16.mxu0 %v2196
        %2212 = vmatpush1.bf16.xpose.msra.mxu0 %v2195
        %2213 = vmatprep.subr.bf16.mxu0 %v2198
        %2214 = vmatpush1.bf16.xpose.msra.mxu0 %v2197
        %2215 = vmatprep.subr.bf16.mxu0 %v2200
        %2216 = vmatpush1.bf16.xpose.msra.mxu0 %v2199
        %2217 = vmatprep.subr.bf16.mxu0 %v2202
        %2218 = vmatpush1.bf16.xpose.msra.mxu0 %v2201
        %2219 = vmatprep.subr.bf16.mxu0 %v2204
        %2220 = vmatpush1.bf16.xpose.msra.mxu0 %v2203
        %2221 = vmatprep.subr.bf16.mxu0 %v2206
        %2222 = vmatpush1.bf16.xpose.msra.mxu0 %v2205
        %2223 = vmatprep.subr.bf16.mxu0 0
        %2224 = vmatpush1.bf16.xpose.msra.mxu0 0
        %2225 = vmatprep.subr.bf16.mxu0 0
        %2226 = vmatpush1.bf16.xpose.msra.mxu0 0
        %2227 = vmatprep.subr.bf16.mxu0 0
        %2228 = vmatpush1.bf16.xpose.msra.mxu0 0
        %2229 = vmatprep.subr.bf16.mxu0 0
        %2230 = vmatpush1.bf16.xpose.msra.mxu0 0
        %2231 = vmatprep.subr.bf16.mxu0 0
        %2232 = vmatpush1.bf16.xpose.msra.mxu0 0
        %2233 = vmatprep.subr.bf16.mxu0 0
        %2234 = vmatpush1.bf16.xpose.msra.mxu0 0
        %2235 = vmatprep.subr.bf16.mxu0 0
        %2236 = vmatpush1.bf16.xpose.msra.mxu0 0
        %2237 = vmatprep.subr.bf16.mxu0 0
        %2238 = vmatpush1.bf16.xpose.msra.mxu0 0
        %2239 = vmatprep.mubr.bf16.mxu0 1065369472
        %2240 = vmatmul.mubr.bf16.gmra.mrb[0].mxu0 1065369472
        %v2241 = vpop.f32.mrb[0].mxu0
        %v2242 = vadd.f32 0.0, %v2241
        %v2243 = vpop.f32.mrb[0].mxu0
        %v2244 = vpop.f32.mrb[0].mxu0
        %v2245 = vpop.f32.mrb[0].mxu0
        %2246 = vdwg.mxu0
        %2247 = vmatprep.subr.bf16.mxu0 %v2192
        %2248 = vmatpush1.bf16.xpose.msra.mxu0 %v2191
        %2249 = vmatprep.subr.bf16.mxu0 %v2194
        %2250 = vmatpush1.bf16.xpose.msra.mxu0 %v2193
        %2251 = vmatprep.subr.bf16.mxu0 %v2196
        %2252 = vmatpush1.bf16.xpose.msra.mxu0 %v2195
        %2253 = vmatprep.subr.bf16.mxu0 %v2198
        %2254 = vmatpush1.bf16.xpose.msra.mxu0 %v2197
        %2255 = vmatprep.subr.bf16.mxu0 %v2200
        %2256 = vmatpush1.bf16.xpose.msra.mxu0 %v2199
        %2257 = vmatprep.subr.bf16.mxu0 %v2202
        %2258 = vmatpush1.bf16.xpose.msra.mxu0 %v2201
        %2259 = vmatprep.subr.bf16.mxu0 %v2204
        %2260 = vmatpush1.bf16.xpose.msra.mxu0 %v2203
        %2261 = vmatprep.subr.bf16.mxu0 %v2206
        %2262 = vmatpush1.bf16.xpose.msra.mxu0 %v2205
        %2263 = vmatprep.subr.bf16.mxu0 0
        %2264 = vmatpush1.bf16.xpose.msra.mxu0 0
        %2265 = vmatprep.subr.bf16.mxu0 0
        %2266 = vmatpush1.bf16.xpose.msra.mxu0 0
        %2267 = vmatprep.subr.bf16.mxu0 0
        %2268 = vmatpush1.bf16.xpose.msra.mxu0 0
        %2269 = vmatprep.subr.bf16.mxu0 0
        %2270 = vmatpush1.bf16.xpose.msra.mxu0 0
        %2271 = vmatprep.subr.bf16.mxu0 0
        %2272 = vmatpush1.bf16.xpose.msra.mxu0 0
        %2273 = vmatprep.subr.bf16.mxu0 0
        %2274 = vmatpush1.bf16.xpose.msra.mxu0 0
        %2275 = vmatprep.subr.bf16.mxu0 0
        %2276 = vmatpush1.bf16.xpose.msra.mxu0 0
        %2277 = vmatprep.subr.bf16.mxu0 0
        %2278 = vmatpush1.bf16.xpose.msra.mxu0 0
        %2279 = vmatprep.mubr.bf16.mxu0 %v1078
        %2280 = vmatmul.mubr.bf16.gmra.mrb[0].mxu0 %v1077
        %v2281 = vpop.f32.mrb[0].mxu0
        %v2282 = vadd.f32 0.0, %v2281
        %v2283 = vpop.f32.mrb[0].mxu0
        %v2284 = vpop.f32.mrb[0].mxu0
        %v2285 = vadd.f32 0.0, %v2284
        %v2286 = vpop.f32.mrb[0].mxu0
        %2287 = vdwg.mxu0
        %v2288 = vrcp.pop %v2242
        %v2289 = vlaneseq
        %v2290 = vshrl.u32 %v2289, 7
        %v2291 = vsub.s32 0, %v2290
        %v2292 = vrot.slane %v2288, %v2291
        %v2293 = vmul.f32 %v2282, %v2292
        %v2294 = vmul.f32 %v2285, %v2292
        %v2295 = vpack.c.bf16 %v2294, %v2293
        %2296 = vxpose.xlu0.c.b16.start [1/8] %v635, 128
        %2297 = vxpose.xlu0.c.b16.cont [2/8] 0, 128
        %2298 = vxpose.xlu0.c.b16.cont [3/8] 0, 128
        %2299 = vxpose.xlu0.c.b16.cont [4/8] 0, 128
        %2300 = vxpose.xlu0.c.b16.cont [5/8] 0, 128
        %2301 = vxpose.xlu0.c.b16.cont [6/8] 0, 128
        %2302 = vxpose.xlu0.c.b16.cont [7/8] 0, 128
        %2303 = vxpose.xlu0.c.b16.end [8/8] 0, 128
        %v2304 = vpop.trf.xlu0
        %v2305 = vpop.trf.xlu0
        %v2306 = vpop.trf.xlu0
        %v2307 = vpop.trf.xlu0
        %v2308 = vpop.trf.xlu0
        %v2309 = vpop.trf.xlu0
        %v2310 = vpop.trf.xlu0
        %v2311 = vpop.trf.xlu0
        %v2313 = vsel %vm1105, %v2304, 0
        %v2316 = vsel %vm1105, %v2305, 0
        %v2319 = vsel %vm1105, %v2306, 0
        %v2322 = vsel %vm1105, %v2307, 0
        %v2325 = vsel %vm1105, %v2308, 0
        %v2328 = vsel %vm1105, %v2309, 0
        %v2331 = vsel %vm1105, %v2310, 0
        %v2334 = vsel %vm1105, %v2311, 0
        %2336 = vmatprep.subr.bf16.mxu0 %v1064
        %2337 = vmatpush1.bf16.msra.mxu0 %v1063
        %2338 = vmatprep.subr.bf16.mxu0 0
        %2339 = vmatpush1.bf16.msra.mxu0 0
        %2340 = vmatprep.subr.bf16.mxu0 0
        %2341 = vmatpush1.bf16.msra.mxu0 0
        %2342 = vmatprep.subr.bf16.mxu0 0
        %2343 = vmatpush1.bf16.msra.mxu0 0
        %2344 = vmatprep.subr.bf16.mxu0 0
        %2345 = vmatpush1.bf16.msra.mxu0 0
        %2346 = vmatprep.subr.bf16.mxu0 0
        %2347 = vmatpush1.bf16.msra.mxu0 0
        %2348 = vmatprep.subr.bf16.mxu0 0
        %2349 = vmatpush1.bf16.msra.mxu0 0
        %2350 = vmatprep.subr.bf16.mxu0 0
        %2351 = vmatpush1.bf16.msra.mxu0 0
        %2352 = vmatprep.subr.bf16.mxu0 0
        %2353 = vmatpush1.bf16.msra.mxu0 0
        %2354 = vmatprep.subr.bf16.mxu0 0
        %2355 = vmatpush1.bf16.msra.mxu0 0
        %2356 = vmatprep.subr.bf16.mxu0 0
        %2357 = vmatpush1.bf16.msra.mxu0 0
        %2358 = vmatprep.subr.bf16.mxu0 0
        %2359 = vmatpush1.bf16.msra.mxu0 0
        %2360 = vmatprep.subr.bf16.mxu0 0
        %2361 = vmatpush1.bf16.msra.mxu0 0
        %2362 = vmatprep.subr.bf16.mxu0 0
        %2363 = vmatpush1.bf16.msra.mxu0 0
        %2364 = vmatprep.subr.bf16.mxu0 0
        %2365 = vmatpush1.bf16.msra.mxu0 0
        %2366 = vmatprep.subr.bf16.mxu0 0
        %2367 = vmatpush1.bf16.msra.mxu0 0
        %2368 = vmatprep.mubr.bf16.mxu0 0
        %2369 = vmatmul.mubr.bf16.gmra.mrb[0].mxu0 %v2313
        %v2370 = vpop.f32.mrb[0].mxu0
        %v2371 = vadd.f32 0.0, %v2370
        %v2372 = vpop.f32.mrb[0].mxu0
        %v2373 = vadd.f32 0.0, %v2372
        %v2374 = vpop.f32.mrb[0].mxu0
        %v2375 = vadd.f32 0.0, %v2374
        %v2376 = vpop.f32.mrb[0].mxu0
        %v2377 = vadd.f32 0.0, %v2376
        %2378 = vmatprep.mubr.bf16.mxu0 0
        %2379 = vmatmul.mubr.bf16.gmra.mrb[0].mxu0 %v2316
        %v2380 = vpop.f32.mrb[0].mxu0
        %v2381 = vadd.f32 0.0, %v2380
        %v2382 = vpop.f32.mrb[0].mxu0
        %v2383 = vadd.f32 0.0, %v2382
        %v2384 = vpop.f32.mrb[0].mxu0
        %v2385 = vadd.f32 0.0, %v2384
        %v2386 = vpop.f32.mrb[0].mxu0
        %v2387 = vadd.f32 0.0, %v2386
        %2388 = vmatprep.mubr.bf16.mxu0 0
        %2389 = vmatmul.mubr.bf16.gmra.mrb[0].mxu0 %v2319
        %v2390 = vpop.f32.mrb[0].mxu0
        %v2391 = vadd.f32 0.0, %v2390
        %v2392 = vpop.f32.mrb[0].mxu0
        %v2393 = vadd.f32 0.0, %v2392
        %v2394 = vpop.f32.mrb[0].mxu0
        %v2395 = vadd.f32 0.0, %v2394
        %v2396 = vpop.f32.mrb[0].mxu0
        %v2397 = vadd.f32 0.0, %v2396
        %2398 = vmatprep.mubr.bf16.mxu0 0
        %2399 = vmatmul.mubr.bf16.gmra.mrb[0].mxu0 %v2322
        %v2400 = vpop.f32.mrb[0].mxu0
        %v2401 = vadd.f32 0.0, %v2400
        %v2402 = vpop.f32.mrb[0].mxu0
        %v2403 = vadd.f32 0.0, %v2402
        %v2404 = vpop.f32.mrb[0].mxu0
        %v2405 = vadd.f32 0.0, %v2404
        %v2406 = vpop.f32.mrb[0].mxu0
        %v2407 = vadd.f32 0.0, %v2406
        %2408 = vmatprep.mubr.bf16.mxu0 0
        %2409 = vmatmul.mubr.bf16.gmra.mrb[0].mxu0 %v2325
        %v2410 = vpop.f32.mrb[0].mxu0
        %v2411 = vadd.f32 0.0, %v2410
        %v2412 = vpop.f32.mrb[0].mxu0
        %v2413 = vadd.f32 0.0, %v2412
        %v2414 = vpop.f32.mrb[0].mxu0
        %v2415 = vadd.f32 0.0, %v2414
        %v2416 = vpop.f32.mrb[0].mxu0
        %v2417 = vadd.f32 0.0, %v2416
        %2418 = vmatprep.mubr.bf16.mxu0 0
        %2419 = vmatmul.mubr.bf16.gmra.mrb[0].mxu0 %v2328
        %v2420 = vpop.f32.mrb[0].mxu0
        %v2421 = vadd.f32 0.0, %v2420
        %v2422 = vpop.f32.mrb[0].mxu0
        %v2423 = vadd.f32 0.0, %v2422
        %v2424 = vpop.f32.mrb[0].mxu0
        %v2425 = vadd.f32 0.0, %v2424
        %v2426 = vpop.f32.mrb[0].mxu0
        %v2427 = vadd.f32 0.0, %v2426
        %2428 = vmatprep.mubr.bf16.mxu0 0
        %2429 = vmatmul.mubr.bf16.gmra.mrb[0].mxu0 %v2331
        %v2430 = vpop.f32.mrb[0].mxu0
        %v2431 = vadd.f32 0.0, %v2430
        %v2432 = vpop.f32.mrb[0].mxu0
        %v2433 = vadd.f32 0.0, %v2432
        %v2434 = vpop.f32.mrb[0].mxu0
        %v2435 = vadd.f32 0.0, %v2434
        %v2436 = vpop.f32.mrb[0].mxu0
        %v2437 = vadd.f32 0.0, %v2436
        %2438 = vmatprep.mubr.bf16.mxu0 0
        %2439 = vmatmul.mubr.bf16.gmra.mrb[0].mxu0 %v2334
        %v2440 = vpop.f32.mrb[0].mxu0
        %v2441 = vadd.f32 0.0, %v2440
        %v2442 = vpop.f32.mrb[0].mxu0
        %v2443 = vadd.f32 0.0, %v2442
        %v2444 = vpop.f32.mrb[0].mxu0
        %v2445 = vadd.f32 0.0, %v2444
        %v2446 = vpop.f32.mrb[0].mxu0
        %v2447 = vadd.f32 0.0, %v2446
        %2448 = vdwg.mxu0
        %v2449 = vmax.f32 %v2371, %v2373
        %2450 = vmax.xlane.f32.xlu0 %v2449
        %v2451 = vpop.xlane.xlu0 %2450
        %v2452 = vmax.f32 %v2375, %v2377
        %2453 = vmax.xlane.f32.xlu0 %v2452
        %v2454 = vpop.xlane.xlu0 %2453
        %v2455 = vmax.f32 %v2381, %v2383
        %2456 = vmax.xlane.f32.xlu0 %v2455
        %v2457 = vpop.xlane.xlu0 %2456
        %v2458 = vmax.f32 %v2385, %v2387
        %2459 = vmax.xlane.f32.xlu0 %v2458
        %v2460 = vpop.xlane.xlu0 %2459
        %v2461 = vmax.f32 %v2391, %v2393
        %2462 = vmax.xlane.f32.xlu0 %v2461
        %v2463 = vpop.xlane.xlu0 %2462
        %v2464 = vmax.f32 %v2395, %v2397
        %2465 = vmax.xlane.f32.xlu0 %v2464
        %v2466 = vpop.xlane.xlu0 %2465
        %v2467 = vmax.f32 %v2401, %v2403
        %2468 = vmax.xlane.f32.xlu0 %v2467
        %v2469 = vpop.xlane.xlu0 %2468
        %v2470 = vmax.f32 %v2405, %v2407
        %2471 = vmax.xlane.f32.xlu0 %v2470
        %v2472 = vpop.xlane.xlu0 %2471
        %v2473 = vmax.f32 %v2411, %v2413
        %2474 = vmax.xlane.f32.xlu0 %v2473
        %v2475 = vpop.xlane.xlu0 %2474
        %v2476 = vmax.f32 %v2415, %v2417
        %2477 = vmax.xlane.f32.xlu0 %v2476
        %v2478 = vpop.xlane.xlu0 %2477
        %v2479 = vmax.f32 %v2421, %v2423
        %2480 = vmax.xlane.f32.xlu0 %v2479
        %v2481 = vpop.xlane.xlu0 %2480
        %v2482 = vmax.f32 %v2425, %v2427
        %2483 = vmax.xlane.f32.xlu0 %v2482
        %v2484 = vpop.xlane.xlu0 %2483
        %v2485 = vmax.f32 %v2431, %v2433
        %2486 = vmax.xlane.f32.xlu0 %v2485
        %v2487 = vpop.xlane.xlu0 %2486
        %v2488 = vmax.f32 %v2435, %v2437
        %2489 = vmax.xlane.f32.xlu0 %v2488
        %v2490 = vpop.xlane.xlu0 %2489
        %v2491 = vmax.f32 %v2441, %v2443
        %2492 = vmax.xlane.f32.xlu0 %v2491
        %v2493 = vpop.xlane.xlu0 %2492
        %v2494 = vmax.f32 %v2445, %v2447
        %2495 = vmax.xlane.f32.xlu0 %v2494
        %v2496 = vpop.xlane.xlu0 %2495
        %v2497 = vsub.f32 %v2371, %v2451
        %v2498 = vsub.f32 %v2373, %v2451
        %v2499 = vsub.f32 %v2375, %v2454
        %v2500 = vsub.f32 %v2377, %v2454
        %v2501 = vsub.f32 %v2381, %v2457
        %v2502 = vsub.f32 %v2383, %v2457
        %v2503 = vsub.f32 %v2385, %v2460
        %v2504 = vsub.f32 %v2387, %v2460
        %v2505 = vsub.f32 %v2391, %v2463
        %v2506 = vsub.f32 %v2393, %v2463
        %v2507 = vsub.f32 %v2395, %v2466
        %v2508 = vsub.f32 %v2397, %v2466
        %v2509 = vsub.f32 %v2401, %v2469
        %v2510 = vsub.f32 %v2403, %v2469
        %v2511 = vsub.f32 %v2405, %v2472
        %v2512 = vsub.f32 %v2407, %v2472
        %v2513 = vsub.f32 %v2411, %v2475
        %v2514 = vsub.f32 %v2413, %v2475
        %v2515 = vsub.f32 %v2415, %v2478
        %v2516 = vsub.f32 %v2417, %v2478
        %v2517 = vsub.f32 %v2421, %v2481
        %v2518 = vsub.f32 %v2423, %v2481
        %v2519 = vsub.f32 %v2425, %v2484
        %v2520 = vsub.f32 %v2427, %v2484
        %v2521 = vsub.f32 %v2431, %v2487
        %v2522 = vsub.f32 %v2433, %v2487
        %v2523 = vsub.f32 %v2435, %v2490
        %v2524 = vsub.f32 %v2437, %v2490
        %v2525 = vsub.f32 %v2441, %v2493
        %v2526 = vsub.f32 %v2443, %v2493
        %v2527 = vsub.f32 %v2445, %v2496
        %v2528 = vsub.f32 %v2447, %v2496
        %v2529 = vmul.f32 %v2497, 1.442695
        %v2530 = vpow.pop %v2529
        %v2531 = vmul.f32 %v2498, 1.442695
        %v2532 = vpow.pop %v2531
        %v2533 = vmul.f32 %v2499, 1.442695
        %v2534 = vpow.pop %v2533
        %v2535 = vmul.f32 %v2500, 1.442695
        %v2536 = vpow.pop %v2535
        %v2537 = vmul.f32 %v2501, 1.442695
        %v2538 = vpow.pop %v2537
        %v2539 = vmul.f32 %v2502, 1.442695
        %v2540 = vpow.pop %v2539
        %v2541 = vmul.f32 %v2503, 1.442695
        %v2542 = vpow.pop %v2541
        %v2543 = vmul.f32 %v2504, 1.442695
        %v2544 = vpow.pop %v2543
        %v2545 = vmul.f32 %v2505, 1.442695
        %v2546 = vpow.pop %v2545
        %v2547 = vmul.f32 %v2506, 1.442695
        %v2548 = vpow.pop %v2547
        %v2549 = vmul.f32 %v2507, 1.442695
        %v2550 = vpow.pop %v2549
        %v2551 = vmul.f32 %v2508, 1.442695
        %v2552 = vpow.pop %v2551
        %v2553 = vmul.f32 %v2509, 1.442695
        %v2554 = vpow.pop %v2553
        %v2555 = vmul.f32 %v2510, 1.442695
        %v2556 = vpow.pop %v2555
        %v2557 = vmul.f32 %v2511, 1.442695
        %v2558 = vpow.pop %v2557
        %v2559 = vmul.f32 %v2512, 1.442695
        %v2560 = vpow.pop %v2559
        %v2561 = vmul.f32 %v2513, 1.442695
        %v2562 = vpow.pop %v2561
        %v2563 = vmul.f32 %v2514, 1.442695
        %v2564 = vpow.pop %v2563
        %v2565 = vmul.f32 %v2515, 1.442695
        %v2566 = vpow.pop %v2565
        %v2567 = vmul.f32 %v2516, 1.442695
        %v2568 = vpow.pop %v2567
        %v2569 = vmul.f32 %v2517, 1.442695
        %v2570 = vpow.pop %v2569
        %v2571 = vmul.f32 %v2518, 1.442695
        %v2572 = vpow.pop %v2571
        %v2573 = vmul.f32 %v2519, 1.442695
        %v2574 = vpow.pop %v2573
        %v2575 = vmul.f32 %v2520, 1.442695
        %v2576 = vpow.pop %v2575
        %v2577 = vmul.f32 %v2521, 1.442695
        %v2578 = vpow.pop %v2577
        %v2579 = vmul.f32 %v2522, 1.442695
        %v2580 = vpow.pop %v2579
        %v2581 = vmul.f32 %v2523, 1.442695
        %v2582 = vpow.pop %v2581
        %v2583 = vmul.f32 %v2524, 1.442695
        %v2584 = vpow.pop %v2583
        %v2585 = vmul.f32 %v2525, 1.442695
        %v2586 = vpow.pop %v2585
        %v2587 = vmul.f32 %v2526, 1.442695
        %v2588 = vpow.pop %v2587
        %v2589 = vmul.f32 %v2527, 1.442695
        %v2590 = vpow.pop %v2589
        %v2591 = vmul.f32 %v2528, 1.442695
        %v2592 = vpow.pop %v2591
        %v2593 = vpack.c.bf16 %v2534, %v2530
        %v2594 = vpack.c.bf16 %v2536, %v2532
        %v2595 = vpack.c.bf16 %v2542, %v2538
        %v2596 = vpack.c.bf16 %v2544, %v2540
        %v2597 = vpack.c.bf16 %v2550, %v2546
        %v2598 = vpack.c.bf16 %v2552, %v2548
        %v2599 = vpack.c.bf16 %v2558, %v2554
        %v2600 = vpack.c.bf16 %v2560, %v2556
        %v2601 = vpack.c.bf16 %v2566, %v2562
        %v2602 = vpack.c.bf16 %v2568, %v2564
        %v2603 = vpack.c.bf16 %v2574, %v2570
        %v2604 = vpack.c.bf16 %v2576, %v2572
        %v2605 = vpack.c.bf16 %v2582, %v2578
        %v2606 = vpack.c.bf16 %v2584, %v2580
        %v2607 = vpack.c.bf16 %v2590, %v2586
        %v2608 = vpack.c.bf16 %v2592, %v2588
        %2609 = vmatprep.subr.bf16.mxu0 %v2594
        %2610 = vmatpush1.bf16.xpose.msra.mxu0 %v2593
        %2611 = vmatprep.subr.bf16.mxu0 %v2596
        %2612 = vmatpush1.bf16.xpose.msra.mxu0 %v2595
        %2613 = vmatprep.subr.bf16.mxu0 %v2598
        %2614 = vmatpush1.bf16.xpose.msra.mxu0 %v2597
        %2615 = vmatprep.subr.bf16.mxu0 %v2600
        %2616 = vmatpush1.bf16.xpose.msra.mxu0 %v2599
        %2617 = vmatprep.subr.bf16.mxu0 %v2602
        %2618 = vmatpush1.bf16.xpose.msra.mxu0 %v2601
        %2619 = vmatprep.subr.bf16.mxu0 %v2604
        %2620 = vmatpush1.bf16.xpose.msra.mxu0 %v2603
        %2621 = vmatprep.subr.bf16.mxu0 %v2606
        %2622 = vmatpush1.bf16.xpose.msra.mxu0 %v2605
        %2623 = vmatprep.subr.bf16.mxu0 %v2608
        %2624 = vmatpush1.bf16.xpose.msra.mxu0 %v2607
        %2625 = vmatprep.subr.bf16.mxu0 0
        %2626 = vmatpush1.bf16.xpose.msra.mxu0 0
        %2627 = vmatprep.subr.bf16.mxu0 0
        %2628 = vmatpush1.bf16.xpose.msra.mxu0 0
        %2629 = vmatprep.subr.bf16.mxu0 0
        %2630 = vmatpush1.bf16.xpose.msra.mxu0 0
        %2631 = vmatprep.subr.bf16.mxu0 0
        %2632 = vmatpush1.bf16.xpose.msra.mxu0 0
        %2633 = vmatprep.subr.bf16.mxu0 0
        %2634 = vmatpush1.bf16.xpose.msra.mxu0 0
        %2635 = vmatprep.subr.bf16.mxu0 0
        %2636 = vmatpush1.bf16.xpose.msra.mxu0 0
        %2637 = vmatprep.subr.bf16.mxu0 0
        %2638 = vmatpush1.bf16.xpose.msra.mxu0 0
        %2639 = vmatprep.subr.bf16.mxu0 0
        %2640 = vmatpush1.bf16.xpose.msra.mxu0 0
        %2641 = vmatprep.mubr.bf16.mxu0 1065369472
        %2642 = vmatmul.mubr.bf16.gmra.mrb[0].mxu0 1065369472
        %v2643 = vpop.f32.mrb[0].mxu0
        %v2644 = vadd.f32 0.0, %v2643
        %v2645 = vpop.f32.mrb[0].mxu0
        %v2646 = vpop.f32.mrb[0].mxu0
        %v2647 = vpop.f32.mrb[0].mxu0
        %2648 = vdwg.mxu0
        %2649 = vmatprep.subr.bf16.mxu0 %v2594
        %2650 = vmatpush1.bf16.xpose.msra.mxu0 %v2593
        %2651 = vmatprep.subr.bf16.mxu0 %v2596
        %2652 = vmatpush1.bf16.xpose.msra.mxu0 %v2595
        %2653 = vmatprep.subr.bf16.mxu0 %v2598
        %2654 = vmatpush1.bf16.xpose.msra.mxu0 %v2597
        %2655 = vmatprep.subr.bf16.mxu0 %v2600
        %2656 = vmatpush1.bf16.xpose.msra.mxu0 %v2599
        %2657 = vmatprep.subr.bf16.mxu0 %v2602
        %2658 = vmatpush1.bf16.xpose.msra.mxu0 %v2601
        %2659 = vmatprep.subr.bf16.mxu0 %v2604
        %2660 = vmatpush1.bf16.xpose.msra.mxu0 %v2603
        %2661 = vmatprep.subr.bf16.mxu0 %v2606
        %2662 = vmatpush1.bf16.xpose.msra.mxu0 %v2605
        %2663 = vmatprep.subr.bf16.mxu0 %v2608
        %2664 = vmatpush1.bf16.xpose.msra.mxu0 %v2607
        %2665 = vmatprep.subr.bf16.mxu0 0
        %2666 = vmatpush1.bf16.xpose.msra.mxu0 0
        %2667 = vmatprep.subr.bf16.mxu0 0
        %2668 = vmatpush1.bf16.xpose.msra.mxu0 0
        %2669 = vmatprep.subr.bf16.mxu0 0
        %2670 = vmatpush1.bf16.xpose.msra.mxu0 0
        %2671 = vmatprep.subr.bf16.mxu0 0
        %2672 = vmatpush1.bf16.xpose.msra.mxu0 0
        %2673 = vmatprep.subr.bf16.mxu0 0
        %2674 = vmatpush1.bf16.xpose.msra.mxu0 0
        %2675 = vmatprep.subr.bf16.mxu0 0
        %2676 = vmatpush1.bf16.xpose.msra.mxu0 0
        %2677 = vmatprep.subr.bf16.mxu0 0
        %2678 = vmatpush1.bf16.xpose.msra.mxu0 0
        %2679 = vmatprep.subr.bf16.mxu0 0
        %2680 = vmatpush1.bf16.xpose.msra.mxu0 0
        %2681 = vmatprep.mubr.bf16.mxu0 %v1080
        %2682 = vmatmul.mubr.bf16.gmra.mrb[0].mxu0 %v1079
        %v2683 = vpop.f32.mrb[0].mxu0
        %v2684 = vadd.f32 0.0, %v2683
        %v2685 = vpop.f32.mrb[0].mxu0
        %v2686 = vpop.f32.mrb[0].mxu0
        %v2687 = vadd.f32 0.0, %v2686
        %v2688 = vpop.f32.mrb[0].mxu0
        %2689 = vdwg.mxu0
        %v2690 = vrcp.pop %v2644
        %v2691 = vlaneseq
        %v2692 = vshrl.u32 %v2691, 7
        %v2693 = vsub.s32 0, %v2692
        %v2694 = vrot.slane %v2690, %v2693
        %v2695 = vmul.f32 %v2684, %v2694
        %v2696 = vmul.f32 %v2687, %v2694
        %v2697 = vpack.c.bf16 %v2696, %v2695
        %2698 = vxpose.xlu0.c.b16.start [1/8] %v636, 128
        %2699 = vxpose.xlu0.c.b16.cont [2/8] 0, 128
        %2700 = vxpose.xlu0.c.b16.cont [3/8] 0, 128
        %2701 = vxpose.xlu0.c.b16.cont [4/8] 0, 128
        %2702 = vxpose.xlu0.c.b16.cont [5/8] 0, 128
        %2703 = vxpose.xlu0.c.b16.cont [6/8] 0, 128
        %2704 = vxpose.xlu0.c.b16.cont [7/8] 0, 128
        %2705 = vxpose.xlu0.c.b16.end [8/8] 0, 128
        %v2706 = vpop.trf.xlu0
        %v2707 = vpop.trf.xlu0
        %v2708 = vpop.trf.xlu0
        %v2709 = vpop.trf.xlu0
        %v2710 = vpop.trf.xlu0
        %v2711 = vpop.trf.xlu0
        %v2712 = vpop.trf.xlu0
        %v2713 = vpop.trf.xlu0
        %v2715 = vsel %vm1105, %v2706, 0
        %v2718 = vsel %vm1105, %v2707, 0
        %v2721 = vsel %vm1105, %v2708, 0
        %v2724 = vsel %vm1105, %v2709, 0
        %v2727 = vsel %vm1105, %v2710, 0
        %v2730 = vsel %vm1105, %v2711, 0
        %v2733 = vsel %vm1105, %v2712, 0
        %v2736 = vsel %vm1105, %v2713, 0
        %2738 = vmatprep.subr.bf16.mxu0 %v1066
        %2739 = vmatpush1.bf16.msra.mxu0 %v1065
        %2740 = vmatprep.subr.bf16.mxu0 0
        %2741 = vmatpush1.bf16.msra.mxu0 0
        %2742 = vmatprep.subr.bf16.mxu0 0
        %2743 = vmatpush1.bf16.msra.mxu0 0
        %2744 = vmatprep.subr.bf16.mxu0 0
        %2745 = vmatpush1.bf16.msra.mxu0 0
        %2746 = vmatprep.subr.bf16.mxu0 0
        %2747 = vmatpush1.bf16.msra.mxu0 0
        %2748 = vmatprep.subr.bf16.mxu0 0
        %2749 = vmatpush1.bf16.msra.mxu0 0
        %2750 = vmatprep.subr.bf16.mxu0 0
        %2751 = vmatpush1.bf16.msra.mxu0 0
        %2752 = vmatprep.subr.bf16.mxu0 0
        %2753 = vmatpush1.bf16.msra.mxu0 0
        %2754 = vmatprep.subr.bf16.mxu0 0
        %2755 = vmatpush1.bf16.msra.mxu0 0
        %2756 = vmatprep.subr.bf16.mxu0 0
        %2757 = vmatpush1.bf16.msra.mxu0 0
        %2758 = vmatprep.subr.bf16.mxu0 0
        %2759 = vmatpush1.bf16.msra.mxu0 0
        %2760 = vmatprep.subr.bf16.mxu0 0
        %2761 = vmatpush1.bf16.msra.mxu0 0
        %2762 = vmatprep.subr.bf16.mxu0 0
        %2763 = vmatpush1.bf16.msra.mxu0 0
        %2764 = vmatprep.subr.bf16.mxu0 0
        %2765 = vmatpush1.bf16.msra.mxu0 0
        %2766 = vmatprep.subr.bf16.mxu0 0
        %2767 = vmatpush1.bf16.msra.mxu0 0
        %2768 = vmatprep.subr.bf16.mxu0 0
        %2769 = vmatpush1.bf16.msra.mxu0 0
        %2770 = vmatprep.mubr.bf16.mxu0 0
        %2771 = vmatmul.mubr.bf16.gmra.mrb[0].mxu0 %v2715
        %v2772 = vpop.f32.mrb[0].mxu0
        %v2773 = vadd.f32 0.0, %v2772
        %v2774 = vpop.f32.mrb[0].mxu0
        %v2775 = vadd.f32 0.0, %v2774
        %v2776 = vpop.f32.mrb[0].mxu0
        %v2777 = vadd.f32 0.0, %v2776
        %v2778 = vpop.f32.mrb[0].mxu0
        %v2779 = vadd.f32 0.0, %v2778
        %2780 = vmatprep.mubr.bf16.mxu0 0
        %2781 = vmatmul.mubr.bf16.gmra.mrb[0].mxu0 %v2718
        %v2782 = vpop.f32.mrb[0].mxu0
        %v2783 = vadd.f32 0.0, %v2782
        %v2784 = vpop.f32.mrb[0].mxu0
        %v2785 = vadd.f32 0.0, %v2784
        %v2786 = vpop.f32.mrb[0].mxu0
        %v2787 = vadd.f32 0.0, %v2786
        %v2788 = vpop.f32.mrb[0].mxu0
        %v2789 = vadd.f32 0.0, %v2788
        %2790 = vmatprep.mubr.bf16.mxu0 0
        %2791 = vmatmul.mubr.bf16.gmra.mrb[0].mxu0 %v2721
        %v2792 = vpop.f32.mrb[0].mxu0
        %v2793 = vadd.f32 0.0, %v2792
        %v2794 = vpop.f32.mrb[0].mxu0
        %v2795 = vadd.f32 0.0, %v2794
        %v2796 = vpop.f32.mrb[0].mxu0
        %v2797 = vadd.f32 0.0, %v2796
        %v2798 = vpop.f32.mrb[0].mxu0
        %v2799 = vadd.f32 0.0, %v2798
        %2800 = vmatprep.mubr.bf16.mxu0 0
        %2801 = vmatmul.mubr.bf16.gmra.mrb[0].mxu0 %v2724
        %v2802 = vpop.f32.mrb[0].mxu0
        %v2803 = vadd.f32 0.0, %v2802
        %v2804 = vpop.f32.mrb[0].mxu0
        %v2805 = vadd.f32 0.0, %v2804
        %v2806 = vpop.f32.mrb[0].mxu0
        %v2807 = vadd.f32 0.0, %v2806
        %v2808 = vpop.f32.mrb[0].mxu0
        %v2809 = vadd.f32 0.0, %v2808
        %2810 = vmatprep.mubr.bf16.mxu0 0
        %2811 = vmatmul.mubr.bf16.gmra.mrb[0].mxu0 %v2727
        %v2812 = vpop.f32.mrb[0].mxu0
        %v2813 = vadd.f32 0.0, %v2812
        %v2814 = vpop.f32.mrb[0].mxu0
        %v2815 = vadd.f32 0.0, %v2814
        %v2816 = vpop.f32.mrb[0].mxu0
        %v2817 = vadd.f32 0.0, %v2816
        %v2818 = vpop.f32.mrb[0].mxu0
        %v2819 = vadd.f32 0.0, %v2818
        %2820 = vmatprep.mubr.bf16.mxu0 0
        %2821 = vmatmul.mubr.bf16.gmra.mrb[0].mxu0 %v2730
        %v2822 = vpop.f32.mrb[0].mxu0
        %v2823 = vadd.f32 0.0, %v2822
        %v2824 = vpop.f32.mrb[0].mxu0
        %v2825 = vadd.f32 0.0, %v2824
        %v2826 = vpop.f32.mrb[0].mxu0
        %v2827 = vadd.f32 0.0, %v2826
        %v2828 = vpop.f32.mrb[0].mxu0
        %v2829 = vadd.f32 0.0, %v2828
        %2830 = vmatprep.mubr.bf16.mxu0 0
        %2831 = vmatmul.mubr.bf16.gmra.mrb[0].mxu0 %v2733
        %v2832 = vpop.f32.mrb[0].mxu0
        %v2833 = vadd.f32 0.0, %v2832
        %v2834 = vpop.f32.mrb[0].mxu0
        %v2835 = vadd.f32 0.0, %v2834
        %v2836 = vpop.f32.mrb[0].mxu0
        %v2837 = vadd.f32 0.0, %v2836
        %v2838 = vpop.f32.mrb[0].mxu0
        %v2839 = vadd.f32 0.0, %v2838
        %2840 = vmatprep.mubr.bf16.mxu0 0
        %2841 = vmatmul.mubr.bf16.gmra.mrb[0].mxu0 %v2736
        %v2842 = vpop.f32.mrb[0].mxu0
        %v2843 = vadd.f32 0.0, %v2842
        %v2844 = vpop.f32.mrb[0].mxu0
        %v2845 = vadd.f32 0.0, %v2844
        %v2846 = vpop.f32.mrb[0].mxu0
        %v2847 = vadd.f32 0.0, %v2846
        %v2848 = vpop.f32.mrb[0].mxu0
        %v2849 = vadd.f32 0.0, %v2848
        %2850 = vdwg.mxu0
        %v2851 = vmax.f32 %v2773, %v2775
        %2852 = vmax.xlane.f32.xlu0 %v2851
        %v2853 = vpop.xlane.xlu0 %2852
        %v2854 = vmax.f32 %v2777, %v2779
        %2855 = vmax.xlane.f32.xlu0 %v2854
        %v2856 = vpop.xlane.xlu0 %2855
        %v2857 = vmax.f32 %v2783, %v2785
        %2858 = vmax.xlane.f32.xlu0 %v2857
        %v2859 = vpop.xlane.xlu0 %2858
        %v2860 = vmax.f32 %v2787, %v2789
        %2861 = vmax.xlane.f32.xlu0 %v2860
        %v2862 = vpop.xlane.xlu0 %2861
        %v2863 = vmax.f32 %v2793, %v2795
        %2864 = vmax.xlane.f32.xlu0 %v2863
        %v2865 = vpop.xlane.xlu0 %2864
        %v2866 = vmax.f32 %v2797, %v2799
        %2867 = vmax.xlane.f32.xlu0 %v2866
        %v2868 = vpop.xlane.xlu0 %2867
        %v2869 = vmax.f32 %v2803, %v2805
        %2870 = vmax.xlane.f32.xlu0 %v2869
        %v2871 = vpop.xlane.xlu0 %2870
        %v2872 = vmax.f32 %v2807, %v2809
        %2873 = vmax.xlane.f32.xlu0 %v2872
        %v2874 = vpop.xlane.xlu0 %2873
        %v2875 = vmax.f32 %v2813, %v2815
        %2876 = vmax.xlane.f32.xlu0 %v2875
        %v2877 = vpop.xlane.xlu0 %2876
        %v2878 = vmax.f32 %v2817, %v2819
        %2879 = vmax.xlane.f32.xlu0 %v2878
        %v2880 = vpop.xlane.xlu0 %2879
        %v2881 = vmax.f32 %v2823, %v2825
        %2882 = vmax.xlane.f32.xlu0 %v2881
        %v2883 = vpop.xlane.xlu0 %2882
        %v2884 = vmax.f32 %v2827, %v2829
        %2885 = vmax.xlane.f32.xlu0 %v2884
        %v2886 = vpop.xlane.xlu0 %2885
        %v2887 = vmax.f32 %v2833, %v2835
        %2888 = vmax.xlane.f32.xlu0 %v2887
        %v2889 = vpop.xlane.xlu0 %2888
        %v2890 = vmax.f32 %v2837, %v2839
        %2891 = vmax.xlane.f32.xlu0 %v2890
        %v2892 = vpop.xlane.xlu0 %2891
        %v2893 = vmax.f32 %v2843, %v2845
        %2894 = vmax.xlane.f32.xlu0 %v2893
        %v2895 = vpop.xlane.xlu0 %2894
        %v2896 = vmax.f32 %v2847, %v2849
        %2897 = vmax.xlane.f32.xlu0 %v2896
        %v2898 = vpop.xlane.xlu0 %2897
        %v2899 = vsub.f32 %v2773, %v2853
        %v2900 = vsub.f32 %v2775, %v2853
        %v2901 = vsub.f32 %v2777, %v2856
        %v2902 = vsub.f32 %v2779, %v2856
        %v2903 = vsub.f32 %v2783, %v2859
        %v2904 = vsub.f32 %v2785, %v2859
        %v2905 = vsub.f32 %v2787, %v2862
        %v2906 = vsub.f32 %v2789, %v2862
        %v2907 = vsub.f32 %v2793, %v2865
        %v2908 = vsub.f32 %v2795, %v2865
        %v2909 = vsub.f32 %v2797, %v2868
        %v2910 = vsub.f32 %v2799, %v2868
        %v2911 = vsub.f32 %v2803, %v2871
        %v2912 = vsub.f32 %v2805, %v2871
        %v2913 = vsub.f32 %v2807, %v2874
        %v2914 = vsub.f32 %v2809, %v2874
        %v2915 = vsub.f32 %v2813, %v2877
        %v2916 = vsub.f32 %v2815, %v2877
        %v2917 = vsub.f32 %v2817, %v2880
        %v2918 = vsub.f32 %v2819, %v2880
        %v2919 = vsub.f32 %v2823, %v2883
        %v2920 = vsub.f32 %v2825, %v2883
        %v2921 = vsub.f32 %v2827, %v2886
        %v2922 = vsub.f32 %v2829, %v2886
        %v2923 = vsub.f32 %v2833, %v2889
        %v2924 = vsub.f32 %v2835, %v2889
        %v2925 = vsub.f32 %v2837, %v2892
        %v2926 = vsub.f32 %v2839, %v2892
        %v2927 = vsub.f32 %v2843, %v2895
        %v2928 = vsub.f32 %v2845, %v2895
        %v2929 = vsub.f32 %v2847, %v2898
        %v2930 = vsub.f32 %v2849, %v2898
        %v2931 = vmul.f32 %v2899, 1.442695
        %v2932 = vpow.pop %v2931
        %v2933 = vmul.f32 %v2900, 1.442695
        %v2934 = vpow.pop %v2933
        %v2935 = vmul.f32 %v2901, 1.442695
        %v2936 = vpow.pop %v2935
        %v2937 = vmul.f32 %v2902, 1.442695
        %v2938 = vpow.pop %v2937
        %v2939 = vmul.f32 %v2903, 1.442695
        %v2940 = vpow.pop %v2939
        %v2941 = vmul.f32 %v2904, 1.442695
        %v2942 = vpow.pop %v2941
        %v2943 = vmul.f32 %v2905, 1.442695
        %v2944 = vpow.pop %v2943
        %v2945 = vmul.f32 %v2906, 1.442695
        %v2946 = vpow.pop %v2945
        %v2947 = vmul.f32 %v2907, 1.442695
        %v2948 = vpow.pop %v2947
        %v2949 = vmul.f32 %v2908, 1.442695
        %v2950 = vpow.pop %v2949
        %v2951 = vmul.f32 %v2909, 1.442695
        %v2952 = vpow.pop %v2951
        %v2953 = vmul.f32 %v2910, 1.442695
        %v2954 = vpow.pop %v2953
        %v2955 = vmul.f32 %v2911, 1.442695
        %v2956 = vpow.pop %v2955
        %v2957 = vmul.f32 %v2912, 1.442695
        %v2958 = vpow.pop %v2957
        %v2959 = vmul.f32 %v2913, 1.442695
        %v2960 = vpow.pop %v2959
        %v2961 = vmul.f32 %v2914, 1.442695
        %v2962 = vpow.pop %v2961
        %v2963 = vmul.f32 %v2915, 1.442695
        %v2964 = vpow.pop %v2963
        %v2965 = vmul.f32 %v2916, 1.442695
        %v2966 = vpow.pop %v2965
        %v2967 = vmul.f32 %v2917, 1.442695
        %v2968 = vpow.pop %v2967
        %v2969 = vmul.f32 %v2918, 1.442695
        %v2970 = vpow.pop %v2969
        %v2971 = vmul.f32 %v2919, 1.442695
        %v2972 = vpow.pop %v2971
        %v2973 = vmul.f32 %v2920, 1.442695
        %v2974 = vpow.pop %v2973
        %v2975 = vmul.f32 %v2921, 1.442695
        %v2976 = vpow.pop %v2975
        %v2977 = vmul.f32 %v2922, 1.442695
        %v2978 = vpow.pop %v2977
        %v2979 = vmul.f32 %v2923, 1.442695
        %v2980 = vpow.pop %v2979
        %v2981 = vmul.f32 %v2924, 1.442695
        %v2982 = vpow.pop %v2981
        %v2983 = vmul.f32 %v2925, 1.442695
        %v2984 = vpow.pop %v2983
        %v2985 = vmul.f32 %v2926, 1.442695
        %v2986 = vpow.pop %v2985
        %v2987 = vmul.f32 %v2927, 1.442695
        %v2988 = vpow.pop %v2987
        %v2989 = vmul.f32 %v2928, 1.442695
        %v2990 = vpow.pop %v2989
        %v2991 = vmul.f32 %v2929, 1.442695
        %v2992 = vpow.pop %v2991
        %v2993 = vmul.f32 %v2930, 1.442695
        %v2994 = vpow.pop %v2993
        %v2995 = vpack.c.bf16 %v2936, %v2932
        %v2996 = vpack.c.bf16 %v2938, %v2934
        %v2997 = vpack.c.bf16 %v2944, %v2940
        %v2998 = vpack.c.bf16 %v2946, %v2942
        %v2999 = vpack.c.bf16 %v2952, %v2948
        %v3000 = vpack.c.bf16 %v2954, %v2950
        %v3001 = vpack.c.bf16 %v2960, %v2956
        %v3002 = vpack.c.bf16 %v2962, %v2958
        %v3003 = vpack.c.bf16 %v2968, %v2964
        %v3004 = vpack.c.bf16 %v2970, %v2966
        %v3005 = vpack.c.bf16 %v2976, %v2972
        %v3006 = vpack.c.bf16 %v2978, %v2974
        %v3007 = vpack.c.bf16 %v2984, %v2980
        %v3008 = vpack.c.bf16 %v2986, %v2982
        %v3009 = vpack.c.bf16 %v2992, %v2988
        %v3010 = vpack.c.bf16 %v2994, %v2990
        %3011 = vmatprep.subr.bf16.mxu0 %v2996
        %3012 = vmatpush1.bf16.xpose.msra.mxu0 %v2995
        %3013 = vmatprep.subr.bf16.mxu0 %v2998
        %3014 = vmatpush1.bf16.xpose.msra.mxu0 %v2997
        %3015 = vmatprep.subr.bf16.mxu0 %v3000
        %3016 = vmatpush1.bf16.xpose.msra.mxu0 %v2999
        %3017 = vmatprep.subr.bf16.mxu0 %v3002
        %3018 = vmatpush1.bf16.xpose.msra.mxu0 %v3001
        %3019 = vmatprep.subr.bf16.mxu0 %v3004
        %3020 = vmatpush1.bf16.xpose.msra.mxu0 %v3003
        %3021 = vmatprep.subr.bf16.mxu0 %v3006
        %3022 = vmatpush1.bf16.xpose.msra.mxu0 %v3005
        %3023 = vmatprep.subr.bf16.mxu0 %v3008
        %3024 = vmatpush1.bf16.xpose.msra.mxu0 %v3007
        %3025 = vmatprep.subr.bf16.mxu0 %v3010
        %3026 = vmatpush1.bf16.xpose.msra.mxu0 %v3009
        %3027 = vmatprep.subr.bf16.mxu0 0
        %3028 = vmatpush1.bf16.xpose.msra.mxu0 0
        %3029 = vmatprep.subr.bf16.mxu0 0
        %3030 = vmatpush1.bf16.xpose.msra.mxu0 0
        %3031 = vmatprep.subr.bf16.mxu0 0
        %3032 = vmatpush1.bf16.xpose.msra.mxu0 0
        %3033 = vmatprep.subr.bf16.mxu0 0
        %3034 = vmatpush1.bf16.xpose.msra.mxu0 0
        %3035 = vmatprep.subr.bf16.mxu0 0
        %3036 = vmatpush1.bf16.xpose.msra.mxu0 0
        %3037 = vmatprep.subr.bf16.mxu0 0
        %3038 = vmatpush1.bf16.xpose.msra.mxu0 0
        %3039 = vmatprep.subr.bf16.mxu0 0
        %3040 = vmatpush1.bf16.xpose.msra.mxu0 0
        %3041 = vmatprep.subr.bf16.mxu0 0
        %3042 = vmatpush1.bf16.xpose.msra.mxu0 0
        %3043 = vmatprep.mubr.bf16.mxu0 1065369472
        %3044 = vmatmul.mubr.bf16.gmra.mrb[0].mxu0 1065369472
        %v3045 = vpop.f32.mrb[0].mxu0
        %v3046 = vadd.f32 0.0, %v3045
        %v3047 = vpop.f32.mrb[0].mxu0
        %v3048 = vpop.f32.mrb[0].mxu0
        %v3049 = vpop.f32.mrb[0].mxu0
        %3050 = vdwg.mxu0
        %3051 = vmatprep.subr.bf16.mxu0 %v2996
        %3052 = vmatpush1.bf16.xpose.msra.mxu0 %v2995
        %3053 = vmatprep.subr.bf16.mxu0 %v2998
        %3054 = vmatpush1.bf16.xpose.msra.mxu0 %v2997
        %3055 = vmatprep.subr.bf16.mxu0 %v3000
        %3056 = vmatpush1.bf16.xpose.msra.mxu0 %v2999
        %3057 = vmatprep.subr.bf16.mxu0 %v3002
        %3058 = vmatpush1.bf16.xpose.msra.mxu0 %v3001
        %3059 = vmatprep.subr.bf16.mxu0 %v3004
        %3060 = vmatpush1.bf16.xpose.msra.mxu0 %v3003
        %3061 = vmatprep.subr.bf16.mxu0 %v3006
        %3062 = vmatpush1.bf16.xpose.msra.mxu0 %v3005
        %3063 = vmatprep.subr.bf16.mxu0 %v3008
        %3064 = vmatpush1.bf16.xpose.msra.mxu0 %v3007
        %3065 = vmatprep.subr.bf16.mxu0 %v3010
        %3066 = vmatpush1.bf16.xpose.msra.mxu0 %v3009
        %3067 = vmatprep.subr.bf16.mxu0 0
        %3068 = vmatpush1.bf16.xpose.msra.mxu0 0
        %3069 = vmatprep.subr.bf16.mxu0 0
        %3070 = vmatpush1.bf16.xpose.msra.mxu0 0
        %3071 = vmatprep.subr.bf16.mxu0 0
        %3072 = vmatpush1.bf16.xpose.msra.mxu0 0
        %3073 = vmatprep.subr.bf16.mxu0 0
        %3074 = vmatpush1.bf16.xpose.msra.mxu0 0
        %3075 = vmatprep.subr.bf16.mxu0 0
        %3076 = vmatpush1.bf16.xpose.msra.mxu0 0
        %3077 = vmatprep.subr.bf16.mxu0 0
        %3078 = vmatpush1.bf16.xpose.msra.mxu0 0
        %3079 = vmatprep.subr.bf16.mxu0 0
        %3080 = vmatpush1.bf16.xpose.msra.mxu0 0
        %3081 = vmatprep.subr.bf16.mxu0 0
        %3082 = vmatpush1.bf16.xpose.msra.mxu0 0
        %3083 = vmatprep.mubr.bf16.mxu0 %v1082
        %3084 = vmatmul.mubr.bf16.gmra.mrb[0].mxu0 %v1081
        %v3085 = vpop.f32.mrb[0].mxu0
        %v3086 = vadd.f32 0.0, %v3085
        %v3087 = vpop.f32.mrb[0].mxu0
        %v3088 = vpop.f32.mrb[0].mxu0
        %v3089 = vadd.f32 0.0, %v3088
        %v3090 = vpop.f32.mrb[0].mxu0
        %3091 = vdwg.mxu0
        %v3092 = vrcp.pop %v3046
        %v3093 = vlaneseq
        %v3094 = vshrl.u32 %v3093, 7
        %v3095 = vsub.s32 0, %v3094
        %v3096 = vrot.slane %v3092, %v3095
        %v3097 = vmul.f32 %v3086, %v3096
        %v3098 = vmul.f32 %v3089, %v3096
        %v3099 = vpack.c.bf16 %v3098, %v3097
        %3100 = vxpose.xlu0.c.b16.start [1/8] %v637, 128
        %3101 = vxpose.xlu0.c.b16.cont [2/8] 0, 128
        %3102 = vxpose.xlu0.c.b16.cont [3/8] 0, 128
        %3103 = vxpose.xlu0.c.b16.cont [4/8] 0, 128
        %3104 = vxpose.xlu0.c.b16.cont [5/8] 0, 128
        %3105 = vxpose.xlu0.c.b16.cont [6/8] 0, 128
        %3106 = vxpose.xlu0.c.b16.cont [7/8] 0, 128
        %3107 = vxpose.xlu0.c.b16.end [8/8] 0, 128
        %v3108 = vpop.trf.xlu0
        %v3109 = vpop.trf.xlu0
        %v3110 = vpop.trf.xlu0
        %v3111 = vpop.trf.xlu0
        %v3112 = vpop.trf.xlu0
        %v3113 = vpop.trf.xlu0
        %v3114 = vpop.trf.xlu0
        %v3115 = vpop.trf.xlu0
        %v3117 = vsel %vm1105, %v3108, 0
        %v3120 = vsel %vm1105, %v3109, 0
        %v3123 = vsel %vm1105, %v3110, 0
        %v3126 = vsel %vm1105, %v3111, 0
        %v3129 = vsel %vm1105, %v3112, 0
        %v3132 = vsel %vm1105, %v3113, 0
        %v3135 = vsel %vm1105, %v3114, 0
        %v3138 = vsel %vm1105, %v3115, 0
        %3140 = vmatprep.subr.bf16.mxu0 %v1068
        %3141 = vmatpush1.bf16.msra.mxu0 %v1067
        %3142 = vmatprep.subr.bf16.mxu0 0
        %3143 = vmatpush1.bf16.msra.mxu0 0
        %3144 = vmatprep.subr.bf16.mxu0 0
        %3145 = vmatpush1.bf16.msra.mxu0 0
        %3146 = vmatprep.subr.bf16.mxu0 0
        %3147 = vmatpush1.bf16.msra.mxu0 0
        %3148 = vmatprep.subr.bf16.mxu0 0
        %3149 = vmatpush1.bf16.msra.mxu0 0
        %3150 = vmatprep.subr.bf16.mxu0 0
        %3151 = vmatpush1.bf16.msra.mxu0 0
        %3152 = vmatprep.subr.bf16.mxu0 0
        %3153 = vmatpush1.bf16.msra.mxu0 0
        %3154 = vmatprep.subr.bf16.mxu0 0
        %3155 = vmatpush1.bf16.msra.mxu0 0
        %3156 = vmatprep.subr.bf16.mxu0 0
        %3157 = vmatpush1.bf16.msra.mxu0 0
        %3158 = vmatprep.subr.bf16.mxu0 0
        %3159 = vmatpush1.bf16.msra.mxu0 0
        %3160 = vmatprep.subr.bf16.mxu0 0
        %3161 = vmatpush1.bf16.msra.mxu0 0
        %3162 = vmatprep.subr.bf16.mxu0 0
        %3163 = vmatpush1.bf16.msra.mxu0 0
        %3164 = vmatprep.subr.bf16.mxu0 0
        %3165 = vmatpush1.bf16.msra.mxu0 0
        %3166 = vmatprep.subr.bf16.mxu0 0
        %3167 = vmatpush1.bf16.msra.mxu0 0
        %3168 = vmatprep.subr.bf16.mxu0 0
        %3169 = vmatpush1.bf16.msra.mxu0 0
        %3170 = vmatprep.subr.bf16.mxu0 0
        %3171 = vmatpush1.bf16.msra.mxu0 0
        %3172 = vmatprep.mubr.bf16.mxu0 0
        %3173 = vmatmul.mubr.bf16.gmra.mrb[0].mxu0 %v3117
        %v3174 = vpop.f32.mrb[0].mxu0
        %v3175 = vadd.f32 0.0, %v3174
        %v3176 = vpop.f32.mrb[0].mxu0
        %v3177 = vadd.f32 0.0, %v3176
        %v3178 = vpop.f32.mrb[0].mxu0
        %v3179 = vadd.f32 0.0, %v3178
        %v3180 = vpop.f32.mrb[0].mxu0
        %v3181 = vadd.f32 0.0, %v3180
        %3182 = vmatprep.mubr.bf16.mxu0 0
        %3183 = vmatmul.mubr.bf16.gmra.mrb[0].mxu0 %v3120
        %v3184 = vpop.f32.mrb[0].mxu0
        %v3185 = vadd.f32 0.0, %v3184
        %v3186 = vpop.f32.mrb[0].mxu0
        %v3187 = vadd.f32 0.0, %v3186
        %v3188 = vpop.f32.mrb[0].mxu0
        %v3189 = vadd.f32 0.0, %v3188
        %v3190 = vpop.f32.mrb[0].mxu0
        %v3191 = vadd.f32 0.0, %v3190
        %3192 = vmatprep.mubr.bf16.mxu0 0
        %3193 = vmatmul.mubr.bf16.gmra.mrb[0].mxu0 %v3123
        %v3194 = vpop.f32.mrb[0].mxu0
        %v3195 = vadd.f32 0.0, %v3194
        %v3196 = vpop.f32.mrb[0].mxu0
        %v3197 = vadd.f32 0.0, %v3196
        %v3198 = vpop.f32.mrb[0].mxu0
        %v3199 = vadd.f32 0.0, %v3198
        %v3200 = vpop.f32.mrb[0].mxu0
        %v3201 = vadd.f32 0.0, %v3200
        %3202 = vmatprep.mubr.bf16.mxu0 0
        %3203 = vmatmul.mubr.bf16.gmra.mrb[0].mxu0 %v3126
        %v3204 = vpop.f32.mrb[0].mxu0
        %v3205 = vadd.f32 0.0, %v3204
        %v3206 = vpop.f32.mrb[0].mxu0
        %v3207 = vadd.f32 0.0, %v3206
        %v3208 = vpop.f32.mrb[0].mxu0
        %v3209 = vadd.f32 0.0, %v3208
        %v3210 = vpop.f32.mrb[0].mxu0
        %v3211 = vadd.f32 0.0, %v3210
        %3212 = vmatprep.mubr.bf16.mxu0 0
        %3213 = vmatmul.mubr.bf16.gmra.mrb[0].mxu0 %v3129
        %v3214 = vpop.f32.mrb[0].mxu0
        %v3215 = vadd.f32 0.0, %v3214
        %v3216 = vpop.f32.mrb[0].mxu0
        %v3217 = vadd.f32 0.0, %v3216
        %v3218 = vpop.f32.mrb[0].mxu0
        %v3219 = vadd.f32 0.0, %v3218
        %v3220 = vpop.f32.mrb[0].mxu0
        %v3221 = vadd.f32 0.0, %v3220
        %3222 = vmatprep.mubr.bf16.mxu0 0
        %3223 = vmatmul.mubr.bf16.gmra.mrb[0].mxu0 %v3132
        %v3224 = vpop.f32.mrb[0].mxu0
        %v3225 = vadd.f32 0.0, %v3224
        %v3226 = vpop.f32.mrb[0].mxu0
        %v3227 = vadd.f32 0.0, %v3226
        %v3228 = vpop.f32.mrb[0].mxu0
        %v3229 = vadd.f32 0.0, %v3228
        %v3230 = vpop.f32.mrb[0].mxu0
        %v3231 = vadd.f32 0.0, %v3230
        %3232 = vmatprep.mubr.bf16.mxu0 0
        %3233 = vmatmul.mubr.bf16.gmra.mrb[0].mxu0 %v3135
        %v3234 = vpop.f32.mrb[0].mxu0
        %v3235 = vadd.f32 0.0, %v3234
        %v3236 = vpop.f32.mrb[0].mxu0
        %v3237 = vadd.f32 0.0, %v3236
        %v3238 = vpop.f32.mrb[0].mxu0
        %v3239 = vadd.f32 0.0, %v3238
        %v3240 = vpop.f32.mrb[0].mxu0
        %v3241 = vadd.f32 0.0, %v3240
        %3242 = vmatprep.mubr.bf16.mxu0 0
        %3243 = vmatmul.mubr.bf16.gmra.mrb[0].mxu0 %v3138
        %v3244 = vpop.f32.mrb[0].mxu0
        %v3245 = vadd.f32 0.0, %v3244
        %v3246 = vpop.f32.mrb[0].mxu0
        %v3247 = vadd.f32 0.0, %v3246
        %v3248 = vpop.f32.mrb[0].mxu0
        %v3249 = vadd.f32 0.0, %v3248
        %v3250 = vpop.f32.mrb[0].mxu0
        %v3251 = vadd.f32 0.0, %v3250
        %3252 = vdwg.mxu0
        %v3253 = vmax.f32 %v3175, %v3177
        %3254 = vmax.xlane.f32.xlu0 %v3253
        %v3255 = vpop.xlane.xlu0 %3254
        %v3256 = vmax.f32 %v3179, %v3181
        %3257 = vmax.xlane.f32.xlu0 %v3256
        %v3258 = vpop.xlane.xlu0 %3257
        %v3259 = vmax.f32 %v3185, %v3187
        %3260 = vmax.xlane.f32.xlu0 %v3259
        %v3261 = vpop.xlane.xlu0 %3260
        %v3262 = vmax.f32 %v3189, %v3191
        %3263 = vmax.xlane.f32.xlu0 %v3262
        %v3264 = vpop.xlane.xlu0 %3263
        %v3265 = vmax.f32 %v3195, %v3197
        %3266 = vmax.xlane.f32.xlu0 %v3265
        %v3267 = vpop.xlane.xlu0 %3266
        %v3268 = vmax.f32 %v3199, %v3201
        %3269 = vmax.xlane.f32.xlu0 %v3268
        %v3270 = vpop.xlane.xlu0 %3269
        %v3271 = vmax.f32 %v3205, %v3207
        %3272 = vmax.xlane.f32.xlu0 %v3271
        %v3273 = vpop.xlane.xlu0 %3272
        %v3274 = vmax.f32 %v3209, %v3211
        %3275 = vmax.xlane.f32.xlu0 %v3274
        %v3276 = vpop.xlane.xlu0 %3275
        %v3277 = vmax.f32 %v3215, %v3217
        %3278 = vmax.xlane.f32.xlu0 %v3277
        %v3279 = vpop.xlane.xlu0 %3278
        %v3280 = vmax.f32 %v3219, %v3221
        %3281 = vmax.xlane.f32.xlu0 %v3280
        %v3282 = vpop.xlane.xlu0 %3281
        %v3283 = vmax.f32 %v3225, %v3227
        %3284 = vmax.xlane.f32.xlu0 %v3283
        %v3285 = vpop.xlane.xlu0 %3284
        %v3286 = vmax.f32 %v3229, %v3231
        %3287 = vmax.xlane.f32.xlu0 %v3286
        %v3288 = vpop.xlane.xlu0 %3287
        %v3289 = vmax.f32 %v3235, %v3237
        %3290 = vmax.xlane.f32.xlu0 %v3289
        %v3291 = vpop.xlane.xlu0 %3290
        %v3292 = vmax.f32 %v3239, %v3241
        %3293 = vmax.xlane.f32.xlu0 %v3292
        %v3294 = vpop.xlane.xlu0 %3293
        %v3295 = vmax.f32 %v3245, %v3247
        %3296 = vmax.xlane.f32.xlu0 %v3295
        %v3297 = vpop.xlane.xlu0 %3296
        %v3298 = vmax.f32 %v3249, %v3251
        %3299 = vmax.xlane.f32.xlu0 %v3298
        %v3300 = vpop.xlane.xlu0 %3299
        %v3301 = vsub.f32 %v3175, %v3255
        %v3302 = vsub.f32 %v3177, %v3255
        %v3303 = vsub.f32 %v3179, %v3258
        %v3304 = vsub.f32 %v3181, %v3258
        %v3305 = vsub.f32 %v3185, %v3261
        %v3306 = vsub.f32 %v3187, %v3261
        %v3307 = vsub.f32 %v3189, %v3264
        %v3308 = vsub.f32 %v3191, %v3264
        %v3309 = vsub.f32 %v3195, %v3267
        %v3310 = vsub.f32 %v3197, %v3267
        %v3311 = vsub.f32 %v3199, %v3270
        %v3312 = vsub.f32 %v3201, %v3270
        %v3313 = vsub.f32 %v3205, %v3273
        %v3314 = vsub.f32 %v3207, %v3273
        %v3315 = vsub.f32 %v3209, %v3276
        %v3316 = vsub.f32 %v3211, %v3276
        %v3317 = vsub.f32 %v3215, %v3279
        %v3318 = vsub.f32 %v3217, %v3279
        %v3319 = vsub.f32 %v3219, %v3282
        %v3320 = vsub.f32 %v3221, %v3282
        %v3321 = vsub.f32 %v3225, %v3285
        %v3322 = vsub.f32 %v3227, %v3285
        %v3323 = vsub.f32 %v3229, %v3288
        %v3324 = vsub.f32 %v3231, %v3288
        %v3325 = vsub.f32 %v3235, %v3291
        %v3326 = vsub.f32 %v3237, %v3291
        %v3327 = vsub.f32 %v3239, %v3294
        %v3328 = vsub.f32 %v3241, %v3294
        %v3329 = vsub.f32 %v3245, %v3297
        %v3330 = vsub.f32 %v3247, %v3297
        %v3331 = vsub.f32 %v3249, %v3300
        %v3332 = vsub.f32 %v3251, %v3300
        %v3333 = vmul.f32 %v3301, 1.442695
        %v3334 = vpow.pop %v3333
        %v3335 = vmul.f32 %v3302, 1.442695
        %v3336 = vpow.pop %v3335
        %v3337 = vmul.f32 %v3303, 1.442695
        %v3338 = vpow.pop %v3337
        %v3339 = vmul.f32 %v3304, 1.442695
        %v3340 = vpow.pop %v3339
        %v3341 = vmul.f32 %v3305, 1.442695
        %v3342 = vpow.pop %v3341
        %v3343 = vmul.f32 %v3306, 1.442695
        %v3344 = vpow.pop %v3343
        %v3345 = vmul.f32 %v3307, 1.442695
        %v3346 = vpow.pop %v3345
        %v3347 = vmul.f32 %v3308, 1.442695
        %v3348 = vpow.pop %v3347
        %v3349 = vmul.f32 %v3309, 1.442695
        %v3350 = vpow.pop %v3349
        %v3351 = vmul.f32 %v3310, 1.442695
        %v3352 = vpow.pop %v3351
        %v3353 = vmul.f32 %v3311, 1.442695
        %v3354 = vpow.pop %v3353
        %v3355 = vmul.f32 %v3312, 1.442695
        %v3356 = vpow.pop %v3355
        %v3357 = vmul.f32 %v3313, 1.442695
        %v3358 = vpow.pop %v3357
        %v3359 = vmul.f32 %v3314, 1.442695
        %v3360 = vpow.pop %v3359
        %v3361 = vmul.f32 %v3315, 1.442695
        %v3362 = vpow.pop %v3361
        %v3363 = vmul.f32 %v3316, 1.442695
        %v3364 = vpow.pop %v3363
        %v3365 = vmul.f32 %v3317, 1.442695
        %v3366 = vpow.pop %v3365
        %v3367 = vmul.f32 %v3318, 1.442695
        %v3368 = vpow.pop %v3367
        %v3369 = vmul.f32 %v3319, 1.442695
        %v3370 = vpow.pop %v3369
        %v3371 = vmul.f32 %v3320, 1.442695
        %v3372 = vpow.pop %v3371
        %v3373 = vmul.f32 %v3321, 1.442695
        %v3374 = vpow.pop %v3373
        %v3375 = vmul.f32 %v3322, 1.442695
        %v3376 = vpow.pop %v3375
        %v3377 = vmul.f32 %v3323, 1.442695
        %v3378 = vpow.pop %v3377
        %v3379 = vmul.f32 %v3324, 1.442695
        %v3380 = vpow.pop %v3379
        %v3381 = vmul.f32 %v3325, 1.442695
        %v3382 = vpow.pop %v3381
        %v3383 = vmul.f32 %v3326, 1.442695
        %v3384 = vpow.pop %v3383
        %v3385 = vmul.f32 %v3327, 1.442695
        %v3386 = vpow.pop %v3385
        %v3387 = vmul.f32 %v3328, 1.442695
        %v3388 = vpow.pop %v3387
        %v3389 = vmul.f32 %v3329, 1.442695
        %v3390 = vpow.pop %v3389
        %v3391 = vmul.f32 %v3330, 1.442695
        %v3392 = vpow.pop %v3391
        %v3393 = vmul.f32 %v3331, 1.442695
        %v3394 = vpow.pop %v3393
        %v3395 = vmul.f32 %v3332, 1.442695
        %v3396 = vpow.pop %v3395
        %v3397 = vpack.c.bf16 %v3338, %v3334
        %v3398 = vpack.c.bf16 %v3340, %v3336
        %v3399 = vpack.c.bf16 %v3346, %v3342
        %v3400 = vpack.c.bf16 %v3348, %v3344
        %v3401 = vpack.c.bf16 %v3354, %v3350
        %v3402 = vpack.c.bf16 %v3356, %v3352
        %v3403 = vpack.c.bf16 %v3362, %v3358
        %v3404 = vpack.c.bf16 %v3364, %v3360
        %v3405 = vpack.c.bf16 %v3370, %v3366
        %v3406 = vpack.c.bf16 %v3372, %v3368
        %v3407 = vpack.c.bf16 %v3378, %v3374
        %v3408 = vpack.c.bf16 %v3380, %v3376
        %v3409 = vpack.c.bf16 %v3386, %v3382
        %v3410 = vpack.c.bf16 %v3388, %v3384
        %v3411 = vpack.c.bf16 %v3394, %v3390
        %v3412 = vpack.c.bf16 %v3396, %v3392
        %3413 = vmatprep.subr.bf16.mxu0 %v3398
        %3414 = vmatpush1.bf16.xpose.msra.mxu0 %v3397
        %3415 = vmatprep.subr.bf16.mxu0 %v3400
        %3416 = vmatpush1.bf16.xpose.msra.mxu0 %v3399
        %3417 = vmatprep.subr.bf16.mxu0 %v3402
        %3418 = vmatpush1.bf16.xpose.msra.mxu0 %v3401
        %3419 = vmatprep.subr.bf16.mxu0 %v3404
        %3420 = vmatpush1.bf16.xpose.msra.mxu0 %v3403
        %3421 = vmatprep.subr.bf16.mxu0 %v3406
        %3422 = vmatpush1.bf16.xpose.msra.mxu0 %v3405
        %3423 = vmatprep.subr.bf16.mxu0 %v3408
        %3424 = vmatpush1.bf16.xpose.msra.mxu0 %v3407
        %3425 = vmatprep.subr.bf16.mxu0 %v3410
        %3426 = vmatpush1.bf16.xpose.msra.mxu0 %v3409
        %3427 = vmatprep.subr.bf16.mxu0 %v3412
        %3428 = vmatpush1.bf16.xpose.msra.mxu0 %v3411
        %3429 = vmatprep.subr.bf16.mxu0 0
        %3430 = vmatpush1.bf16.xpose.msra.mxu0 0
        %3431 = vmatprep.subr.bf16.mxu0 0
        %3432 = vmatpush1.bf16.xpose.msra.mxu0 0
        %3433 = vmatprep.subr.bf16.mxu0 0
        %3434 = vmatpush1.bf16.xpose.msra.mxu0 0
        %3435 = vmatprep.subr.bf16.mxu0 0
        %3436 = vmatpush1.bf16.xpose.msra.mxu0 0
        %3437 = vmatprep.subr.bf16.mxu0 0
        %3438 = vmatpush1.bf16.xpose.msra.mxu0 0
        %3439 = vmatprep.subr.bf16.mxu0 0
        %3440 = vmatpush1.bf16.xpose.msra.mxu0 0
        %3441 = vmatprep.subr.bf16.mxu0 0
        %3442 = vmatpush1.bf16.xpose.msra.mxu0 0
        %3443 = vmatprep.subr.bf16.mxu0 0
        %3444 = vmatpush1.bf16.xpose.msra.mxu0 0
        %3445 = vmatprep.mubr.bf16.mxu0 1065369472
        %3446 = vmatmul.mubr.bf16.gmra.mrb[0].mxu0 1065369472
        %v3447 = vpop.f32.mrb[0].mxu0
        %v3448 = vadd.f32 0.0, %v3447
        %v3449 = vpop.f32.mrb[0].mxu0
        %v3450 = vpop.f32.mrb[0].mxu0
        %v3451 = vpop.f32.mrb[0].mxu0
        %3452 = vdwg.mxu0
        %3453 = vmatprep.subr.bf16.mxu0 %v3398
        %3454 = vmatpush1.bf16.xpose.msra.mxu0 %v3397
        %3455 = vmatprep.subr.bf16.mxu0 %v3400
        %3456 = vmatpush1.bf16.xpose.msra.mxu0 %v3399
        %3457 = vmatprep.subr.bf16.mxu0 %v3402
        %3458 = vmatpush1.bf16.xpose.msra.mxu0 %v3401
        %3459 = vmatprep.subr.bf16.mxu0 %v3404
        %3460 = vmatpush1.bf16.xpose.msra.mxu0 %v3403
        %3461 = vmatprep.subr.bf16.mxu0 %v3406
        %3462 = vmatpush1.bf16.xpose.msra.mxu0 %v3405
        %3463 = vmatprep.subr.bf16.mxu0 %v3408
        %3464 = vmatpush1.bf16.xpose.msra.mxu0 %v3407
        %3465 = vmatprep.subr.bf16.mxu0 %v3410
        %3466 = vmatpush1.bf16.xpose.msra.mxu0 %v3409
        %3467 = vmatprep.subr.bf16.mxu0 %v3412
        %3468 = vmatpush1.bf16.xpose.msra.mxu0 %v3411
        %3469 = vmatprep.subr.bf16.mxu0 0
        %3470 = vmatpush1.bf16.xpose.msra.mxu0 0
        %3471 = vmatprep.subr.bf16.mxu0 0
        %3472 = vmatpush1.bf16.xpose.msra.mxu0 0
        %3473 = vmatprep.subr.bf16.mxu0 0
        %3474 = vmatpush1.bf16.xpose.msra.mxu0 0
        %3475 = vmatprep.subr.bf16.mxu0 0
        %3476 = vmatpush1.bf16.xpose.msra.mxu0 0
        %3477 = vmatprep.subr.bf16.mxu0 0
        %3478 = vmatpush1.bf16.xpose.msra.mxu0 0
        %3479 = vmatprep.subr.bf16.mxu0 0
        %3480 = vmatpush1.bf16.xpose.msra.mxu0 0
        %3481 = vmatprep.subr.bf16.mxu0 0
        %3482 = vmatpush1.bf16.xpose.msra.mxu0 0
        %3483 = vmatprep.subr.bf16.mxu0 0
        %3484 = vmatpush1.bf16.xpose.msra.mxu0 0
        %3485 = vmatprep.mubr.bf16.mxu0 %v1084
        %3486 = vmatmul.mubr.bf16.gmra.mrb[0].mxu0 %v1083
        %v3487 = vpop.f32.mrb[0].mxu0
        %v3488 = vadd.f32 0.0, %v3487
        %v3489 = vpop.f32.mrb[0].mxu0
        %v3490 = vpop.f32.mrb[0].mxu0
        %v3491 = vadd.f32 0.0, %v3490
        %v3492 = vpop.f32.mrb[0].mxu0
        %3493 = vdwg.mxu0
        %v3494 = vrcp.pop %v3448
        %v3495 = vlaneseq
        %v3496 = vshrl.u32 %v3495, 7
        %v3497 = vsub.s32 0, %v3496
        %v3498 = vrot.slane %v3494, %v3497
        %v3499 = vmul.f32 %v3488, %v3498
        %v3500 = vmul.f32 %v3491, %v3498
        %v3501 = vpack.c.bf16 %v3500, %v3499
        %3502 = vxpose.xlu0.c.b16.start [1/8] %v638, 128
        %3503 = vxpose.xlu0.c.b16.cont [2/8] 0, 128
        %3504 = vxpose.xlu0.c.b16.cont [3/8] 0, 128
        %3505 = vxpose.xlu0.c.b16.cont [4/8] 0, 128
        %3506 = vxpose.xlu0.c.b16.cont [5/8] 0, 128
        %3507 = vxpose.xlu0.c.b16.cont [6/8] 0, 128
        %3508 = vxpose.xlu0.c.b16.cont [7/8] 0, 128
        %3509 = vxpose.xlu0.c.b16.end [8/8] 0, 128
        %v3510 = vpop.trf.xlu0
        %v3511 = vpop.trf.xlu0
        %v3512 = vpop.trf.xlu0
        %v3513 = vpop.trf.xlu0
        %v3514 = vpop.trf.xlu0
        %v3515 = vpop.trf.xlu0
        %v3516 = vpop.trf.xlu0
        %v3517 = vpop.trf.xlu0
        %v3519 = vsel %vm1105, %v3510, 0
        %v3522 = vsel %vm1105, %v3511, 0
        %v3525 = vsel %vm1105, %v3512, 0
        %v3528 = vsel %vm1105, %v3513, 0
        %v3531 = vsel %vm1105, %v3514, 0
        %v3534 = vsel %vm1105, %v3515, 0
        %v3537 = vsel %vm1105, %v3516, 0
        %v3540 = vsel %vm1105, %v3517, 0
        %3542 = vmatprep.subr.bf16.mxu0 %v1070
        %3543 = vmatpush1.bf16.msra.mxu0 %v1069
        %3544 = vmatprep.subr.bf16.mxu0 0
        %3545 = vmatpush1.bf16.msra.mxu0 0
        %3546 = vmatprep.subr.bf16.mxu0 0
        %3547 = vmatpush1.bf16.msra.mxu0 0
        %3548 = vmatprep.subr.bf16.mxu0 0
        %3549 = vmatpush1.bf16.msra.mxu0 0
        %3550 = vmatprep.subr.bf16.mxu0 0
        %3551 = vmatpush1.bf16.msra.mxu0 0
        %3552 = vmatprep.subr.bf16.mxu0 0
        %3553 = vmatpush1.bf16.msra.mxu0 0
        %3554 = vmatprep.subr.bf16.mxu0 0
        %3555 = vmatpush1.bf16.msra.mxu0 0
        %3556 = vmatprep.subr.bf16.mxu0 0
        %3557 = vmatpush1.bf16.msra.mxu0 0
        %3558 = vmatprep.subr.bf16.mxu0 0
        %3559 = vmatpush1.bf16.msra.mxu0 0
        %3560 = vmatprep.subr.bf16.mxu0 0
        %3561 = vmatpush1.bf16.msra.mxu0 0
        %3562 = vmatprep.subr.bf16.mxu0 0
        %3563 = vmatpush1.bf16.msra.mxu0 0
        %3564 = vmatprep.subr.bf16.mxu0 0
        %3565 = vmatpush1.bf16.msra.mxu0 0
        %3566 = vmatprep.subr.bf16.mxu0 0
        %3567 = vmatpush1.bf16.msra.mxu0 0
        %3568 = vmatprep.subr.bf16.mxu0 0
        %3569 = vmatpush1.bf16.msra.mxu0 0
        %3570 = vmatprep.subr.bf16.mxu0 0
        %3571 = vmatpush1.bf16.msra.mxu0 0
        %3572 = vmatprep.subr.bf16.mxu0 0
        %3573 = vmatpush1.bf16.msra.mxu0 0
        %3574 = vmatprep.mubr.bf16.mxu0 0
        %3575 = vmatmul.mubr.bf16.gmra.mrb[0].mxu0 %v3519
        %v3576 = vpop.f32.mrb[0].mxu0
        %v3577 = vadd.f32 0.0, %v3576
        %v3578 = vpop.f32.mrb[0].mxu0
        %v3579 = vadd.f32 0.0, %v3578
        %v3580 = vpop.f32.mrb[0].mxu0
        %v3581 = vadd.f32 0.0, %v3580
        %v3582 = vpop.f32.mrb[0].mxu0
        %v3583 = vadd.f32 0.0, %v3582
        %3584 = vmatprep.mubr.bf16.mxu0 0
        %3585 = vmatmul.mubr.bf16.gmra.mrb[0].mxu0 %v3522
        %v3586 = vpop.f32.mrb[0].mxu0
        %v3587 = vadd.f32 0.0, %v3586
        %v3588 = vpop.f32.mrb[0].mxu0
        %v3589 = vadd.f32 0.0, %v3588
        %v3590 = vpop.f32.mrb[0].mxu0
        %v3591 = vadd.f32 0.0, %v3590
        %v3592 = vpop.f32.mrb[0].mxu0
        %v3593 = vadd.f32 0.0, %v3592
        %3594 = vmatprep.mubr.bf16.mxu0 0
        %3595 = vmatmul.mubr.bf16.gmra.mrb[0].mxu0 %v3525
        %v3596 = vpop.f32.mrb[0].mxu0
        %v3597 = vadd.f32 0.0, %v3596
        %v3598 = vpop.f32.mrb[0].mxu0
        %v3599 = vadd.f32 0.0, %v3598
        %v3600 = vpop.f32.mrb[0].mxu0
        %v3601 = vadd.f32 0.0, %v3600
        %v3602 = vpop.f32.mrb[0].mxu0
        %v3603 = vadd.f32 0.0, %v3602
        %3604 = vmatprep.mubr.bf16.mxu0 0
        %3605 = vmatmul.mubr.bf16.gmra.mrb[0].mxu0 %v3528
        %v3606 = vpop.f32.mrb[0].mxu0
        %v3607 = vadd.f32 0.0, %v3606
        %v3608 = vpop.f32.mrb[0].mxu0
        %v3609 = vadd.f32 0.0, %v3608
        %v3610 = vpop.f32.mrb[0].mxu0
        %v3611 = vadd.f32 0.0, %v3610
        %v3612 = vpop.f32.mrb[0].mxu0
        %v3613 = vadd.f32 0.0, %v3612
        %3614 = vmatprep.mubr.bf16.mxu0 0
        %3615 = vmatmul.mubr.bf16.gmra.mrb[0].mxu0 %v3531
        %v3616 = vpop.f32.mrb[0].mxu0
        %v3617 = vadd.f32 0.0, %v3616
        %v3618 = vpop.f32.mrb[0].mxu0
        %v3619 = vadd.f32 0.0, %v3618
        %v3620 = vpop.f32.mrb[0].mxu0
        %v3621 = vadd.f32 0.0, %v3620
        %v3622 = vpop.f32.mrb[0].mxu0
        %v3623 = vadd.f32 0.0, %v3622
        %3624 = vmatprep.mubr.bf16.mxu0 0
        %3625 = vmatmul.mubr.bf16.gmra.mrb[0].mxu0 %v3534
        %v3626 = vpop.f32.mrb[0].mxu0
        %v3627 = vadd.f32 0.0, %v3626
        %v3628 = vpop.f32.mrb[0].mxu0
        %v3629 = vadd.f32 0.0, %v3628
        %v3630 = vpop.f32.mrb[0].mxu0
        %v3631 = vadd.f32 0.0, %v3630
        %v3632 = vpop.f32.mrb[0].mxu0
        %v3633 = vadd.f32 0.0, %v3632
        %3634 = vmatprep.mubr.bf16.mxu0 0
        %3635 = vmatmul.mubr.bf16.gmra.mrb[0].mxu0 %v3537
        %v3636 = vpop.f32.mrb[0].mxu0
        %v3637 = vadd.f32 0.0, %v3636
        %v3638 = vpop.f32.mrb[0].mxu0
        %v3639 = vadd.f32 0.0, %v3638
        %v3640 = vpop.f32.mrb[0].mxu0
        %v3641 = vadd.f32 0.0, %v3640
        %v3642 = vpop.f32.mrb[0].mxu0
        %v3643 = vadd.f32 0.0, %v3642
        %3644 = vmatprep.mubr.bf16.mxu0 0
        %3645 = vmatmul.mubr.bf16.gmra.mrb[0].mxu0 %v3540
        %v3646 = vpop.f32.mrb[0].mxu0
        %v3647 = vadd.f32 0.0, %v3646
        %v3648 = vpop.f32.mrb[0].mxu0
        %v3649 = vadd.f32 0.0, %v3648
        %v3650 = vpop.f32.mrb[0].mxu0
        %v3651 = vadd.f32 0.0, %v3650
        %v3652 = vpop.f32.mrb[0].mxu0
        %v3653 = vadd.f32 0.0, %v3652
        %3654 = vdwg.mxu0
        %v3655 = vmax.f32 %v3577, %v3579
        %3656 = vmax.xlane.f32.xlu0 %v3655
        %v3657 = vpop.xlane.xlu0 %3656
        %v3658 = vmax.f32 %v3581, %v3583
        %3659 = vmax.xlane.f32.xlu0 %v3658
        %v3660 = vpop.xlane.xlu0 %3659
        %v3661 = vmax.f32 %v3587, %v3589
        %3662 = vmax.xlane.f32.xlu0 %v3661
        %v3663 = vpop.xlane.xlu0 %3662
        %v3664 = vmax.f32 %v3591, %v3593
        %3665 = vmax.xlane.f32.xlu0 %v3664
        %v3666 = vpop.xlane.xlu0 %3665
        %v3667 = vmax.f32 %v3597, %v3599
        %3668 = vmax.xlane.f32.xlu0 %v3667
        %v3669 = vpop.xlane.xlu0 %3668
        %v3670 = vmax.f32 %v3601, %v3603
        %3671 = vmax.xlane.f32.xlu0 %v3670
        %v3672 = vpop.xlane.xlu0 %3671
        %v3673 = vmax.f32 %v3607, %v3609
        %3674 = vmax.xlane.f32.xlu0 %v3673
        %v3675 = vpop.xlane.xlu0 %3674
        %v3676 = vmax.f32 %v3611, %v3613
        %3677 = vmax.xlane.f32.xlu0 %v3676
        %v3678 = vpop.xlane.xlu0 %3677
        %v3679 = vmax.f32 %v3617, %v3619
        %3680 = vmax.xlane.f32.xlu0 %v3679
        %v3681 = vpop.xlane.xlu0 %3680
        %v3682 = vmax.f32 %v3621, %v3623
        %3683 = vmax.xlane.f32.xlu0 %v3682
        %v3684 = vpop.xlane.xlu0 %3683
        %v3685 = vmax.f32 %v3627, %v3629
        %3686 = vmax.xlane.f32.xlu0 %v3685
        %v3687 = vpop.xlane.xlu0 %3686
        %v3688 = vmax.f32 %v3631, %v3633
        %3689 = vmax.xlane.f32.xlu0 %v3688
        %v3690 = vpop.xlane.xlu0 %3689
        %v3691 = vmax.f32 %v3637, %v3639
        %3692 = vmax.xlane.f32.xlu0 %v3691
        %v3693 = vpop.xlane.xlu0 %3692
        %v3694 = vmax.f32 %v3641, %v3643
        %3695 = vmax.xlane.f32.xlu0 %v3694
        %v3696 = vpop.xlane.xlu0 %3695
        %v3697 = vmax.f32 %v3647, %v3649
        %3698 = vmax.xlane.f32.xlu0 %v3697
        %v3699 = vpop.xlane.xlu0 %3698
        %v3700 = vmax.f32 %v3651, %v3653
        %3701 = vmax.xlane.f32.xlu0 %v3700
        %v3702 = vpop.xlane.xlu0 %3701
        %v3703 = vsub.f32 %v3577, %v3657
        %v3704 = vsub.f32 %v3579, %v3657
        %v3705 = vsub.f32 %v3581, %v3660
        %v3706 = vsub.f32 %v3583, %v3660
        %v3707 = vsub.f32 %v3587, %v3663
        %v3708 = vsub.f32 %v3589, %v3663
        %v3709 = vsub.f32 %v3591, %v3666
        %v3710 = vsub.f32 %v3593, %v3666
        %v3711 = vsub.f32 %v3597, %v3669
        %v3712 = vsub.f32 %v3599, %v3669
        %v3713 = vsub.f32 %v3601, %v3672
        %v3714 = vsub.f32 %v3603, %v3672
        %v3715 = vsub.f32 %v3607, %v3675
        %v3716 = vsub.f32 %v3609, %v3675
        %v3717 = vsub.f32 %v3611, %v3678
        %v3718 = vsub.f32 %v3613, %v3678
        %v3719 = vsub.f32 %v3617, %v3681
        %v3720 = vsub.f32 %v3619, %v3681
        %v3721 = vsub.f32 %v3621, %v3684
        %v3722 = vsub.f32 %v3623, %v3684
        %v3723 = vsub.f32 %v3627, %v3687
        %v3724 = vsub.f32 %v3629, %v3687
        %v3725 = vsub.f32 %v3631, %v3690
        %v3726 = vsub.f32 %v3633, %v3690
        %v3727 = vsub.f32 %v3637, %v3693
        %v3728 = vsub.f32 %v3639, %v3693
        %v3729 = vsub.f32 %v3641, %v3696
        %v3730 = vsub.f32 %v3643, %v3696
        %v3731 = vsub.f32 %v3647, %v3699
        %v3732 = vsub.f32 %v3649, %v3699
        %v3733 = vsub.f32 %v3651, %v3702
        %v3734 = vsub.f32 %v3653, %v3702
        %v3735 = vmul.f32 %v3703, 1.442695
        %v3736 = vpow.pop %v3735
        %v3737 = vmul.f32 %v3704, 1.442695
        %v3738 = vpow.pop %v3737
        %v3739 = vmul.f32 %v3705, 1.442695
        %v3740 = vpow.pop %v3739
        %v3741 = vmul.f32 %v3706, 1.442695
        %v3742 = vpow.pop %v3741
        %v3743 = vmul.f32 %v3707, 1.442695
        %v3744 = vpow.pop %v3743
        %v3745 = vmul.f32 %v3708, 1.442695
        %v3746 = vpow.pop %v3745
        %v3747 = vmul.f32 %v3709, 1.442695
        %v3748 = vpow.pop %v3747
        %v3749 = vmul.f32 %v3710, 1.442695
        %v3750 = vpow.pop %v3749
        %v3751 = vmul.f32 %v3711, 1.442695
        %v3752 = vpow.pop %v3751
        %v3753 = vmul.f32 %v3712, 1.442695
        %v3754 = vpow.pop %v3753
        %v3755 = vmul.f32 %v3713, 1.442695
        %v3756 = vpow.pop %v3755
        %v3757 = vmul.f32 %v3714, 1.442695
        %v3758 = vpow.pop %v3757
        %v3759 = vmul.f32 %v3715, 1.442695
        %v3760 = vpow.pop %v3759
        %v3761 = vmul.f32 %v3716, 1.442695
        %v3762 = vpow.pop %v3761
        %v3763 = vmul.f32 %v3717, 1.442695
        %v3764 = vpow.pop %v3763
        %v3765 = vmul.f32 %v3718, 1.442695
        %v3766 = vpow.pop %v3765
        %v3767 = vmul.f32 %v3719, 1.442695
        %v3768 = vpow.pop %v3767
        %v3769 = vmul.f32 %v3720, 1.442695
        %v3770 = vpow.pop %v3769
        %v3771 = vmul.f32 %v3721, 1.442695
        %v3772 = vpow.pop %v3771
        %v3773 = vmul.f32 %v3722, 1.442695
        %v3774 = vpow.pop %v3773
        %v3775 = vmul.f32 %v3723, 1.442695
        %v3776 = vpow.pop %v3775
        %v3777 = vmul.f32 %v3724, 1.442695
        %v3778 = vpow.pop %v3777
        %v3779 = vmul.f32 %v3725, 1.442695
        %v3780 = vpow.pop %v3779
        %v3781 = vmul.f32 %v3726, 1.442695
        %v3782 = vpow.pop %v3781
        %v3783 = vmul.f32 %v3727, 1.442695
        %v3784 = vpow.pop %v3783
        %v3785 = vmul.f32 %v3728, 1.442695
        %v3786 = vpow.pop %v3785
        %v3787 = vmul.f32 %v3729, 1.442695
        %v3788 = vpow.pop %v3787
        %v3789 = vmul.f32 %v3730, 1.442695
        %v3790 = vpow.pop %v3789
        %v3791 = vmul.f32 %v3731, 1.442695
        %v3792 = vpow.pop %v3791
        %v3793 = vmul.f32 %v3732, 1.442695
        %v3794 = vpow.pop %v3793
        %v3795 = vmul.f32 %v3733, 1.442695
        %v3796 = vpow.pop %v3795
        %v3797 = vmul.f32 %v3734, 1.442695
        %v3798 = vpow.pop %v3797
        %v3799 = vpack.c.bf16 %v3740, %v3736
        %v3800 = vpack.c.bf16 %v3742, %v3738
        %v3801 = vpack.c.bf16 %v3748, %v3744
        %v3802 = vpack.c.bf16 %v3750, %v3746
        %v3803 = vpack.c.bf16 %v3756, %v3752
        %v3804 = vpack.c.bf16 %v3758, %v3754
        %v3805 = vpack.c.bf16 %v3764, %v3760
        %v3806 = vpack.c.bf16 %v3766, %v3762
        %v3807 = vpack.c.bf16 %v3772, %v3768
        %v3808 = vpack.c.bf16 %v3774, %v3770
        %v3809 = vpack.c.bf16 %v3780, %v3776
        %v3810 = vpack.c.bf16 %v3782, %v3778
        %v3811 = vpack.c.bf16 %v3788, %v3784
        %v3812 = vpack.c.bf16 %v3790, %v3786
        %v3813 = vpack.c.bf16 %v3796, %v3792
        %v3814 = vpack.c.bf16 %v3798, %v3794
        %3815 = vmatprep.subr.bf16.mxu0 %v3800
        %3816 = vmatpush1.bf16.xpose.msra.mxu0 %v3799
        %3817 = vmatprep.subr.bf16.mxu0 %v3802
        %3818 = vmatpush1.bf16.xpose.msra.mxu0 %v3801
        %3819 = vmatprep.subr.bf16.mxu0 %v3804
        %3820 = vmatpush1.bf16.xpose.msra.mxu0 %v3803
        %3821 = vmatprep.subr.bf16.mxu0 %v3806
        %3822 = vmatpush1.bf16.xpose.msra.mxu0 %v3805
        %3823 = vmatprep.subr.bf16.mxu0 %v3808
        %3824 = vmatpush1.bf16.xpose.msra.mxu0 %v3807
        %3825 = vmatprep.subr.bf16.mxu0 %v3810
        %3826 = vmatpush1.bf16.xpose.msra.mxu0 %v3809
        %3827 = vmatprep.subr.bf16.mxu0 %v3812
        %3828 = vmatpush1.bf16.xpose.msra.mxu0 %v3811
        %3829 = vmatprep.subr.bf16.mxu0 %v3814
        %3830 = vmatpush1.bf16.xpose.msra.mxu0 %v3813
        %3831 = vmatprep.subr.bf16.mxu0 0
        %3832 = vmatpush1.bf16.xpose.msra.mxu0 0
        %3833 = vmatprep.subr.bf16.mxu0 0
        %3834 = vmatpush1.bf16.xpose.msra.mxu0 0
        %3835 = vmatprep.subr.bf16.mxu0 0
        %3836 = vmatpush1.bf16.xpose.msra.mxu0 0
        %3837 = vmatprep.subr.bf16.mxu0 0
        %3838 = vmatpush1.bf16.xpose.msra.mxu0 0
        %3839 = vmatprep.subr.bf16.mxu0 0
        %3840 = vmatpush1.bf16.xpose.msra.mxu0 0
        %3841 = vmatprep.subr.bf16.mxu0 0
        %3842 = vmatpush1.bf16.xpose.msra.mxu0 0
        %3843 = vmatprep.subr.bf16.mxu0 0
        %3844 = vmatpush1.bf16.xpose.msra.mxu0 0
        %3845 = vmatprep.subr.bf16.mxu0 0
        %3846 = vmatpush1.bf16.xpose.msra.mxu0 0
        %3847 = vmatprep.mubr.bf16.mxu0 1065369472
        %3848 = vmatmul.mubr.bf16.gmra.mrb[0].mxu0 1065369472
        %v3849 = vpop.f32.mrb[0].mxu0
        %v3850 = vadd.f32 0.0, %v3849
        %v3851 = vpop.f32.mrb[0].mxu0
        %v3852 = vpop.f32.mrb[0].mxu0
        %v3853 = vpop.f32.mrb[0].mxu0
        %3854 = vdwg.mxu0
        %3855 = vmatprep.subr.bf16.mxu0 %v3800
        %3856 = vmatpush1.bf16.xpose.msra.mxu0 %v3799
        %3857 = vmatprep.subr.bf16.mxu0 %v3802
        %3858 = vmatpush1.bf16.xpose.msra.mxu0 %v3801
        %3859 = vmatprep.subr.bf16.mxu0 %v3804
        %3860 = vmatpush1.bf16.xpose.msra.mxu0 %v3803
        %3861 = vmatprep.subr.bf16.mxu0 %v3806
        %3862 = vmatpush1.bf16.xpose.msra.mxu0 %v3805
        %3863 = vmatprep.subr.bf16.mxu0 %v3808
        %3864 = vmatpush1.bf16.xpose.msra.mxu0 %v3807
        %3865 = vmatprep.subr.bf16.mxu0 %v3810
        %3866 = vmatpush1.bf16.xpose.msra.mxu0 %v3809
        %3867 = vmatprep.subr.bf16.mxu0 %v3812
        %3868 = vmatpush1.bf16.xpose.msra.mxu0 %v3811
        %3869 = vmatprep.subr.bf16.mxu0 %v3814
        %3870 = vmatpush1.bf16.xpose.msra.mxu0 %v3813
        %3871 = vmatprep.subr.bf16.mxu0 0
        %3872 = vmatpush1.bf16.xpose.msra.mxu0 0
        %3873 = vmatprep.subr.bf16.mxu0 0
        %3874 = vmatpush1.bf16.xpose.msra.mxu0 0
        %3875 = vmatprep.subr.bf16.mxu0 0
        %3876 = vmatpush1.bf16.xpose.msra.mxu0 0
        %3877 = vmatprep.subr.bf16.mxu0 0
        %3878 = vmatpush1.bf16.xpose.msra.mxu0 0
        %3879 = vmatprep.subr.bf16.mxu0 0
        %3880 = vmatpush1.bf16.xpose.msra.mxu0 0
        %3881 = vmatprep.subr.bf16.mxu0 0
        %3882 = vmatpush1.bf16.xpose.msra.mxu0 0
        %3883 = vmatprep.subr.bf16.mxu0 0
        %3884 = vmatpush1.bf16.xpose.msra.mxu0 0
        %3885 = vmatprep.subr.bf16.mxu0 0
        %3886 = vmatpush1.bf16.xpose.msra.mxu0 0
        %3887 = vmatprep.mubr.bf16.mxu0 %v1086
        %3888 = vmatmul.mubr.bf16.gmra.mrb[0].mxu0 %v1085
        %v3889 = vpop.f32.mrb[0].mxu0
        %v3890 = vadd.f32 0.0, %v3889
        %v3891 = vpop.f32.mrb[0].mxu0
        %v3892 = vpop.f32.mrb[0].mxu0
        %v3893 = vadd.f32 0.0, %v3892
        %v3894 = vpop.f32.mrb[0].mxu0
        %3895 = vdwg.mxu0
        %v3896 = vrcp.pop %v3850
        %v3897 = vlaneseq
        %v3898 = vshrl.u32 %v3897, 7
        %v3899 = vsub.s32 0, %v3898
        %v3900 = vrot.slane %v3896, %v3899
        %v3901 = vmul.f32 %v3890, %v3900
        %v3902 = vmul.f32 %v3893, %v3900
        %v3903 = vpack.c.bf16 %v3902, %v3901
        %3904 = vxpose.xlu0.c.b16.start [1/8] %v639, 128
        %3905 = vxpose.xlu0.c.b16.cont [2/8] 0, 128
        %3906 = vxpose.xlu0.c.b16.cont [3/8] 0, 128
        %3907 = vxpose.xlu0.c.b16.cont [4/8] 0, 128
        %3908 = vxpose.xlu0.c.b16.cont [5/8] 0, 128
        %3909 = vxpose.xlu0.c.b16.cont [6/8] 0, 128
        %3910 = vxpose.xlu0.c.b16.cont [7/8] 0, 128
        %3911 = vxpose.xlu0.c.b16.end [8/8] 0, 128
        %v3912 = vpop.trf.xlu0
        %v3913 = vpop.trf.xlu0
        %v3914 = vpop.trf.xlu0
        %v3915 = vpop.trf.xlu0
        %v3916 = vpop.trf.xlu0
        %v3917 = vpop.trf.xlu0
        %v3918 = vpop.trf.xlu0
        %v3919 = vpop.trf.xlu0
        %v3921 = vsel %vm1105, %v3912, 0
        %v3924 = vsel %vm1105, %v3913, 0
        %v3927 = vsel %vm1105, %v3914, 0
        %v3930 = vsel %vm1105, %v3915, 0
        %v3933 = vsel %vm1105, %v3916, 0
        %v3936 = vsel %vm1105, %v3917, 0
        %v3939 = vsel %vm1105, %v3918, 0
        %v3942 = vsel %vm1105, %v3919, 0
        %3944 = vmatprep.subr.bf16.mxu0 %v1072
        %3945 = vmatpush1.bf16.msra.mxu0 %v1071
        %3946 = vmatprep.subr.bf16.mxu0 0
        %3947 = vmatpush1.bf16.msra.mxu0 0
        %3948 = vmatprep.subr.bf16.mxu0 0
        %3949 = vmatpush1.bf16.msra.mxu0 0
        %3950 = vmatprep.subr.bf16.mxu0 0
        %3951 = vmatpush1.bf16.msra.mxu0 0
        %3952 = vmatprep.subr.bf16.mxu0 0
        %3953 = vmatpush1.bf16.msra.mxu0 0
        %3954 = vmatprep.subr.bf16.mxu0 0
        %3955 = vmatpush1.bf16.msra.mxu0 0
        %3956 = vmatprep.subr.bf16.mxu0 0
        %3957 = vmatpush1.bf16.msra.mxu0 0
        %3958 = vmatprep.subr.bf16.mxu0 0
        %3959 = vmatpush1.bf16.msra.mxu0 0
        %3960 = vmatprep.subr.bf16.mxu0 0
        %3961 = vmatpush1.bf16.msra.mxu0 0
        %3962 = vmatprep.subr.bf16.mxu0 0
        %3963 = vmatpush1.bf16.msra.mxu0 0
        %3964 = vmatprep.subr.bf16.mxu0 0
        %3965 = vmatpush1.bf16.msra.mxu0 0
        %3966 = vmatprep.subr.bf16.mxu0 0
        %3967 = vmatpush1.bf16.msra.mxu0 0
        %3968 = vmatprep.subr.bf16.mxu0 0
        %3969 = vmatpush1.bf16.msra.mxu0 0
        %3970 = vmatprep.subr.bf16.mxu0 0
        %3971 = vmatpush1.bf16.msra.mxu0 0
        %3972 = vmatprep.subr.bf16.mxu0 0
        %3973 = vmatpush1.bf16.msra.mxu0 0
        %3974 = vmatprep.subr.bf16.mxu0 0
        %3975 = vmatpush1.bf16.msra.mxu0 0
        %3976 = vmatprep.mubr.bf16.mxu0 0
        %3977 = vmatmul.mubr.bf16.gmra.mrb[0].mxu0 %v3921
        %v3978 = vpop.f32.mrb[0].mxu0
        %v3979 = vadd.f32 0.0, %v3978
        %v3980 = vpop.f32.mrb[0].mxu0
        %v3981 = vadd.f32 0.0, %v3980
        %v3982 = vpop.f32.mrb[0].mxu0
        %v3983 = vadd.f32 0.0, %v3982
        %v3984 = vpop.f32.mrb[0].mxu0
        %v3985 = vadd.f32 0.0, %v3984
        %3986 = vmatprep.mubr.bf16.mxu0 0
        %3987 = vmatmul.mubr.bf16.gmra.mrb[0].mxu0 %v3924
        %v3988 = vpop.f32.mrb[0].mxu0
        %v3989 = vadd.f32 0.0, %v3988
        %v3990 = vpop.f32.mrb[0].mxu0
        %v3991 = vadd.f32 0.0, %v3990
        %v3992 = vpop.f32.mrb[0].mxu0
        %v3993 = vadd.f32 0.0, %v3992
        %v3994 = vpop.f32.mrb[0].mxu0
        %v3995 = vadd.f32 0.0, %v3994
        %3996 = vmatprep.mubr.bf16.mxu0 0
        %3997 = vmatmul.mubr.bf16.gmra.mrb[0].mxu0 %v3927
        %v3998 = vpop.f32.mrb[0].mxu0
        %v3999 = vadd.f32 0.0, %v3998
        %v4000 = vpop.f32.mrb[0].mxu0
        %v4001 = vadd.f32 0.0, %v4000
        %v4002 = vpop.f32.mrb[0].mxu0
        %v4003 = vadd.f32 0.0, %v4002
        %v4004 = vpop.f32.mrb[0].mxu0
        %v4005 = vadd.f32 0.0, %v4004
        %4006 = vmatprep.mubr.bf16.mxu0 0
        %4007 = vmatmul.mubr.bf16.gmra.mrb[0].mxu0 %v3930
        %v4008 = vpop.f32.mrb[0].mxu0
        %v4009 = vadd.f32 0.0, %v4008
        %v4010 = vpop.f32.mrb[0].mxu0
        %v4011 = vadd.f32 0.0, %v4010
        %v4012 = vpop.f32.mrb[0].mxu0
        %v4013 = vadd.f32 0.0, %v4012
        %v4014 = vpop.f32.mrb[0].mxu0
        %v4015 = vadd.f32 0.0, %v4014
        %4016 = vmatprep.mubr.bf16.mxu0 0
        %4017 = vmatmul.mubr.bf16.gmra.mrb[0].mxu0 %v3933
        %v4018 = vpop.f32.mrb[0].mxu0
        %v4019 = vadd.f32 0.0, %v4018
        %v4020 = vpop.f32.mrb[0].mxu0
        %v4021 = vadd.f32 0.0, %v4020
        %v4022 = vpop.f32.mrb[0].mxu0
        %v4023 = vadd.f32 0.0, %v4022
        %v4024 = vpop.f32.mrb[0].mxu0
        %v4025 = vadd.f32 0.0, %v4024
        %4026 = vmatprep.mubr.bf16.mxu0 0
        %4027 = vmatmul.mubr.bf16.gmra.mrb[0].mxu0 %v3936
        %v4028 = vpop.f32.mrb[0].mxu0
        %v4029 = vadd.f32 0.0, %v4028
        %v4030 = vpop.f32.mrb[0].mxu0
        %v4031 = vadd.f32 0.0, %v4030
        %v4032 = vpop.f32.mrb[0].mxu0
        %v4033 = vadd.f32 0.0, %v4032
        %v4034 = vpop.f32.mrb[0].mxu0
        %v4035 = vadd.f32 0.0, %v4034
        %4036 = vmatprep.mubr.bf16.mxu0 0
        %4037 = vmatmul.mubr.bf16.gmra.mrb[0].mxu0 %v3939
        %v4038 = vpop.f32.mrb[0].mxu0
        %v4039 = vadd.f32 0.0, %v4038
        %v4040 = vpop.f32.mrb[0].mxu0
        %v4041 = vadd.f32 0.0, %v4040
        %v4042 = vpop.f32.mrb[0].mxu0
        %v4043 = vadd.f32 0.0, %v4042
        %v4044 = vpop.f32.mrb[0].mxu0
        %v4045 = vadd.f32 0.0, %v4044
        %4046 = vmatprep.mubr.bf16.mxu0 0
        %4047 = vmatmul.mubr.bf16.gmra.mrb[0].mxu0 %v3942
        %v4048 = vpop.f32.mrb[0].mxu0
        %v4049 = vadd.f32 0.0, %v4048
        %v4050 = vpop.f32.mrb[0].mxu0
        %v4051 = vadd.f32 0.0, %v4050
        %v4052 = vpop.f32.mrb[0].mxu0
        %v4053 = vadd.f32 0.0, %v4052
        %v4054 = vpop.f32.mrb[0].mxu0
        %v4055 = vadd.f32 0.0, %v4054
        %4056 = vdwg.mxu0
        %v4057 = vmax.f32 %v3979, %v3981
        %4058 = vmax.xlane.f32.xlu0 %v4057
        %v4059 = vpop.xlane.xlu0 %4058
        %v4060 = vmax.f32 %v3983, %v3985
        %4061 = vmax.xlane.f32.xlu0 %v4060
        %v4062 = vpop.xlane.xlu0 %4061
        %v4063 = vmax.f32 %v3989, %v3991
        %4064 = vmax.xlane.f32.xlu0 %v4063
        %v4065 = vpop.xlane.xlu0 %4064
        %v4066 = vmax.f32 %v3993, %v3995
        %4067 = vmax.xlane.f32.xlu0 %v4066
        %v4068 = vpop.xlane.xlu0 %4067
        %v4069 = vmax.f32 %v3999, %v4001
        %4070 = vmax.xlane.f32.xlu0 %v4069
        %v4071 = vpop.xlane.xlu0 %4070
        %v4072 = vmax.f32 %v4003, %v4005
        %4073 = vmax.xlane.f32.xlu0 %v4072
        %v4074 = vpop.xlane.xlu0 %4073
        %v4075 = vmax.f32 %v4009, %v4011
        %4076 = vmax.xlane.f32.xlu0 %v4075
        %v4077 = vpop.xlane.xlu0 %4076
        %v4078 = vmax.f32 %v4013, %v4015
        %4079 = vmax.xlane.f32.xlu0 %v4078
        %v4080 = vpop.xlane.xlu0 %4079
        %v4081 = vmax.f32 %v4019, %v4021
        %4082 = vmax.xlane.f32.xlu0 %v4081
        %v4083 = vpop.xlane.xlu0 %4082
        %v4084 = vmax.f32 %v4023, %v4025
        %4085 = vmax.xlane.f32.xlu0 %v4084
        %v4086 = vpop.xlane.xlu0 %4085
        %v4087 = vmax.f32 %v4029, %v4031
        %4088 = vmax.xlane.f32.xlu0 %v4087
        %v4089 = vpop.xlane.xlu0 %4088
        %v4090 = vmax.f32 %v4033, %v4035
        %4091 = vmax.xlane.f32.xlu0 %v4090
        %v4092 = vpop.xlane.xlu0 %4091
        %v4093 = vmax.f32 %v4039, %v4041
        %4094 = vmax.xlane.f32.xlu0 %v4093
        %v4095 = vpop.xlane.xlu0 %4094
        %v4096 = vmax.f32 %v4043, %v4045
        %4097 = vmax.xlane.f32.xlu0 %v4096
        %v4098 = vpop.xlane.xlu0 %4097
        %v4099 = vmax.f32 %v4049, %v4051
        %4100 = vmax.xlane.f32.xlu0 %v4099
        %v4101 = vpop.xlane.xlu0 %4100
        %v4102 = vmax.f32 %v4053, %v4055
        %4103 = vmax.xlane.f32.xlu0 %v4102
        %v4104 = vpop.xlane.xlu0 %4103
        %v4105 = vsub.f32 %v3979, %v4059
        %v4106 = vsub.f32 %v3981, %v4059
        %v4107 = vsub.f32 %v3983, %v4062
        %v4108 = vsub.f32 %v3985, %v4062
        %v4109 = vsub.f32 %v3989, %v4065
        %v4110 = vsub.f32 %v3991, %v4065
        %v4111 = vsub.f32 %v3993, %v4068
        %v4112 = vsub.f32 %v3995, %v4068
        %v4113 = vsub.f32 %v3999, %v4071
        %v4114 = vsub.f32 %v4001, %v4071
        %v4115 = vsub.f32 %v4003, %v4074
        %v4116 = vsub.f32 %v4005, %v4074
        %v4117 = vsub.f32 %v4009, %v4077
        %v4118 = vsub.f32 %v4011, %v4077
        %v4119 = vsub.f32 %v4013, %v4080
        %v4120 = vsub.f32 %v4015, %v4080
        %v4121 = vsub.f32 %v4019, %v4083
        %v4122 = vsub.f32 %v4021, %v4083
        %v4123 = vsub.f32 %v4023, %v4086
        %v4124 = vsub.f32 %v4025, %v4086
        %v4125 = vsub.f32 %v4029, %v4089
        %v4126 = vsub.f32 %v4031, %v4089
        %v4127 = vsub.f32 %v4033, %v4092
        %v4128 = vsub.f32 %v4035, %v4092
        %v4129 = vsub.f32 %v4039, %v4095
        %v4130 = vsub.f32 %v4041, %v4095
        %v4131 = vsub.f32 %v4043, %v4098
        %v4132 = vsub.f32 %v4045, %v4098
        %v4133 = vsub.f32 %v4049, %v4101
        %v4134 = vsub.f32 %v4051, %v4101
        %v4135 = vsub.f32 %v4053, %v4104
        %v4136 = vsub.f32 %v4055, %v4104
        %v4137 = vmul.f32 %v4105, 1.442695
        %v4138 = vpow.pop %v4137
        %v4139 = vmul.f32 %v4106, 1.442695
        %v4140 = vpow.pop %v4139
        %v4141 = vmul.f32 %v4107, 1.442695
        %v4142 = vpow.pop %v4141
        %v4143 = vmul.f32 %v4108, 1.442695
        %v4144 = vpow.pop %v4143
        %v4145 = vmul.f32 %v4109, 1.442695
        %v4146 = vpow.pop %v4145
        %v4147 = vmul.f32 %v4110, 1.442695
        %v4148 = vpow.pop %v4147
        %v4149 = vmul.f32 %v4111, 1.442695
        %v4150 = vpow.pop %v4149
        %v4151 = vmul.f32 %v4112, 1.442695
        %v4152 = vpow.pop %v4151
        %v4153 = vmul.f32 %v4113, 1.442695
        %v4154 = vpow.pop %v4153
        %v4155 = vmul.f32 %v4114, 1.442695
        %v4156 = vpow.pop %v4155
        %v4157 = vmul.f32 %v4115, 1.442695
        %v4158 = vpow.pop %v4157
        %v4159 = vmul.f32 %v4116, 1.442695
        %v4160 = vpow.pop %v4159
        %v4161 = vmul.f32 %v4117, 1.442695
        %v4162 = vpow.pop %v4161
        %v4163 = vmul.f32 %v4118, 1.442695
        %v4164 = vpow.pop %v4163
        %v4165 = vmul.f32 %v4119, 1.442695
        %v4166 = vpow.pop %v4165
        %v4167 = vmul.f32 %v4120, 1.442695
        %v4168 = vpow.pop %v4167
        %v4169 = vmul.f32 %v4121, 1.442695
        %v4170 = vpow.pop %v4169
        %v4171 = vmul.f32 %v4122, 1.442695
        %v4172 = vpow.pop %v4171
        %v4173 = vmul.f32 %v4123, 1.442695
        %v4174 = vpow.pop %v4173
        %v4175 = vmul.f32 %v4124, 1.442695
        %v4176 = vpow.pop %v4175
        %v4177 = vmul.f32 %v4125, 1.442695
        %v4178 = vpow.pop %v4177
        %v4179 = vmul.f32 %v4126, 1.442695
        %v4180 = vpow.pop %v4179
        %v4181 = vmul.f32 %v4127, 1.442695
        %v4182 = vpow.pop %v4181
        %v4183 = vmul.f32 %v4128, 1.442695
        %v4184 = vpow.pop %v4183
        %v4185 = vmul.f32 %v4129, 1.442695
        %v4186 = vpow.pop %v4185
        %v4187 = vmul.f32 %v4130, 1.442695
        %v4188 = vpow.pop %v4187
        %v4189 = vmul.f32 %v4131, 1.442695
        %v4190 = vpow.pop %v4189
        %v4191 = vmul.f32 %v4132, 1.442695
        %v4192 = vpow.pop %v4191
        %v4193 = vmul.f32 %v4133, 1.442695
        %v4194 = vpow.pop %v4193
        %v4195 = vmul.f32 %v4134, 1.442695
        %v4196 = vpow.pop %v4195
        %v4197 = vmul.f32 %v4135, 1.442695
        %v4198 = vpow.pop %v4197
        %v4199 = vmul.f32 %v4136, 1.442695
        %v4200 = vpow.pop %v4199
        %v4201 = vpack.c.bf16 %v4142, %v4138
        %v4202 = vpack.c.bf16 %v4144, %v4140
        %v4203 = vpack.c.bf16 %v4150, %v4146
        %v4204 = vpack.c.bf16 %v4152, %v4148
        %v4205 = vpack.c.bf16 %v4158, %v4154
        %v4206 = vpack.c.bf16 %v4160, %v4156
        %v4207 = vpack.c.bf16 %v4166, %v4162
        %v4208 = vpack.c.bf16 %v4168, %v4164
        %v4209 = vpack.c.bf16 %v4174, %v4170
        %v4210 = vpack.c.bf16 %v4176, %v4172
        %v4211 = vpack.c.bf16 %v4182, %v4178
        %v4212 = vpack.c.bf16 %v4184, %v4180
        %v4213 = vpack.c.bf16 %v4190, %v4186
        %v4214 = vpack.c.bf16 %v4192, %v4188
        %v4215 = vpack.c.bf16 %v4198, %v4194
        %v4216 = vpack.c.bf16 %v4200, %v4196
        %4217 = vmatprep.subr.bf16.mxu0 %v4202
        %4218 = vmatpush1.bf16.xpose.msra.mxu0 %v4201
        %4219 = vmatprep.subr.bf16.mxu0 %v4204
        %4220 = vmatpush1.bf16.xpose.msra.mxu0 %v4203
        %4221 = vmatprep.subr.bf16.mxu0 %v4206
        %4222 = vmatpush1.bf16.xpose.msra.mxu0 %v4205
        %4223 = vmatprep.subr.bf16.mxu0 %v4208
        %4224 = vmatpush1.bf16.xpose.msra.mxu0 %v4207
        %4225 = vmatprep.subr.bf16.mxu0 %v4210
        %4226 = vmatpush1.bf16.xpose.msra.mxu0 %v4209
        %4227 = vmatprep.subr.bf16.mxu0 %v4212
        %4228 = vmatpush1.bf16.xpose.msra.mxu0 %v4211
        %4229 = vmatprep.subr.bf16.mxu0 %v4214
        %4230 = vmatpush1.bf16.xpose.msra.mxu0 %v4213
        %4231 = vmatprep.subr.bf16.mxu0 %v4216
        %4232 = vmatpush1.bf16.xpose.msra.mxu0 %v4215
        %4233 = vmatprep.subr.bf16.mxu0 0
        %4234 = vmatpush1.bf16.xpose.msra.mxu0 0
        %4235 = vmatprep.subr.bf16.mxu0 0
        %4236 = vmatpush1.bf16.xpose.msra.mxu0 0
        %4237 = vmatprep.subr.bf16.mxu0 0
        %4238 = vmatpush1.bf16.xpose.msra.mxu0 0
        %4239 = vmatprep.subr.bf16.mxu0 0
        %4240 = vmatpush1.bf16.xpose.msra.mxu0 0
        %4241 = vmatprep.subr.bf16.mxu0 0
        %4242 = vmatpush1.bf16.xpose.msra.mxu0 0
        %4243 = vmatprep.subr.bf16.mxu0 0
        %4244 = vmatpush1.bf16.xpose.msra.mxu0 0
        %4245 = vmatprep.subr.bf16.mxu0 0
        %4246 = vmatpush1.bf16.xpose.msra.mxu0 0
        %4247 = vmatprep.subr.bf16.mxu0 0
        %4248 = vmatpush1.bf16.xpose.msra.mxu0 0
        %4249 = vmatprep.mubr.bf16.mxu0 1065369472
        %4250 = vmatmul.mubr.bf16.gmra.mrb[0].mxu0 1065369472
        %v4251 = vpop.f32.mrb[0].mxu0
        %v4252 = vadd.f32 0.0, %v4251
        %v4253 = vpop.f32.mrb[0].mxu0
        %v4254 = vpop.f32.mrb[0].mxu0
        %v4255 = vpop.f32.mrb[0].mxu0
        %4256 = vdwg.mxu0
        %4257 = vmatprep.subr.bf16.mxu0 %v4202
        %4258 = vmatpush1.bf16.xpose.msra.mxu0 %v4201
        %4259 = vmatprep.subr.bf16.mxu0 %v4204
        %4260 = vmatpush1.bf16.xpose.msra.mxu0 %v4203
        %4261 = vmatprep.subr.bf16.mxu0 %v4206
        %4262 = vmatpush1.bf16.xpose.msra.mxu0 %v4205
        %4263 = vmatprep.subr.bf16.mxu0 %v4208
        %4264 = vmatpush1.bf16.xpose.msra.mxu0 %v4207
        %4265 = vmatprep.subr.bf16.mxu0 %v4210
        %4266 = vmatpush1.bf16.xpose.msra.mxu0 %v4209
        %4267 = vmatprep.subr.bf16.mxu0 %v4212
        %4268 = vmatpush1.bf16.xpose.msra.mxu0 %v4211
        %4269 = vmatprep.subr.bf16.mxu0 %v4214
        %4270 = vmatpush1.bf16.xpose.msra.mxu0 %v4213
        %4271 = vmatprep.subr.bf16.mxu0 %v4216
        %4272 = vmatpush1.bf16.xpose.msra.mxu0 %v4215
        %4273 = vmatprep.subr.bf16.mxu0 0
        %4274 = vmatpush1.bf16.xpose.msra.mxu0 0
        %4275 = vmatprep.subr.bf16.mxu0 0
        %4276 = vmatpush1.bf16.xpose.msra.mxu0 0
        %4277 = vmatprep.subr.bf16.mxu0 0
        %4278 = vmatpush1.bf16.xpose.msra.mxu0 0
        %4279 = vmatprep.subr.bf16.mxu0 0
        %4280 = vmatpush1.bf16.xpose.msra.mxu0 0
        %4281 = vmatprep.subr.bf16.mxu0 0
        %4282 = vmatpush1.bf16.xpose.msra.mxu0 0
        %4283 = vmatprep.subr.bf16.mxu0 0
        %4284 = vmatpush1.bf16.xpose.msra.mxu0 0
        %4285 = vmatprep.subr.bf16.mxu0 0
        %4286 = vmatpush1.bf16.xpose.msra.mxu0 0
        %4287 = vmatprep.subr.bf16.mxu0 0
        %4288 = vmatpush1.bf16.xpose.msra.mxu0 0
        %4289 = vmatprep.mubr.bf16.mxu0 %v1088
        %4290 = vmatmul.mubr.bf16.gmra.mrb[0].mxu0 %v1087
        %v4291 = vpop.f32.mrb[0].mxu0
        %v4292 = vadd.f32 0.0, %v4291
        %v4293 = vpop.f32.mrb[0].mxu0
        %v4294 = vpop.f32.mrb[0].mxu0
        %v4295 = vadd.f32 0.0, %v4294
        %v4296 = vpop.f32.mrb[0].mxu0
        %4297 = vdwg.mxu0
        %v4298 = vrcp.pop %v4252
        %v4299 = vlaneseq
        %v4300 = vshrl.u32 %v4299, 7
        %v4301 = vsub.s32 0, %v4300
        %v4302 = vrot.slane %v4298, %v4301
        %v4303 = vmul.f32 %v4292, %v4302
        %v4304 = vmul.f32 %v4295, %v4302
        %v4305 = vpack.c.bf16 %v4304, %v4303
        %v4306 = vld [vmem:[#allocation10] sm:$0xf]
        %v4307 = vld [vmem:[#allocation10 + $0x4] sm:$0xf]
        %v4308 = vld [vmem:[#allocation10 + $0x8] sm:$0xf]
        %v4309 = vld [vmem:[#allocation10 + $0xc] sm:$0xf]
        %v4310 = vld [vmem:[#allocation10 + $0x10] sm:$0xf]
        %v4311 = vld [vmem:[#allocation10 + $0x14] sm:$0xf]
        %v4312 = vld [vmem:[#allocation10 + $0x18] sm:$0xf]
        %v4313 = vld [vmem:[#allocation10 + $0x1c] sm:$0xf]
        %v4314 = vld [vmem:[#allocation10 + $0x20] sm:$0xf]
        %v4315 = vld [vmem:[#allocation10 + $0x24] sm:$0xf]
        %v4316 = vld [vmem:[#allocation10 + $0x28] sm:$0xf]
        %v4317 = vld [vmem:[#allocation10 + $0x2c] sm:$0xf]
        %v4318 = vld [vmem:[#allocation10 + $0x30] sm:$0xf]
        %v4319 = vld [vmem:[#allocation10 + $0x34] sm:$0xf]
        %v4320 = vld [vmem:[#allocation10 + $0x38] sm:$0xf]
        %v4321 = vld [vmem:[#allocation10 + $0x3c] sm:$0xf]
        %v4322 = vld [vmem:[%s5] sm:$0x1]
        %v4324 = vlaneseq
        %v4325 = vshrl.u32 %v4324, 7
        %v4326 = vsub.s32 0, %v4325
        %v4327 = vrot.slane %v4322, %v4326
        %4329 = vxpose.xlu0.c.b16.start [1/8] %v1491, 128
        %4330 = vxpose.xlu0.c.b16.cont [2/8] %v1893, 128
        %4331 = vxpose.xlu0.c.b16.cont [3/8] %v2295, 128
        %4332 = vxpose.xlu0.c.b16.cont [4/8] %v2697, 128
        %4333 = vxpose.xlu0.c.b16.cont [5/8] %v3099, 128
        %4334 = vxpose.xlu0.c.b16.cont [6/8] %v3501, 128
        %4335 = vxpose.xlu0.c.b16.cont [7/8] %v3903, 128
        %4336 = vxpose.xlu0.c.b16.end [8/8] %v4305, 128
        %v4337 = vpop.trf.xlu0
        %v4338 = vpop.trf.xlu0
        %v4339 = vpop.trf.xlu0
        %v4340 = vpop.trf.xlu0
        %v4341 = vpop.trf.xlu0
        %v4342 = vpop.trf.xlu0
        %v4343 = vpop.trf.xlu0
        %v4344 = vpop.trf.xlu0
        %v4361 = vunpack.c.l.b16 %v4306
        %v4362 = vunpack.c.l.b16 %v4307
        %v4363 = vunpack.c.l.b16 %v4308
        %v4364 = vunpack.c.l.b16 %v4309
        %v4365 = vunpack.c.l.b16 %v4310
        %v4366 = vunpack.c.l.b16 %v4311
        %v4367 = vunpack.c.l.b16 %v4312
        %v4368 = vunpack.c.l.b16 %v4313
        %v4369 = vunpack.c.l.b16 %v4314
        %v4370 = vunpack.c.l.b16 %v4315
        %v4371 = vunpack.c.l.b16 %v4316
        %v4372 = vunpack.c.l.b16 %v4317
        %v4373 = vunpack.c.l.b16 %v4318
        %v4374 = vunpack.c.l.b16 %v4319
        %v4375 = vunpack.c.l.b16 %v4320
        %v4376 = vunpack.c.l.b16 %v4321
        %v4377 = vpack.c.b16 %v4362, %v4361
        %v4378 = vpack.c.b16 %v4364, %v4363
        %v4379 = vpack.c.b16 %v4366, %v4365
        %v4380 = vpack.c.b16 %v4368, %v4367
        %v4381 = vpack.c.b16 %v4370, %v4369
        %v4382 = vpack.c.b16 %v4372, %v4371
        %v4383 = vpack.c.b16 %v4374, %v4373
        %v4384 = vpack.c.b16 %v4376, %v4375
        %4393 = vmatprep.subr.bf16.mxu0 0
        %4394 = vmatpush1.bf16.msra.mxu0 %v4377
        %4395 = vmatprep.subr.bf16.mxu0 0
        %4396 = vmatpush1.bf16.msra.mxu0 %v4378
        %4397 = vmatprep.subr.bf16.mxu0 0
        %4398 = vmatpush1.bf16.msra.mxu0 %v4379
        %4399 = vmatprep.subr.bf16.mxu0 0
        %4400 = vmatpush1.bf16.msra.mxu0 %v4380
        %4401 = vmatprep.subr.bf16.mxu0 0
        %4402 = vmatpush1.bf16.msra.mxu0 %v4381
        %4403 = vmatprep.subr.bf16.mxu0 0
        %4404 = vmatpush1.bf16.msra.mxu0 %v4382
        %4405 = vmatprep.subr.bf16.mxu0 0
        %4406 = vmatpush1.bf16.msra.mxu0 %v4383
        %4407 = vmatprep.subr.bf16.mxu0 0
        %4408 = vmatpush1.bf16.msra.mxu0 %v4384
        %4409 = vmatprep.subr.bf16.mxu0 0
        %4410 = vmatpush1.bf16.msra.mxu0 0
        %4411 = vmatprep.subr.bf16.mxu0 0
        %4412 = vmatpush1.bf16.msra.mxu0 0
        %4413 = vmatprep.subr.bf16.mxu0 0
        %4414 = vmatpush1.bf16.msra.mxu0 0
        %4415 = vmatprep.subr.bf16.mxu0 0
        %4416 = vmatpush1.bf16.msra.mxu0 0
        %4417 = vmatprep.subr.bf16.mxu0 0
        %4418 = vmatpush1.bf16.msra.mxu0 0
        %4419 = vmatprep.subr.bf16.mxu0 0
        %4420 = vmatpush1.bf16.msra.mxu0 0
        %4421 = vmatprep.subr.bf16.mxu0 0
        %4422 = vmatpush1.bf16.msra.mxu0 0
        %4423 = vmatprep.subr.bf16.mxu0 0
        %4424 = vmatpush1.bf16.msra.mxu0 0
        %4425 = vmatprep.mubr.bf16.mxu0 0
        %4426 = vmatmul.mubr.bf16.gmra.mrb[0].mxu0 %v4337
        %v4427 = vpop.f32.mrb[0].mxu0
        %v4428 = vadd.f32 %v4327, %v4427
        %v4429 = vpop.f32.mrb[0].mxu0
        %v4430 = vpop.f32.mrb[0].mxu0
        %v4431 = vadd.f32 %v4327, %v4430
        %v4432 = vpop.f32.mrb[0].mxu0
        %4433 = vmatprep.mubr.bf16.mxu0 0
        %4434 = vmatmul.mubr.bf16.gmra.mrb[0].mxu0 %v4338
        %v4435 = vpop.f32.mrb[0].mxu0
        %v4436 = vadd.f32 %v4327, %v4435
        %v4437 = vpop.f32.mrb[0].mxu0
        %v4438 = vpop.f32.mrb[0].mxu0
        %v4439 = vadd.f32 %v4327, %v4438
        %v4440 = vpop.f32.mrb[0].mxu0
        %4441 = vmatprep.mubr.bf16.mxu0 0
        %4442 = vmatmul.mubr.bf16.gmra.mrb[0].mxu0 %v4339
        %v4443 = vpop.f32.mrb[0].mxu0
        %v4444 = vadd.f32 %v4327, %v4443
        %v4445 = vpop.f32.mrb[0].mxu0
        %v4446 = vpop.f32.mrb[0].mxu0
        %v4447 = vadd.f32 %v4327, %v4446
        %v4448 = vpop.f32.mrb[0].mxu0
        %4449 = vmatprep.mubr.bf16.mxu0 0
        %4450 = vmatmul.mubr.bf16.gmra.mrb[0].mxu0 %v4340
        %v4451 = vpop.f32.mrb[0].mxu0
        %v4452 = vadd.f32 %v4327, %v4451
        %v4453 = vpop.f32.mrb[0].mxu0
        %v4454 = vpop.f32.mrb[0].mxu0
        %v4455 = vadd.f32 %v4327, %v4454
        %v4456 = vpop.f32.mrb[0].mxu0
        %4457 = vmatprep.mubr.bf16.mxu0 0
        %4458 = vmatmul.mubr.bf16.gmra.mrb[0].mxu0 %v4341
        %v4459 = vpop.f32.mrb[0].mxu0
        %v4460 = vadd.f32 %v4327, %v4459
        %v4461 = vpop.f32.mrb[0].mxu0
        %v4462 = vpop.f32.mrb[0].mxu0
        %v4463 = vadd.f32 %v4327, %v4462
        %v4464 = vpop.f32.mrb[0].mxu0
        %4465 = vmatprep.mubr.bf16.mxu0 0
        %4466 = vmatmul.mubr.bf16.gmra.mrb[0].mxu0 %v4342
        %v4467 = vpop.f32.mrb[0].mxu0
        %v4468 = vadd.f32 %v4327, %v4467
        %v4469 = vpop.f32.mrb[0].mxu0
        %v4470 = vpop.f32.mrb[0].mxu0
        %v4471 = vadd.f32 %v4327, %v4470
        %v4472 = vpop.f32.mrb[0].mxu0
        %4473 = vmatprep.mubr.bf16.mxu0 0
        %4474 = vmatmul.mubr.bf16.gmra.mrb[0].mxu0 %v4343
        %v4475 = vpop.f32.mrb[0].mxu0
        %v4476 = vadd.f32 %v4327, %v4475
        %v4477 = vpop.f32.mrb[0].mxu0
        %v4478 = vpop.f32.mrb[0].mxu0
        %v4479 = vadd.f32 %v4327, %v4478
        %v4480 = vpop.f32.mrb[0].mxu0
        %4481 = vmatprep.mubr.bf16.mxu0 0
        %4482 = vmatmul.mubr.bf16.gmra.mrb[0].mxu0 %v4344
        %v4483 = vpop.f32.mrb[0].mxu0
        %v4484 = vadd.f32 %v4327, %v4483
        %v4485 = vpop.f32.mrb[0].mxu0
        %v4486 = vpop.f32.mrb[0].mxu0
        %v4487 = vadd.f32 %v4327, %v4486
        %v4488 = vpop.f32.mrb[0].mxu0
        %4489 = vdwg.mxu0
        %4490 = vst [vmem:[%s370] sm:$0xff] %v4428
        %4491 = vst [vmem:[%s370 + $0x8] sm:$0xff] %v4431
        %4492 = vst [vmem:[%s370 + $0x10] sm:$0xff] %v4436
        %4493 = vst [vmem:[%s370 + $0x18] sm:$0xff] %v4439
        %4494 = vst [vmem:[%s370 + $0x20] sm:$0xff] %v4444
        %4495 = vst [vmem:[%s370 + $0x28] sm:$0xff] %v4447
        %4496 = vst [vmem:[%s370 + $0x30] sm:$0xff] %v4452
        %4497 = vst [vmem:[%s370 + $0x38] sm:$0xff] %v4455
        %4498 = vst [vmem:[%s370 + $0x40] sm:$0xff] %v4460
        %4499 = vst [vmem:[%s370 + $0x48] sm:$0xff] %v4463
        %4500 = vst [vmem:[%s370 + $0x50] sm:$0xff] %v4468
        %4501 = vst [vmem:[%s370 + $0x58] sm:$0xff] %v4471
        %4502 = vst [vmem:[%s370 + $0x60] sm:$0xff] %v4476
        %4503 = vst [vmem:[%s370 + $0x68] sm:$0xff] %v4479
        %4504 = vst [vmem:[%s370 + $0x70] sm:$0xff] %v4484
        %4505 = vst [vmem:[%s370 + $0x78] sm:$0xff] %v4487
        %s4506 = sand.u32 %s187, 1
        %s4507 = scalar_lea.sflag [#allocation4], %s4506
        %s4508 = sand.u32 %s187, 1
        %s4509 = smul.addr %s4508, 128
        %s4510 = scalar_lea.vmem [#allocation11], %s4509
        // Predicated region
        $region65: #{tpu_custom_call.1} parent=43 // pred_check
          %p4511 = pneg %p197
        $region66: #{tpu_custom_call.1} parent=43 // pred_check_branch
          %4513 = sbr.rel (%p4511) target = $region68
        $region67: #{tpu_custom_call.1} parent=43 // pred_region
          %s4514 = smul.u32 16, %s32
          %s4516 = ssub.s32 2048, 2048
          %4517 = vsyncadd %s4507, %s4516
          %s4518 = smul.addr %s31, 32
          %s4519 = sadd.s32 %s4514, %s4518
          %s4520 = smul.addr %s4519, 128
          %s4521 = scalar_lea.hbm %s6, %s4520
          %s4522 = sshll.u32 %s4510, 4
          %s4523 = int_to_ptr.vmem [resolvable:$true] %s4522
          %4528 = dma.vmem_to_hbm [thread:$0]  %s4523, 2048, %s4521, %s4507, 128, 128, 8
        $region68: #{tpu_custom_call.1} parent=43 // pred_fallthru
          _
      $region44: #{tpu_custom_call.1} parent=5 // pred_fallthru
        _
      %p4529 = scmp.le.s32.totalorder 2, %s22
      // Predicated region
      $region69: #{tpu_custom_call.1} parent=5 // pred_check
        %p4530 = pneg %p4529
      $region70: #{tpu_custom_call.1} parent=5 // pred_check_branch
        %4532 = sbr.rel (%p4530) target = $region72
      $region71: #{tpu_custom_call.1} parent=5 // pred_region
        %s4533 = ssub.s32 %s22, 2
        // Predicated region
        $region73: #{tpu_custom_call.1} parent=71 // pred_check
          %p4534 = pneg %p203
        $region74: #{tpu_custom_call.1} parent=71 // pred_check_branch
          %4536 = sbr.rel (%p4534) target = $region76
        $region75: #{tpu_custom_call.1} parent=71 // pred_region
          %s4537 = sand.u32 %s188, 1
          %s4538 = scalar_lea.sflag [#allocation4], %s4537
          %s4539 = sand.u32 %s188, 1
          %s4540 = smul.addr %s4539, 128
          %s4541 = scalar_lea.vmem [#allocation11], %s4540
          %4542 = dma.done %s4538, 2048
        $region76: #{tpu_custom_call.1} parent=71 // pred_fallthru
          _
      $region72: #{tpu_custom_call.1} parent=5 // pred_fallthru
        _
    $region6: #{tpu_custom_call.1} parent=1 // loop_footer
      %s26 = sadd.s32 1, %s22
    $region7: #{tpu_custom_call.1} parent=1 // loop_footer_branch
      %21 = sbr.rel target = $region3
    $region8: #{tpu_custom_call.1} parent=1 // loop_exit
      _
    %4543 = vsyncpa [#allocation3], 1
    %s4544 = scalar_lea.sflag [#allocation3], 1
    %4545 = vsyncpa %s4544, 1
    %4546 = vsyncpa [#allocation6], 1
    %s4547 = scalar_lea.sflag [#allocation6], 1
    %4548 = vsyncpa %s4547, 1
    %4549 = vsyncpa [#allocation9], 1
    %4550 = vsyncpa [#allocation4], 1
    %s4551 = scalar_lea.sflag [#allocation4], 1
    %4552 = vsyncpa %s4551, 1

</llo_original>
